<compile_context>
chip_gen: v7x
topology: tpu7x:2x2x1
jax: 0.10.0
libtpu: 0.0.40
codegen_flags: <defaults>
</compile_context>

<pallas_src>
import functools

import jax
import jax.numpy as jnp
from jax.experimental import pallas as pl
from jax.experimental.pallas import tpu as pltpu


# ------------------------------ fused kernel --------------------------------

def _block_kernel(x_ref,
                  m11_ref, v11_ref, m12_ref, v12_ref,
                  m21_ref, v21_ref, m22_ref, v22_ref,
                  m31_ref, v31_ref, m32_ref, v32_ref,
                  c1w_ref, c1b_ref, c2w_ref, c2b_ref, c3w_ref, c3b_ref,
                  o_ref, *, H, W, C):
    """One grid step == `R // H` images; activations are (R, W*C) vreg tiles."""
    R, WC = x_ref.shape  # R = images_per_step * H, WC = W * C (lane-dense)

    # Row-validity masks for the vertical taps (hoisted: shared by all 6 convs).
    # Rows are global (image-major); h-in-image = row % H.
    h_in_img = jax.lax.broadcasted_iota(jnp.int32, (R, WC), 0) % H
    mask_up = h_in_img != 0          # dy = -1 reads the row above (invalid at h==0)
    mask_dn = h_in_img != (H - 1)    # dy = +1 reads the row below (invalid at h==H-1)

    def taps(act):
        # tap_dy[r] = act[r + dy] within the image, else 0 ("same" padding).
        up = jnp.where(mask_up, pltpu.roll(act, shift=1, axis=0), 0.0)
        dn = jnp.where(mask_dn, pltpu.roll(act, shift=R - 1, axis=0), 0.0)
        return up, act, dn

    def conv3(act, m_ref, b_ref):
        # m_ref: (3, WC, WC) banded matrices for dy = -1, 0, +1; b_ref: (1, WC).
        up, mid, dn = taps(act)
        out = jnp.dot(up, m_ref[0], preferred_element_type=jnp.float32)
        out = out + jnp.dot(mid, m_ref[1], preferred_element_type=jnp.float32)
        out = out + jnp.dot(dn, m_ref[2], preferred_element_type=jnp.float32)
        return out + b_ref[...]

    def resblock(act, mA_ref, bA_ref, mB_ref, bB_ref):
        h1 = jnp.maximum(conv3(act, mA_ref, bA_ref), 0.0)
        return jnp.maximum(conv3(h1, mB_ref, bB_ref) + act, 0.0)

    def compress(chunks, cw_ref, cb_ref):
        # 1x1 conv over the (virtual) channel-concat of `chunks`: per-chunk
        # block-diagonal weights, matmul-accumulate (no concatenation).
        out = jnp.dot(chunks[0], cw_ref[0], preferred_element_type=jnp.float32)
        for j in range(1, len(chunks)):
            out = out + jnp.dot(chunks[j], cw_ref[j],
                                preferred_element_type=jnp.float32)
        return out + cb_ref[...]

    x0 = x_ref[...].astype(jnp.float32)

    b1 = resblock(x0, m11_ref, v11_ref, m12_ref, v12_ref)
    o1 = compress((x0, b1), c1w_ref, c1b_ref)

    b2 = resblock(o1, m21_ref, v21_ref, m22_ref, v22_ref)
    o2 = compress((x0, b1, b2), c2w_ref, c2b_ref)

    b3 = resblock(o2, m31_ref, v31_ref, m32_ref, v32_ref)
    o3 = compress((x0, b1, b2, b3), c3w_ref, c3b_ref)

    o_ref[...] = o3.astype(o_ref.dtype)


# ------------------------ host-side weight packing ---------------------------

def _conv3_to_row_mats(w_hwio, W):
    """(3,3,Cin,Cout) HWIO -> (3, W*Cin, W*Cout) banded matrices (dy=-1,0,+1).

    The x-direction taps and the x zero-padding are folded into the band
    structure: M_dy[w'*C+ci, w*C+co] = W[dy+1, (w'-w)+1, ci, co] for |w'-w|<=1.
    """
    mats = []
    for ky in range(3):
        m = jnp.zeros((W * w_hwio.shape[2], W * w_hwio.shape[3]), jnp.float32)
        for kx in range(3):
            dx = kx - 1
            band = jnp.eye(W, k=-dx, dtype=jnp.float32)   # band[w', w]=1 iff w'=w+dx
            m = m + jnp.kron(band, w_hwio[ky, kx])
        mats.append(m)
    return jnp.stack(mats)


def _pw_to_mats(w, n_chunks, W):
    """(n_chunks*C, Cout) 1x1 weights -> (n_chunks, W*C, W*Cout) block-diag."""
    C_in = w.shape[0] // n_chunks
    eye_w = jnp.eye(W, dtype=jnp.float32)
    return jnp.stack([jnp.kron(eye_w, w[j * C_in:(j + 1) * C_in, :])
                      for j in range(n_chunks)])


def _bias_row(b, W):
    """(C,) -> (1, W*C): per-channel bias replicated along the lane-packed W."""
    return jnp.tile(b, W).reshape(1, -1)


def _default_images_per_step(B):
    """Fuse the batch on single-TC chips; split per-image on multi-TC chips."""
    try:
        kind = jax.devices()[0].device_kind.lower()
    except Exception:
        return B
    single_tc = any(t in kind for t in ("v5 lite", "v5e", "v6 lite", "v6e"))
    return B if single_tc else 1


# ------------------------------ host wrapper ---------------------------------

def block_forward(x, params, *, images_per_step=None):
    """Block.forward (mobile=False).  x: (B, H, W, C) NHWC."""
    B, H, W, C = x.shape
    WC = W * C
    if images_per_step is None:
        images_per_step = _default_images_per_step(B)
    if B % images_per_step != 0:
        images_per_step = 1
    R = images_per_step * H               # rows per grid step

    # lane-dense 2-D view: rows = (b, h), lanes = (w, c)  -> last dim 128
    x2 = x.reshape(B * H, WC)

    args = [x2]
    for name in ("b1", "b2", "b3"):
        p = params[name]
        args += [_conv3_to_row_mats(p["w1"], W), _bias_row(p["b1"], W),
                 _conv3_to_row_mats(p["w2"], W), _bias_row(p["b2"], W)]
    args += [_pw_to_mats(params["c1_w"], 2, W), _bias_row(params["c1_b"], W),
             _pw_to_mats(params["c2_w"], 3, W), _bias_row(params["c2_b"], W),
             _pw_to_mats(params["c3_w"], 4, W), _bias_row(params["c3_b"], W)]

    in_specs = [pl.BlockSpec((R, WC), lambda n: (n, 0))]
    for a in args[1:]:
        # constant block index -> weights DMA'd once, resident in VMEM.
        if a.ndim == 3:
            in_specs.append(pl.BlockSpec(a.shape, lambda n: (0, 0, 0)))
        else:
            in_specs.append(pl.BlockSpec(a.shape, lambda n: (0, 0)))

    kernel = functools.partial(_block_kernel, H=H, W=W, C=C)

    out2 = pl.pallas_call(
        kernel,
        out_shape=jax.ShapeDtypeStruct((B * H, WC), x.dtype),
        grid=(B // images_per_step,),
        in_specs=in_specs,
        out_specs=pl.BlockSpec((R, WC), lambda n: (n, 0)),
        compiler_params=pltpu.CompilerParams(
            dimension_semantics=("parallel",)),
    )(*args)
    return out2.reshape(B, H, W, C)


# --------------------------- params / reference ------------------------------

def init_params(key, C):
    keys = jax.random.split(key, 18)
    k = iter(keys)

    def w3(cin, cout):
        return 0.05 * jax.random.normal(next(k), (3, 3, cin, cout), jnp.float32)

    def w1(cin, cout):
        return 0.05 * jax.random.normal(next(k), (cin, cout), jnp.float32)

    def bias(c):
        return 0.05 * jax.random.normal(next(k), (c,), jnp.float32)

    def resblock():
        return {"w1": w3(C, C), "b1": bias(C), "w2": w3(C, C), "b2": bias(C)}

    return {
        "b1": resblock(),
        "b2": resblock(),
        "b3": resblock(),
        "c1_w": w1(2 * C, C), "c1_b": bias(C),
        "c2_w": w1(3 * C, C), "c2_b": bias(C),
        "c3_w": w1(4 * C, C), "c3_b": bias(C),
    }


def _ref_conv(x, w, b, pad):
    out = jax.lax.conv_general_dilated(
        x, w, window_strides=(1, 1), padding=[(pad, pad), (pad, pad)],
        dimension_numbers=("NHWC", "HWIO", "NHWC"))
    return out + b


def ref_block_forward(x, p):
    def rb(x, q):
        out = jax.nn.relu(_ref_conv(x, q["w1"], q["b1"], 1))
        return jax.nn.relu(_ref_conv(out, q["w2"], q["b2"], 1) + x)

    def pw(x, w, b):
        return _ref_conv(x, w.reshape(1, 1, *w.shape), b, 0)

    c0 = o0 = x
    b1 = rb(o0, p["b1"])
    c1 = jnp.concatenate([c0, b1], axis=-1)
    o1 = pw(c1, p["c1_w"], p["c1_b"])
    b2 = rb(o1, p["b2"])
    c2 = jnp.concatenate([c1, b2], axis=-1)
    o2 = pw(c2, p["c2_w"], p["c2_b"])
    b3 = rb(o2, p["b3"])
    c3 = jnp.concatenate([c2, b3], axis=-1)
    return pw(c3, p["c3_w"], p["c3_b"])


# ----------------------------------- main ------------------------------------

if __name__ == "__main__":
    B, C, H, W = 2, 16, 8, 8  # PyTorch-equivalent input: (2, 16, 8, 8) NCHW

    key = jax.random.PRNGKey(0)
    kx, kp = jax.random.split(key)
    x = jax.random.normal(kx, (B, H, W, C), jnp.float32)  # NHWC
    params = init_params(kp, C)

    fwd = jax.jit(block_forward)
    out = jax.block_until_ready(fwd(x, params))
    ref = jax.block_until_ready(ref_block_forward(x, params))

    assert out.shape == (B, H, W, C), out.shape
    err = float(jnp.max(jnp.abs(out - ref)))
    assert jnp.allclose(out, ref, atol=1e-3, rtol=1e-3), err
    print("KERNEL_OK")
</pallas_src>

<mosaic_0001>
module attributes {stable_mosaic.version = 11 : i64} {
  func.func @_block_kernel(%arg0: i32, %arg1: memref<8x128xf32, #tpu.memory_space<vmem>>, %arg2: memref<3x128x128xf32, #tpu.memory_space<vmem>>, %arg3: memref<1x128xf32, #tpu.memory_space<vmem>>, %arg4: memref<3x128x128xf32, #tpu.memory_space<vmem>>, %arg5: memref<1x128xf32, #tpu.memory_space<vmem>>, %arg6: memref<3x128x128xf32, #tpu.memory_space<vmem>>, %arg7: memref<1x128xf32, #tpu.memory_space<vmem>>, %arg8: memref<3x128x128xf32, #tpu.memory_space<vmem>>, %arg9: memref<1x128xf32, #tpu.memory_space<vmem>>, %arg10: memref<3x128x128xf32, #tpu.memory_space<vmem>>, %arg11: memref<1x128xf32, #tpu.memory_space<vmem>>, %arg12: memref<3x128x128xf32, #tpu.memory_space<vmem>>, %arg13: memref<1x128xf32, #tpu.memory_space<vmem>>, %arg14: memref<2x128x128xf32, #tpu.memory_space<vmem>>, %arg15: memref<1x128xf32, #tpu.memory_space<vmem>>, %arg16: memref<3x128x128xf32, #tpu.memory_space<vmem>>, %arg17: memref<1x128xf32, #tpu.memory_space<vmem>>, %arg18: memref<4x128x128xf32, #tpu.memory_space<vmem>>, %arg19: memref<1x128xf32, #tpu.memory_space<vmem>>, %arg20: memref<8x128xf32, #tpu.memory_space<vmem>>) attributes {dimension_semantics = [#tpu.dimension_semantics<parallel>], iteration_bounds = array<i64: 2>, scalar_prefetch = 0 : i64, scratch_operands = 0 : i64, tpu.core_type = #tpu.core_type<tc>, window_params = [{transform_indices = @transform_0, window_bounds = array<i64: 8, 128>}, {pipeline_mode = #tpu.pipeline_mode<synchronous>, transform_indices = @transform_1, window_bounds = array<i64: 3, 128, 128>}, {pipeline_mode = #tpu.pipeline_mode<synchronous>, transform_indices = @transform_2, window_bounds = array<i64: 1, 128>}, {pipeline_mode = #tpu.pipeline_mode<synchronous>, transform_indices = @transform_3, window_bounds = array<i64: 3, 128, 128>}, {pipeline_mode = #tpu.pipeline_mode<synchronous>, transform_indices = @transform_4, window_bounds = array<i64: 1, 128>}, {pipeline_mode = #tpu.pipeline_mode<synchronous>, transform_indices = @transform_5, window_bounds = array<i64: 3, 128, 128>}, {pipeline_mode = #tpu.pipeline_mode<synchronous>, transform_indices = @transform_6, window_bounds = array<i64: 1, 128>}, {pipeline_mode = #tpu.pipeline_mode<synchronous>, transform_indices = @transform_7, window_bounds = array<i64: 3, 128, 128>}, {pipeline_mode = #tpu.pipeline_mode<synchronous>, transform_indices = @transform_8, window_bounds = array<i64: 1, 128>}, {pipeline_mode = #tpu.pipeline_mode<synchronous>, transform_indices = @transform_9, window_bounds = array<i64: 3, 128, 128>}, {pipeline_mode = #tpu.pipeline_mode<synchronous>, transform_indices = @transform_10, window_bounds = array<i64: 1, 128>}, {pipeline_mode = #tpu.pipeline_mode<synchronous>, transform_indices = @transform_11, window_bounds = array<i64: 3, 128, 128>}, {pipeline_mode = #tpu.pipeline_mode<synchronous>, transform_indices = @transform_12, window_bounds = array<i64: 1, 128>}, {pipeline_mode = #tpu.pipeline_mode<synchronous>, transform_indices = @transform_13, window_bounds = array<i64: 2, 128, 128>}, {pipeline_mode = #tpu.pipeline_mode<synchronous>, transform_indices = @transform_14, window_bounds = array<i64: 1, 128>}, {pipeline_mode = #tpu.pipeline_mode<synchronous>, transform_indices = @transform_15, window_bounds = array<i64: 3, 128, 128>}, {pipeline_mode = #tpu.pipeline_mode<synchronous>, transform_indices = @transform_16, window_bounds = array<i64: 1, 128>}, {pipeline_mode = #tpu.pipeline_mode<synchronous>, transform_indices = @transform_17, window_bounds = array<i64: 4, 128, 128>}, {pipeline_mode = #tpu.pipeline_mode<synchronous>, transform_indices = @transform_18, window_bounds = array<i64: 1, 128>}, {transform_indices = @transform_19, window_bounds = array<i64: 8, 128>}]} {
    %0 = tpu.iota {dimensions = array<i32: 0>} : vector<8x128xi32>
    %c8_i32 = arith.constant 8 : i32
    %c0_i32 = arith.constant 0 : i32
    %1 = arith.cmpi eq, %c8_i32, %c0_i32 : i32
    %c1_i32 = arith.constant 1 : i32
    %2 = arith.select %1, %c1_i32, %c8_i32 : i32
    %3 = vector.broadcast %2 : i32 to vector<8x128xi32>
    %4 = arith.remsi %0, %3 : vector<8x128xi32>
    %c0_i32_0 = arith.constant 0 : i32
    %5 = vector.broadcast %c0_i32_0 : i32 to vector<8x128xi32>
    %6 = arith.cmpi ne, %4, %5 : vector<8x128xi32>
    %c0_i32_1 = arith.constant 0 : i32
    %7 = vector.broadcast %c0_i32_1 : i32 to vector<8x128xi32>
    %8 = arith.cmpi slt, %4, %7 : vector<8x128xi32>
    %c0_i32_2 = arith.constant 0 : i32
    %9 = arith.cmpi slt, %2, %c0_i32_2 : i32
    %10 = vector.broadcast %9 : i1 to vector<8x128xi1>
    %11 = vector.broadcast %10 : vector<8x128xi1> to vector<8x128xi1>
    %12 = arith.xori %8, %11 : vector<8x128xi1>
    %13 = arith.andi %12, %6 : vector<8x128xi1>
    %14 = vector.broadcast %2 : i32 to vector<8x128xi32>
    %15 = arith.addi %4, %14 : vector<8x128xi32>
    %16 = arith.select %13, %15, %4 : vector<8x128xi1>, vector<8x128xi32>
    %c0_i32_3 = arith.constant 0 : i32
    %17 = vector.broadcast %c0_i32_3 : i32 to vector<8x128xi32>
    %18 = arith.cmpi ne, %16, %17 : vector<8x128xi32>
    %c7_i32 = arith.constant 7 : i32
    %19 = vector.broadcast %c7_i32 : i32 to vector<8x128xi32>
    %20 = arith.cmpi ne, %16, %19 : vector<8x128xi32>
    %c0 = arith.constant 0 : index
    %c0_4 = arith.constant 0 : index
    %21 = vector.load %arg1[%c0, %c0_4] : memref<8x128xf32, #tpu.memory_space<vmem>>, vector<8x128xf32>
    %c1_i32_5 = arith.constant 1 : i32
    %22 = tpu.dynamic_rotate %21 by %c1_i32_5 dim 0 : vector<8x128xf32>, i32 -> vector<8x128xf32>
    %cst = arith.constant 0.000000e+00 : f32
    %23 = vector.broadcast %cst : f32 to vector<8x128xf32>
    %24 = arith.select %18, %22, %23 : vector<8x128xi1>, vector<8x128xf32>
    %c7_i32_6 = arith.constant 7 : i32
    %25 = tpu.dynamic_rotate %21 by %c7_i32_6 dim 0 : vector<8x128xf32>, i32 -> vector<8x128xf32>
    %cst_7 = arith.constant 0.000000e+00 : f32
    %26 = vector.broadcast %cst_7 : f32 to vector<8x128xf32>
    %27 = arith.select %20, %25, %26 : vector<8x128xi1>, vector<8x128xf32>
    %c0_8 = arith.constant 0 : index
    %c0_9 = arith.constant 0 : index
    %c0_10 = arith.constant 0 : index
    %28 = vector.load %arg2[%c0_8, %c0_9, %c0_10] : memref<3x128x128xf32, #tpu.memory_space<vmem>>, vector<1x128x128xf32>
    %29 = vector.shape_cast %28 : vector<1x128x128xf32> to vector<128x128xf32>
    %cst_11 = arith.constant dense<0.000000e+00> : vector<8x128xf32>
    %30 = tpu.matmul %24, %29, %cst_11 {dimension_numbers = #tpu.dot_dimension_numbers<[1], [0], [0], [1], [0, 0, 1, 1], [], []>} : vector<8x128xf32>, vector<128x128xf32>, vector<8x128xf32> -> vector<8x128xf32>
    %c1 = arith.constant 1 : index
    %c0_12 = arith.constant 0 : index
    %c0_13 = arith.constant 0 : index
    %31 = vector.load %arg2[%c1, %c0_12, %c0_13] : memref<3x128x128xf32, #tpu.memory_space<vmem>>, vector<1x128x128xf32>
    %32 = vector.shape_cast %31 : vector<1x128x128xf32> to vector<128x128xf32>
    %cst_14 = arith.constant dense<0.000000e+00> : vector<8x128xf32>
    %33 = tpu.matmul %21, %32, %cst_14 {dimension_numbers = #tpu.dot_dimension_numbers<[1], [0], [0], [1], [0, 0, 1, 1], [], []>} : vector<8x128xf32>, vector<128x128xf32>, vector<8x128xf32> -> vector<8x128xf32>
    %34 = arith.addf %30, %33 : vector<8x128xf32>
    %c2 = arith.constant 2 : index
    %c0_15 = arith.constant 0 : index
    %c0_16 = arith.constant 0 : index
    %35 = vector.load %arg2[%c2, %c0_15, %c0_16] : memref<3x128x128xf32, #tpu.memory_space<vmem>>, vector<1x128x128xf32>
    %36 = vector.shape_cast %35 : vector<1x128x128xf32> to vector<128x128xf32>
    %cst_17 = arith.constant dense<0.000000e+00> : vector<8x128xf32>
    %37 = tpu.matmul %27, %36, %cst_17 {dimension_numbers = #tpu.dot_dimension_numbers<[1], [0], [0], [1], [0, 0, 1, 1], [], []>} : vector<8x128xf32>, vector<128x128xf32>, vector<8x128xf32> -> vector<8x128xf32>
    %38 = arith.addf %34, %37 : vector<8x128xf32>
    %c0_18 = arith.constant 0 : index
    %c0_19 = arith.constant 0 : index
    %39 = vector.load %arg3[%c0_18, %c0_19] : memref<1x128xf32, #tpu.memory_space<vmem>>, vector<1x128xf32>
    %40 = vector.broadcast %39 : vector<1x128xf32> to vector<8x128xf32>
    %41 = arith.addf %38, %40 : vector<8x128xf32>
    %cst_20 = arith.constant 0.000000e+00 : f32
    %42 = vector.broadcast %cst_20 : f32 to vector<8x128xf32>
    %43 = arith.maximumf %41, %42 : vector<8x128xf32>
    %c1_i32_21 = arith.constant 1 : i32
    %44 = tpu.dynamic_rotate %43 by %c1_i32_21 dim 0 : vector<8x128xf32>, i32 -> vector<8x128xf32>
    %cst_22 = arith.constant 0.000000e+00 : f32
    %45 = vector.broadcast %cst_22 : f32 to vector<8x128xf32>
    %46 = arith.select %18, %44, %45 : vector<8x128xi1>, vector<8x128xf32>
    %c7_i32_23 = arith.constant 7 : i32
    %47 = tpu.dynamic_rotate %43 by %c7_i32_23 dim 0 : vector<8x128xf32>, i32 -> vector<8x128xf32>
    %cst_24 = arith.constant 0.000000e+00 : f32
    %48 = vector.broadcast %cst_24 : f32 to vector<8x128xf32>
    %49 = arith.select %20, %47, %48 : vector<8x128xi1>, vector<8x128xf32>
    %c0_25 = arith.constant 0 : index
    %c0_26 = arith.constant 0 : index
    %c0_27 = arith.constant 0 : index
    %50 = vector.load %arg4[%c0_25, %c0_26, %c0_27] : memref<3x128x128xf32, #tpu.memory_space<vmem>>, vector<1x128x128xf32>
    %51 = vector.shape_cast %50 : vector<1x128x128xf32> to vector<128x128xf32>
    %cst_28 = arith.constant dense<0.000000e+00> : vector<8x128xf32>
    %52 = tpu.matmul %46, %51, %cst_28 {dimension_numbers = #tpu.dot_dimension_numbers<[1], [0], [0], [1], [0, 0, 1, 1], [], []>} : vector<8x128xf32>, vector<128x128xf32>, vector<8x128xf32> -> vector<8x128xf32>
    %c1_29 = arith.constant 1 : index
    %c0_30 = arith.constant 0 : index
    %c0_31 = arith.constant 0 : index
    %53 = vector.load %arg4[%c1_29, %c0_30, %c0_31] : memref<3x128x128xf32, #tpu.memory_space<vmem>>, vector<1x128x128xf32>
    %54 = vector.shape_cast %53 : vector<1x128x128xf32> to vector<128x128xf32>
    %cst_32 = arith.constant dense<0.000000e+00> : vector<8x128xf32>
    %55 = tpu.matmul %43, %54, %cst_32 {dimension_numbers = #tpu.dot_dimension_numbers<[1], [0], [0], [1], [0, 0, 1, 1], [], []>} : vector<8x128xf32>, vector<128x128xf32>, vector<8x128xf32> -> vector<8x128xf32>
    %56 = arith.addf %52, %55 : vector<8x128xf32>
    %c2_33 = arith.constant 2 : index
    %c0_34 = arith.constant 0 : index
    %c0_35 = arith.constant 0 : index
    %57 = vector.load %arg4[%c2_33, %c0_34, %c0_35] : memref<3x128x128xf32, #tpu.memory_space<vmem>>, vector<1x128x128xf32>
    %58 = vector.shape_cast %57 : vector<1x128x128xf32> to vector<128x128xf32>
    %cst_36 = arith.constant dense<0.000000e+00> : vector<8x128xf32>
    %59 = tpu.matmul %49, %58, %cst_36 {dimension_numbers = #tpu.dot_dimension_numbers<[1], [0], [0], [1], [0, 0, 1, 1], [], []>} : vector<8x128xf32>, vector<128x128xf32>, vector<8x128xf32> -> vector<8x128xf32>
    %60 = arith.addf %56, %59 : vector<8x128xf32>
    %c0_37 = arith.constant 0 : index
    %c0_38 = arith.constant 0 : index
    %61 = vector.load %arg5[%c0_37, %c0_38] : memref<1x128xf32, #tpu.memory_space<vmem>>, vector<1x128xf32>
    %62 = vector.broadcast %61 : vector<1x128xf32> to vector<8x128xf32>
    %63 = arith.addf %60, %62 : vector<8x128xf32>
    %64 = arith.addf %63, %21 : vector<8x128xf32>
    %cst_39 = arith.constant 0.000000e+00 : f32
    %65 = vector.broadcast %cst_39 : f32 to vector<8x128xf32>
    %66 = arith.maximumf %64, %65 : vector<8x128xf32>
    %c0_40 = arith.constant 0 : index
    %c0_41 = arith.constant 0 : index
    %c0_42 = arith.constant 0 : index
    %67 = vector.load %arg14[%c0_40, %c0_41, %c0_42] : memref<2x128x128xf32, #tpu.memory_space<vmem>>, vector<1x128x128xf32>
    %68 = vector.shape_cast %67 : vector<1x128x128xf32> to vector<128x128xf32>
    %cst_43 = arith.constant dense<0.000000e+00> : vector<8x128xf32>
    %69 = tpu.matmul %21, %68, %cst_43 {dimension_numbers = #tpu.dot_dimension_numbers<[1], [0], [0], [1], [0, 0, 1, 1], [], []>} : vector<8x128xf32>, vector<128x128xf32>, vector<8x128xf32> -> vector<8x128xf32>
    %c1_44 = arith.constant 1 : index
    %c0_45 = arith.constant 0 : index
    %c0_46 = arith.constant 0 : index
    %70 = vector.load %arg14[%c1_44, %c0_45, %c0_46] : memref<2x128x128xf32, #tpu.memory_space<vmem>>, vector<1x128x128xf32>
    %71 = vector.shape_cast %70 : vector<1x128x128xf32> to vector<128x128xf32>
    %cst_47 = arith.constant dense<0.000000e+00> : vector<8x128xf32>
    %72 = tpu.matmul %66, %71, %cst_47 {dimension_numbers = #tpu.dot_dimension_numbers<[1], [0], [0], [1], [0, 0, 1, 1], [], []>} : vector<8x128xf32>, vector<128x128xf32>, vector<8x128xf32> -> vector<8x128xf32>
    %73 = arith.addf %69, %72 : vector<8x128xf32>
    %c0_48 = arith.constant 0 : index
    %c0_49 = arith.constant 0 : index
    %74 = vector.load %arg15[%c0_48, %c0_49] : memref<1x128xf32, #tpu.memory_space<vmem>>, vector<1x128xf32>
    %75 = vector.broadcast %74 : vector<1x128xf32> to vector<8x128xf32>
    %76 = arith.addf %73, %75 : vector<8x128xf32>
    %c1_i32_50 = arith.constant 1 : i32
    %77 = tpu.dynamic_rotate %76 by %c1_i32_50 dim 0 : vector<8x128xf32>, i32 -> vector<8x128xf32>
    %cst_51 = arith.constant 0.000000e+00 : f32
    %78 = vector.broadcast %cst_51 : f32 to vector<8x128xf32>
    %79 = arith.select %18, %77, %78 : vector<8x128xi1>, vector<8x128xf32>
    %c7_i32_52 = arith.constant 7 : i32
    %80 = tpu.dynamic_rotate %76 by %c7_i32_52 dim 0 : vector<8x128xf32>, i32 -> vector<8x128xf32>
    %cst_53 = arith.constant 0.000000e+00 : f32
    %81 = vector.broadcast %cst_53 : f32 to vector<8x128xf32>
    %82 = arith.select %20, %80, %81 : vector<8x128xi1>, vector<8x128xf32>
    %c0_54 = arith.constant 0 : index
    %c0_55 = arith.constant 0 : index
    %c0_56 = arith.constant 0 : index
    %83 = vector.load %arg6[%c0_54, %c0_55, %c0_56] : memref<3x128x128xf32, #tpu.memory_space<vmem>>, vector<1x128x128xf32>
    %84 = vector.shape_cast %83 : vector<1x128x128xf32> to vector<128x128xf32>
    %cst_57 = arith.constant dense<0.000000e+00> : vector<8x128xf32>
    %85 = tpu.matmul %79, %84, %cst_57 {dimension_numbers = #tpu.dot_dimension_numbers<[1], [0], [0], [1], [0, 0, 1, 1], [], []>} : vector<8x128xf32>, vector<128x128xf32>, vector<8x128xf32> -> vector<8x128xf32>
    %c1_58 = arith.constant 1 : index
    %c0_59 = arith.constant 0 : index
    %c0_60 = arith.constant 0 : index
    %86 = vector.load %arg6[%c1_58, %c0_59, %c0_60] : memref<3x128x128xf32, #tpu.memory_space<vmem>>, vector<1x128x128xf32>
    %87 = vector.shape_cast %86 : vector<1x128x128xf32> to vector<128x128xf32>
    %cst_61 = arith.constant dense<0.000000e+00> : vector<8x128xf32>
    %88 = tpu.matmul %76, %87, %cst_61 {dimension_numbers = #tpu.dot_dimension_numbers<[1], [0], [0], [1], [0, 0, 1, 1], [], []>} : vector<8x128xf32>, vector<128x128xf32>, vector<8x128xf32> -> vector<8x128xf32>
    %89 = arith.addf %85, %88 : vector<8x128xf32>
    %c2_62 = arith.constant 2 : index
    %c0_63 = arith.constant 0 : index
    %c0_64 = arith.constant 0 : index
    %90 = vector.load %arg6[%c2_62, %c0_63, %c0_64] : memref<3x128x128xf32, #tpu.memory_space<vmem>>, vector<1x128x128xf32>
    %91 = vector.shape_cast %90 : vector<1x128x128xf32> to vector<128x128xf32>
    %cst_65 = arith.constant dense<0.000000e+00> : vector<8x128xf32>
    %92 = tpu.matmul %82, %91, %cst_65 {dimension_numbers = #tpu.dot_dimension_numbers<[1], [0], [0], [1], [0, 0, 1, 1], [], []>} : vector<8x128xf32>, vector<128x128xf32>, vector<8x128xf32> -> vector<8x128xf32>
    %93 = arith.addf %89, %92 : vector<8x128xf32>
    %c0_66 = arith.constant 0 : index
    %c0_67 = arith.constant 0 : index
    %94 = vector.load %arg7[%c0_66, %c0_67] : memref<1x128xf32, #tpu.memory_space<vmem>>, vector<1x128xf32>
    %95 = vector.broadcast %94 : vector<1x128xf32> to vector<8x128xf32>
    %96 = arith.addf %93, %95 : vector<8x128xf32>
    %cst_68 = arith.constant 0.000000e+00 : f32
    %97 = vector.broadcast %cst_68 : f32 to vector<8x128xf32>
    %98 = arith.maximumf %96, %97 : vector<8x128xf32>
    %c1_i32_69 = arith.constant 1 : i32
    %99 = tpu.dynamic_rotate %98 by %c1_i32_69 dim 0 : vector<8x128xf32>, i32 -> vector<8x128xf32>
    %cst_70 = arith.constant 0.000000e+00 : f32
    %100 = vector.broadcast %cst_70 : f32 to vector<8x128xf32>
    %101 = arith.select %18, %99, %100 : vector<8x128xi1>, vector<8x128xf32>
    %c7_i32_71 = arith.constant 7 : i32
    %102 = tpu.dynamic_rotate %98 by %c7_i32_71 dim 0 : vector<8x128xf32>, i32 -> vector<8x128xf32>
    %cst_72 = arith.constant 0.000000e+00 : f32
    %103 = vector.broadcast %cst_72 : f32 to vector<8x128xf32>
    %104 = arith.select %20, %102, %103 : vector<8x128xi1>, vector<8x128xf32>
    %c0_73 = arith.constant 0 : index
    %c0_74 = arith.constant 0 : index
    %c0_75 = arith.constant 0 : index
    %105 = vector.load %arg8[%c0_73, %c0_74, %c0_75] : memref<3x128x128xf32, #tpu.memory_space<vmem>>, vector<1x128x128xf32>
    %106 = vector.shape_cast %105 : vector<1x128x128xf32> to vector<128x128xf32>
    %cst_76 = arith.constant dense<0.000000e+00> : vector<8x128xf32>
    %107 = tpu.matmul %101, %106, %cst_76 {dimension_numbers = #tpu.dot_dimension_numbers<[1], [0], [0], [1], [0, 0, 1, 1], [], []>} : vector<8x128xf32>, vector<128x128xf32>, vector<8x128xf32> -> vector<8x128xf32>
    %c1_77 = arith.constant 1 : index
    %c0_78 = arith.constant 0 : index
    %c0_79 = arith.constant 0 : index
    %108 = vector.load %arg8[%c1_77, %c0_78, %c0_79] : memref<3x128x128xf32, #tpu.memory_space<vmem>>, vector<1x128x128xf32>
    %109 = vector.shape_cast %108 : vector<1x128x128xf32> to vector<128x128xf32>
    %cst_80 = arith.constant dense<0.000000e+00> : vector<8x128xf32>
    %110 = tpu.matmul %98, %109, %cst_80 {dimension_numbers = #tpu.dot_dimension_numbers<[1], [0], [0], [1], [0, 0, 1, 1], [], []>} : vector<8x128xf32>, vector<128x128xf32>, vector<8x128xf32> -> vector<8x128xf32>
    %111 = arith.addf %107, %110 : vector<8x128xf32>
    %c2_81 = arith.constant 2 : index
    %c0_82 = arith.constant 0 : index
    %c0_83 = arith.constant 0 : index
    %112 = vector.load %arg8[%c2_81, %c0_82, %c0_83] : memref<3x128x128xf32, #tpu.memory_space<vmem>>, vector<1x128x128xf32>
    %113 = vector.shape_cast %112 : vector<1x128x128xf32> to vector<128x128xf32>
    %cst_84 = arith.constant dense<0.000000e+00> : vector<8x128xf32>
    %114 = tpu.matmul %104, %113, %cst_84 {dimension_numbers = #tpu.dot_dimension_numbers<[1], [0], [0], [1], [0, 0, 1, 1], [], []>} : vector<8x128xf32>, vector<128x128xf32>, vector<8x128xf32> -> vector<8x128xf32>
    %115 = arith.addf %111, %114 : vector<8x128xf32>
    %c0_85 = arith.constant 0 : index
    %c0_86 = arith.constant 0 : index
    %116 = vector.load %arg9[%c0_85, %c0_86] : memref<1x128xf32, #tpu.memory_space<vmem>>, vector<1x128xf32>
    %117 = vector.broadcast %116 : vector<1x128xf32> to vector<8x128xf32>
    %118 = arith.addf %115, %117 : vector<8x128xf32>
    %119 = arith.addf %118, %76 : vector<8x128xf32>
    %cst_87 = arith.constant 0.000000e+00 : f32
    %120 = vector.broadcast %cst_87 : f32 to vector<8x128xf32>
    %121 = arith.maximumf %119, %120 : vector<8x128xf32>
    %c0_88 = arith.constant 0 : index
    %c0_89 = arith.constant 0 : index
    %c0_90 = arith.constant 0 : index
    %122 = vector.load %arg16[%c0_88, %c0_89, %c0_90] : memref<3x128x128xf32, #tpu.memory_space<vmem>>, vector<1x128x128xf32>
    %123 = vector.shape_cast %122 : vector<1x128x128xf32> to vector<128x128xf32>
    %cst_91 = arith.constant dense<0.000000e+00> : vector<8x128xf32>
    %124 = tpu.matmul %21, %123, %cst_91 {dimension_numbers = #tpu.dot_dimension_numbers<[1], [0], [0], [1], [0, 0, 1, 1], [], []>} : vector<8x128xf32>, vector<128x128xf32>, vector<8x128xf32> -> vector<8x128xf32>
    %c1_92 = arith.constant 1 : index
    %c0_93 = arith.constant 0 : index
    %c0_94 = arith.constant 0 : index
    %125 = vector.load %arg16[%c1_92, %c0_93, %c0_94] : memref<3x128x128xf32, #tpu.memory_space<vmem>>, vector<1x128x128xf32>
    %126 = vector.shape_cast %125 : vector<1x128x128xf32> to vector<128x128xf32>
    %cst_95 = arith.constant dense<0.000000e+00> : vector<8x128xf32>
    %127 = tpu.matmul %66, %126, %cst_95 {dimension_numbers = #tpu.dot_dimension_numbers<[1], [0], [0], [1], [0, 0, 1, 1], [], []>} : vector<8x128xf32>, vector<128x128xf32>, vector<8x128xf32> -> vector<8x128xf32>
    %128 = arith.addf %124, %127 : vector<8x128xf32>
    %c2_96 = arith.constant 2 : index
    %c0_97 = arith.constant 0 : index
    %c0_98 = arith.constant 0 : index
    %129 = vector.load %arg16[%c2_96, %c0_97, %c0_98] : memref<3x128x128xf32, #tpu.memory_space<vmem>>, vector<1x128x128xf32>
    %130 = vector.shape_cast %129 : vector<1x128x128xf32> to vector<128x128xf32>
    %cst_99 = arith.constant dense<0.000000e+00> : vector<8x128xf32>
    %131 = tpu.matmul %121, %130, %cst_99 {dimension_numbers = #tpu.dot_dimension_numbers<[1], [0], [0], [1], [0, 0, 1, 1], [], []>} : vector<8x128xf32>, vector<128x128xf32>, vector<8x128xf32> -> vector<8x128xf32>
    %132 = arith.addf %128, %131 : vector<8x128xf32>
    %c0_100 = arith.constant 0 : index
    %c0_101 = arith.constant 0 : index
    %133 = vector.load %arg17[%c0_100, %c0_101] : memref<1x128xf32, #tpu.memory_space<vmem>>, vector<1x128xf32>
    %134 = vector.broadcast %133 : vector<1x128xf32> to vector<8x128xf32>
    %135 = arith.addf %132, %134 : vector<8x128xf32>
    %c1_i32_102 = arith.constant 1 : i32
    %136 = tpu.dynamic_rotate %135 by %c1_i32_102 dim 0 : vector<8x128xf32>, i32 -> vector<8x128xf32>
    %cst_103 = arith.constant 0.000000e+00 : f32
    %137 = vector.broadcast %cst_103 : f32 to vector<8x128xf32>
    %138 = arith.select %18, %136, %137 : vector<8x128xi1>, vector<8x128xf32>
    %c7_i32_104 = arith.constant 7 : i32
    %139 = tpu.dynamic_rotate %135 by %c7_i32_104 dim 0 : vector<8x128xf32>, i32 -> vector<8x128xf32>
    %cst_105 = arith.constant 0.000000e+00 : f32
    %140 = vector.broadcast %cst_105 : f32 to vector<8x128xf32>
    %141 = arith.select %20, %139, %140 : vector<8x128xi1>, vector<8x128xf32>
    %c0_106 = arith.constant 0 : index
    %c0_107 = arith.constant 0 : index
    %c0_108 = arith.constant 0 : index
    %142 = vector.load %arg10[%c0_106, %c0_107, %c0_108] : memref<3x128x128xf32, #tpu.memory_space<vmem>>, vector<1x128x128xf32>
    %143 = vector.shape_cast %142 : vector<1x128x128xf32> to vector<128x128xf32>
    %cst_109 = arith.constant dense<0.000000e+00> : vector<8x128xf32>
    %144 = tpu.matmul %138, %143, %cst_109 {dimension_numbers = #tpu.dot_dimension_numbers<[1], [0], [0], [1], [0, 0, 1, 1], [], []>} : vector<8x128xf32>, vector<128x128xf32>, vector<8x128xf32> -> vector<8x128xf32>
    %c1_110 = arith.constant 1 : index
    %c0_111 = arith.constant 0 : index
    %c0_112 = arith.constant 0 : index
    %145 = vector.load %arg10[%c1_110, %c0_111, %c0_112] : memref<3x128x128xf32, #tpu.memory_space<vmem>>, vector<1x128x128xf32>
    %146 = vector.shape_cast %145 : vector<1x128x128xf32> to vector<128x128xf32>
    %cst_113 = arith.constant dense<0.000000e+00> : vector<8x128xf32>
    %147 = tpu.matmul %135, %146, %cst_113 {dimension_numbers = #tpu.dot_dimension_numbers<[1], [0], [0], [1], [0, 0, 1, 1], [], []>} : vector<8x128xf32>, vector<128x128xf32>, vector<8x128xf32> -> vector<8x128xf32>
    %148 = arith.addf %144, %147 : vector<8x128xf32>
    %c2_114 = arith.constant 2 : index
    %c0_115 = arith.constant 0 : index
    %c0_116 = arith.constant 0 : index
    %149 = vector.load %arg10[%c2_114, %c0_115, %c0_116] : memref<3x128x128xf32, #tpu.memory_space<vmem>>, vector<1x128x128xf32>
    %150 = vector.shape_cast %149 : vector<1x128x128xf32> to vector<128x128xf32>
    %cst_117 = arith.constant dense<0.000000e+00> : vector<8x128xf32>
    %151 = tpu.matmul %141, %150, %cst_117 {dimension_numbers = #tpu.dot_dimension_numbers<[1], [0], [0], [1], [0, 0, 1, 1], [], []>} : vector<8x128xf32>, vector<128x128xf32>, vector<8x128xf32> -> vector<8x128xf32>
    %152 = arith.addf %148, %151 : vector<8x128xf32>
    %c0_118 = arith.constant 0 : index
    %c0_119 = arith.constant 0 : index
    %153 = vector.load %arg11[%c0_118, %c0_119] : memref<1x128xf32, #tpu.memory_space<vmem>>, vector<1x128xf32>
    %154 = vector.broadcast %153 : vector<1x128xf32> to vector<8x128xf32>
    %155 = arith.addf %152, %154 : vector<8x128xf32>
    %cst_120 = arith.constant 0.000000e+00 : f32
    %156 = vector.broadcast %cst_120 : f32 to vector<8x128xf32>
    %157 = arith.maximumf %155, %156 : vector<8x128xf32>
    %c1_i32_121 = arith.constant 1 : i32
    %158 = tpu.dynamic_rotate %157 by %c1_i32_121 dim 0 : vector<8x128xf32>, i32 -> vector<8x128xf32>
    %cst_122 = arith.constant 0.000000e+00 : f32
    %159 = vector.broadcast %cst_122 : f32 to vector<8x128xf32>
    %160 = arith.select %18, %158, %159 : vector<8x128xi1>, vector<8x128xf32>
    %c7_i32_123 = arith.constant 7 : i32
    %161 = tpu.dynamic_rotate %157 by %c7_i32_123 dim 0 : vector<8x128xf32>, i32 -> vector<8x128xf32>
    %cst_124 = arith.constant 0.000000e+00 : f32
    %162 = vector.broadcast %cst_124 : f32 to vector<8x128xf32>
    %163 = arith.select %20, %161, %162 : vector<8x128xi1>, vector<8x128xf32>
    %c0_125 = arith.constant 0 : index
    %c0_126 = arith.constant 0 : index
    %c0_127 = arith.constant 0 : index
    %164 = vector.load %arg12[%c0_125, %c0_126, %c0_127] : memref<3x128x128xf32, #tpu.memory_space<vmem>>, vector<1x128x128xf32>
    %165 = vector.shape_cast %164 : vector<1x128x128xf32> to vector<128x128xf32>
    %cst_128 = arith.constant dense<0.000000e+00> : vector<8x128xf32>
    %166 = tpu.matmul %160, %165, %cst_128 {dimension_numbers = #tpu.dot_dimension_numbers<[1], [0], [0], [1], [0, 0, 1, 1], [], []>} : vector<8x128xf32>, vector<128x128xf32>, vector<8x128xf32> -> vector<8x128xf32>
    %c1_129 = arith.constant 1 : index
    %c0_130 = arith.constant 0 : index
    %c0_131 = arith.constant 0 : index
    %167 = vector.load %arg12[%c1_129, %c0_130, %c0_131] : memref<3x128x128xf32, #tpu.memory_space<vmem>>, vector<1x128x128xf32>
    %168 = vector.shape_cast %167 : vector<1x128x128xf32> to vector<128x128xf32>
    %cst_132 = arith.constant dense<0.000000e+00> : vector<8x128xf32>
    %169 = tpu.matmul %157, %168, %cst_132 {dimension_numbers = #tpu.dot_dimension_numbers<[1], [0], [0], [1], [0, 0, 1, 1], [], []>} : vector<8x128xf32>, vector<128x128xf32>, vector<8x128xf32> -> vector<8x128xf32>
    %170 = arith.addf %166, %169 : vector<8x128xf32>
    %c2_133 = arith.constant 2 : index
    %c0_134 = arith.constant 0 : index
    %c0_135 = arith.constant 0 : index
    %171 = vector.load %arg12[%c2_133, %c0_134, %c0_135] : memref<3x128x128xf32, #tpu.memory_space<vmem>>, vector<1x128x128xf32>
    %172 = vector.shape_cast %171 : vector<1x128x128xf32> to vector<128x128xf32>
    %cst_136 = arith.constant dense<0.000000e+00> : vector<8x128xf32>
    %173 = tpu.matmul %163, %172, %cst_136 {dimension_numbers = #tpu.dot_dimension_numbers<[1], [0], [0], [1], [0, 0, 1, 1], [], []>} : vector<8x128xf32>, vector<128x128xf32>, vector<8x128xf32> -> vector<8x128xf32>
    %174 = arith.addf %170, %173 : vector<8x128xf32>
    %c0_137 = arith.constant 0 : index
    %c0_138 = arith.constant 0 : index
    %175 = vector.load %arg13[%c0_137, %c0_138] : memref<1x128xf32, #tpu.memory_space<vmem>>, vector<1x128xf32>
    %176 = vector.broadcast %175 : vector<1x128xf32> to vector<8x128xf32>
    %177 = arith.addf %174, %176 : vector<8x128xf32>
    %178 = arith.addf %177, %135 : vector<8x128xf32>
    %cst_139 = arith.constant 0.000000e+00 : f32
    %179 = vector.broadcast %cst_139 : f32 to vector<8x128xf32>
    %180 = arith.maximumf %178, %179 : vector<8x128xf32>
    %c0_140 = arith.constant 0 : index
    %c0_141 = arith.constant 0 : index
    %c0_142 = arith.constant 0 : index
    %181 = vector.load %arg18[%c0_140, %c0_141, %c0_142] : memref<4x128x128xf32, #tpu.memory_space<vmem>>, vector<1x128x128xf32>
    %182 = vector.shape_cast %181 : vector<1x128x128xf32> to vector<128x128xf32>
    %cst_143 = arith.constant dense<0.000000e+00> : vector<8x128xf32>
    %183 = tpu.matmul %21, %182, %cst_143 {dimension_numbers = #tpu.dot_dimension_numbers<[1], [0], [0], [1], [0, 0, 1, 1], [], []>} : vector<8x128xf32>, vector<128x128xf32>, vector<8x128xf32> -> vector<8x128xf32>
    %c1_144 = arith.constant 1 : index
    %c0_145 = arith.constant 0 : index
    %c0_146 = arith.constant 0 : index
    %184 = vector.load %arg18[%c1_144, %c0_145, %c0_146] : memref<4x128x128xf32, #tpu.memory_space<vmem>>, vector<1x128x128xf32>
    %185 = vector.shape_cast %184 : vector<1x128x128xf32> to vector<128x128xf32>
    %cst_147 = arith.constant dense<0.000000e+00> : vector<8x128xf32>
    %186 = tpu.matmul %66, %185, %cst_147 {dimension_numbers = #tpu.dot_dimension_numbers<[1], [0], [0], [1], [0, 0, 1, 1], [], []>} : vector<8x128xf32>, vector<128x128xf32>, vector<8x128xf32> -> vector<8x128xf32>
    %187 = arith.addf %183, %186 : vector<8x128xf32>
    %c2_148 = arith.constant 2 : index
    %c0_149 = arith.constant 0 : index
    %c0_150 = arith.constant 0 : index
    %188 = vector.load %arg18[%c2_148, %c0_149, %c0_150] : memref<4x128x128xf32, #tpu.memory_space<vmem>>, vector<1x128x128xf32>
    %189 = vector.shape_cast %188 : vector<1x128x128xf32> to vector<128x128xf32>
    %cst_151 = arith.constant dense<0.000000e+00> : vector<8x128xf32>
    %190 = tpu.matmul %121, %189, %cst_151 {dimension_numbers = #tpu.dot_dimension_numbers<[1], [0], [0], [1], [0, 0, 1, 1], [], []>} : vector<8x128xf32>, vector<128x128xf32>, vector<8x128xf32> -> vector<8x128xf32>
    %191 = arith.addf %187, %190 : vector<8x128xf32>
    %c3 = arith.constant 3 : index
    %c0_152 = arith.constant 0 : index
    %c0_153 = arith.constant 0 : index
    %192 = vector.load %arg18[%c3, %c0_152, %c0_153] : memref<4x128x128xf32, #tpu.memory_space<vmem>>, vector<1x128x128xf32>
    %193 = vector.shape_cast %192 : vector<1x128x128xf32> to vector<128x128xf32>
    %cst_154 = arith.constant dense<0.000000e+00> : vector<8x128xf32>
    %194 = tpu.matmul %180, %193, %cst_154 {dimension_numbers = #tpu.dot_dimension_numbers<[1], [0], [0], [1], [0, 0, 1, 1], [], []>} : vector<8x128xf32>, vector<128x128xf32>, vector<8x128xf32> -> vector<8x128xf32>
    %195 = arith.addf %191, %194 : vector<8x128xf32>
    %c0_155 = arith.constant 0 : index
    %c0_156 = arith.constant 0 : index
    %196 = vector.load %arg19[%c0_155, %c0_156] : memref<1x128xf32, #tpu.memory_space<vmem>>, vector<1x128xf32>
    %197 = vector.broadcast %196 : vector<1x128xf32> to vector<8x128xf32>
    %198 = arith.addf %195, %197 : vector<8x128xf32>
    %c0_157 = arith.constant 0 : index
    %c0_158 = arith.constant 0 : index
    %199 = vector.load %arg20[%c0_157, %c0_158] : memref<8x128xf32, #tpu.memory_space<vmem>>, vector<8x128xf32>
    tpu.vector_store %arg20[%c0_157, %c0_158], %198 {strides = array<i32>} : memref<8x128xf32, #tpu.memory_space<vmem>>, vector<8x128xf32>,
    return
  }
  func.func @transform_0(%arg0: i32) -> (i32, i32) {
    %c0_i32 = arith.constant 0 : i32
    %c0_i32_0 = arith.constant 0 : i32
    return %arg0, %c0_i32 : i32, i32
  }
  func.func @transform_1(%arg0: i32) -> (i32, i32, i32) {
    %c0_i32 = arith.constant 0 : i32
    %c0_i32_0 = arith.constant 0 : i32
    %c0_i32_1 = arith.constant 0 : i32
    %c0_i32_2 = arith.constant 0 : i32
    return %c0_i32, %c0_i32_0, %c0_i32_1 : i32, i32, i32
  }
  func.func @transform_2(%arg0: i32) -> (i32, i32) {
    %c0_i32 = arith.constant 0 : i32
    %c0_i32_0 = arith.constant 0 : i32
    %c0_i32_1 = arith.constant 0 : i32
    return %c0_i32, %c0_i32_0 : i32, i32
  }
  func.func @transform_3(%arg0: i32) -> (i32, i32, i32) {
    %c0_i32 = arith.constant 0 : i32
    %c0_i32_0 = arith.constant 0 : i32
    %c0_i32_1 = arith.constant 0 : i32
    %c0_i32_2 = arith.constant 0 : i32
    return %c0_i32, %c0_i32_0, %c0_i32_1 : i32, i32, i32
  }
  func.func @transform_4(%arg0: i32) -> (i32, i32) {
    %c0_i32 = arith.constant 0 : i32
    %c0_i32_0 = arith.constant 0 : i32
    %c0_i32_1 = arith.constant 0 : i32
    return %c0_i32, %c0_i32_0 : i32, i32
  }
  func.func @transform_5(%arg0: i32) -> (i32, i32, i32) {
    %c0_i32 = arith.constant 0 : i32
    %c0_i32_0 = arith.constant 0 : i32
    %c0_i32_1 = arith.constant 0 : i32
    %c0_i32_2 = arith.constant 0 : i32
    return %c0_i32, %c0_i32_0, %c0_i32_1 : i32, i32, i32
  }
  func.func @transform_6(%arg0: i32) -> (i32, i32) {
    %c0_i32 = arith.constant 0 : i32
    %c0_i32_0 = arith.constant 0 : i32
    %c0_i32_1 = arith.constant 0 : i32
    return %c0_i32, %c0_i32_0 : i32, i32
  }
  func.func @transform_7(%arg0: i32) -> (i32, i32, i32) {
    %c0_i32 = arith.constant 0 : i32
    %c0_i32_0 = arith.constant 0 : i32
    %c0_i32_1 = arith.constant 0 : i32
    %c0_i32_2 = arith.constant 0 : i32
    return %c0_i32, %c0_i32_0, %c0_i32_1 : i32, i32, i32
  }
  func.func @transform_8(%arg0: i32) -> (i32, i32) {
    %c0_i32 = arith.constant 0 : i32
    %c0_i32_0 = arith.constant 0 : i32
    %c0_i32_1 = arith.constant 0 : i32
    return %c0_i32, %c0_i32_0 : i32, i32
  }
  func.func @transform_9(%arg0: i32) -> (i32, i32, i32) {
    %c0_i32 = arith.constant 0 : i32
    %c0_i32_0 = arith.constant 0 : i32
    %c0_i32_1 = arith.constant 0 : i32
    %c0_i32_2 = arith.constant 0 : i32
    return %c0_i32, %c0_i32_0, %c0_i32_1 : i32, i32, i32
  }
  func.func @transform_10(%arg0: i32) -> (i32, i32) {
    %c0_i32 = arith.constant 0 : i32
    %c0_i32_0 = arith.constant 0 : i32
    %c0_i32_1 = arith.constant 0 : i32
    return %c0_i32, %c0_i32_0 : i32, i32
  }
  func.func @transform_11(%arg0: i32) -> (i32, i32, i32) {
    %c0_i32 = arith.constant 0 : i32
    %c0_i32_0 = arith.constant 0 : i32
    %c0_i32_1 = arith.constant 0 : i32
    %c0_i32_2 = arith.constant 0 : i32
    return %c0_i32, %c0_i32_0, %c0_i32_1 : i32, i32, i32
  }
  func.func @transform_12(%arg0: i32) -> (i32, i32) {
    %c0_i32 = arith.constant 0 : i32
    %c0_i32_0 = arith.constant 0 : i32
    %c0_i32_1 = arith.constant 0 : i32
    return %c0_i32, %c0_i32_0 : i32, i32
  }
  func.func @transform_13(%arg0: i32) -> (i32, i32, i32) {
    %c0_i32 = arith.constant 0 : i32
    %c0_i32_0 = arith.constant 0 : i32
    %c0_i32_1 = arith.constant 0 : i32
    %c0_i32_2 = arith.constant 0 : i32
    return %c0_i32, %c0_i32_0, %c0_i32_1 : i32, i32, i32
  }
  func.func @transform_14(%arg0: i32) -> (i32, i32) {
    %c0_i32 = arith.constant 0 : i32
    %c0_i32_0 = arith.constant 0 : i32
    %c0_i32_1 = arith.constant 0 : i32
    return %c0_i32, %c0_i32_0 : i32, i32
  }
  func.func @transform_15(%arg0: i32) -> (i32, i32, i32) {
    %c0_i32 = arith.constant 0 : i32
    %c0_i32_0 = arith.constant 0 : i32
    %c0_i32_1 = arith.constant 0 : i32
    %c0_i32_2 = arith.constant 0 : i32
    return %c0_i32, %c0_i32_0, %c0_i32_1 : i32, i32, i32
  }
  func.func @transform_16(%arg0: i32) -> (i32, i32) {
    %c0_i32 = arith.constant 0 : i32
    %c0_i32_0 = arith.constant 0 : i32
    %c0_i32_1 = arith.constant 0 : i32
    return %c0_i32, %c0_i32_0 : i32, i32
  }
  func.func @transform_17(%arg0: i32) -> (i32, i32, i32) {
    %c0_i32 = arith.constant 0 : i32
    %c0_i32_0 = arith.constant 0 : i32
    %c0_i32_1 = arith.constant 0 : i32
    %c0_i32_2 = arith.constant 0 : i32
    return %c0_i32, %c0_i32_0, %c0_i32_1 : i32, i32, i32
  }
  func.func @transform_18(%arg0: i32) -> (i32, i32) {
    %c0_i32 = arith.constant 0 : i32
    %c0_i32_0 = arith.constant 0 : i32
    %c0_i32_1 = arith.constant 0 : i32
    return %c0_i32, %c0_i32_0 : i32, i32
  }
  func.func @transform_19(%arg0: i32) -> (i32, i32) {
    %c0_i32 = arith.constant 0 : i32
    %c0_i32_0 = arith.constant 0 : i32
    return %arg0, %c0_i32 : i32, i32
  }
}

</mosaic_0001>

<llo_original>
// kernel: tile.48
$region0: #{tile.48}
  #allocation0 [shape = 's32[1]{0}', space=sflag, size = 0x4, scoped, tag = 'scoped memory for tile.48']
  %s0 = inlined_call_operand.vmem [shape: f32[16], index: 0, kind: input, shape index: {}]
  %s1 = inlined_call_operand.vmem [shape: f32[8,16], index: 1, kind: output, shape index: {}]
  // Predicated region
  $region2: #{tile.48} parent=0 // pred_check
    _
  $region3: #{tile.48} parent=0 // pred_check_branch
    %3 = sbr.rel (0) target = $region5
  $region4: #{tile.48} parent=0 // pred_region
    _
  $region5: #{tile.48} parent=0 // pred_fallthru
    _
  %v4 = vld [vmem:[%s0] ss:$0 sm:$0xff]
  %5 = vst [vmem:[%s1] sm:$0xff] %v4

// kernel: tile.49
$region0: #{tile.49}
  %s0 = inlined_call_operand.vmem [shape: f32[8,16], index: 0, kind: input, shape index: {}]
  %s1 = inlined_call_operand.vmem [shape: f32[1,128], index: 1, kind: output, shape index: {}]
  $region1: #{tile.49} parent=0
    #allocation0 [shape = 'u8[4096]{0}', space=vmem, size = 0x1000, scoped, tag = 'scoped mem for output reshape']
    %v2 = vld [vmem:[%s0] sm:$0x1]
    %vm3 = vcmask 130048
    %4 = vst.msk [vmem:[#allocation0] sm:$0x1] %vm3, %v2
    %s5 = scalar_lea.vmem %s0, 7
    %v6 = vld [vmem:[%s5] sm:$0x1]
    %7 = vrot.lane.b32.xlu0 %v6, 112
    %v8 = vpop.permute.xlu0 %7
    %vm9 = vcmask 1048448
    %10 = vst.msk [vmem:[#allocation0] sm:$0x1] %vm9, %v8
    %s11 = scalar_lea.vmem %s0, 6
    %v12 = vld [vmem:[%s11] sm:$0x1]
    %13 = vrot.lane.b32.xlu0 %v12, 96
    %v14 = vpop.permute.xlu0 %13
    %vm15 = vcmask 917248
    %16 = vst.msk [vmem:[#allocation0] sm:$0x1] %vm15, %v14
    %s17 = scalar_lea.vmem %s0, 5
    %v18 = vld [vmem:[%s17] sm:$0x1]
    %19 = vrot.lane.b32.xlu0 %v18, 80
    %v20 = vpop.permute.xlu0 %19
    %vm21 = vcmask 786048
    %22 = vst.msk [vmem:[#allocation0] sm:$0x1] %vm21, %v20
    %s23 = scalar_lea.vmem %s0, 4
    %v24 = vld [vmem:[%s23] sm:$0x1]
    %25 = vrot.lane.b32.xlu0 %v24, 64
    %v26 = vpop.permute.xlu0 %25
    %vm27 = vcmask 654848
    %28 = vst.msk [vmem:[#allocation0] sm:$0x1] %vm27, %v26
    %s29 = scalar_lea.vmem %s0, 3
    %v30 = vld [vmem:[%s29] sm:$0x1]
    %31 = vrot.lane.b32.xlu0 %v30, 48
    %v32 = vpop.permute.xlu0 %31
    %vm33 = vcmask 523648
    %34 = vst.msk [vmem:[#allocation0] sm:$0x1] %vm33, %v32
    %s35 = scalar_lea.vmem %s0, 2
    %v36 = vld [vmem:[%s35] sm:$0x1]
    %37 = vrot.lane.b32.xlu0 %v36, 32
    %v38 = vpop.permute.xlu0 %37
    %vm39 = vcmask 392448
    %40 = vst.msk [vmem:[#allocation0] sm:$0x1] %vm39, %v38
    %s41 = scalar_lea.vmem %s0, 1
    %v42 = vld [vmem:[%s41] sm:$0x1]
    %43 = vrot.lane.b32.xlu0 %v42, 16
    %v44 = vpop.permute.xlu0 %43
    %vm45 = vcmask 261248
    %46 = vst.msk [vmem:[#allocation0] sm:$0x1] %vm45, %v44
    %s48 = sshllo.u32 0, 1
    %v50 = vld [vmem:[#allocation0] sm:%s48]
    %s51 = sshllo.u32 0, 1
    %52 = vst [vmem:[%s1] sm:%s51] %v50

// kernel: block_forward.1
$region0: #{block_forward.1}
  #allocation0 [shape = 'u32[]', space=smem, size = 0x4, offset = 0x4, fixed_abs, tag = 'smem constant byte address 0x4 - core index']
  #allocation1 [shape = 'u32[144,128]{1,0:T(1,128)}', space=vmem, size = 0x12000, scoped, tag = 'internal scratch']
  %s0 = inlined_call_operand.vmem [shape: f32[16,128], index: 0, kind: input, shape index: {}]
  %s1 = inlined_call_operand.vmem [shape: f32[3,128,128], index: 1, kind: input, shape index: {}]
  %s2 = inlined_call_operand.vmem [shape: f32[1,128], index: 2, kind: input, shape index: {}]
  %s3 = inlined_call_operand.vmem [shape: f32[3,128,128], index: 3, kind: input, shape index: {}]
  %s4 = inlined_call_operand.vmem [shape: f32[1,128], index: 4, kind: input, shape index: {}]
  %s5 = inlined_call_operand.vmem [shape: f32[3,128,128], index: 5, kind: input, shape index: {}]
  %s6 = inlined_call_operand.vmem [shape: f32[1,128], index: 6, kind: input, shape index: {}]
  %s7 = inlined_call_operand.vmem [shape: f32[3,128,128], index: 7, kind: input, shape index: {}]
  %s8 = inlined_call_operand.vmem [shape: f32[1,128], index: 8, kind: input, shape index: {}]
  %s9 = inlined_call_operand.vmem [shape: f32[3,128,128], index: 9, kind: input, shape index: {}]
  %s10 = inlined_call_operand.vmem [shape: f32[1,128], index: 10, kind: input, shape index: {}]
  %s11 = inlined_call_operand.vmem [shape: f32[3,128,128], index: 11, kind: input, shape index: {}]
  %s12 = inlined_call_operand.vmem [shape: f32[1,128], index: 12, kind: input, shape index: {}]
  %s13 = inlined_call_operand.vmem [shape: f32[2,128,128], index: 13, kind: input, shape index: {}]
  %s14 = inlined_call_operand.vmem [shape: f32[1,128], index: 14, kind: input, shape index: {}]
  %s15 = inlined_call_operand.vmem [shape: f32[3,128,128], index: 15, kind: input, shape index: {}]
  %s16 = inlined_call_operand.vmem [shape: f32[1,128], index: 16, kind: input, shape index: {}]
  %s17 = inlined_call_operand.vmem [shape: f32[4,128,128], index: 17, kind: input, shape index: {}]
  %s18 = inlined_call_operand.vmem [shape: f32[1,128], index: 18, kind: input, shape index: {}]
  %s19 = inlined_call_operand.vmem [shape: f32[16,128], index: 19, kind: output, shape index: {}]
  %s20 = sld [smem:[#allocation0]]
  $region109: #{block_forward.1} parent=0
    _
  %s22 = ssub.s32 1, %s20
  %s23 = scalar_select 0, %s22, %s20
  loop: start=0, step=1, limit=4
  $region2: #{block_forward.1} parent=0 // loop_pre_header
    _
  $region3: #{block_forward.1} parent=0 // loop_header
    %s25 = sphi 0, %s29
    %p26 = scmp.ge.s32.totalorder %s25, 4
    %s35 = sphi 0, %s37
    %s38 = sphi 0, %s35
    %s39 = sphi 0, %s38
    %s55 = sphi 0, %s39
    %s59 = sphi 0, %s59
    %s61 = sphi 0, %s59
    %s62 = sphi 0, %s61
    %s76 = sphi 0, %s62
    %s80 = sphi 0, %s80
    %s82 = sphi 0, %s80
    %s83 = sphi 0, %s82
    %s97 = sphi 0, %s83
    %s101 = sphi 0, %s101
    %s103 = sphi 0, %s101
    %s104 = sphi 0, %s103
    %s118 = sphi 0, %s104
    %s122 = sphi 0, %s122
    %s124 = sphi 0, %s122
    %s125 = sphi 0, %s124
    %s139 = sphi 0, %s125
    %s143 = sphi 0, %s143
    %s145 = sphi 0, %s143
    %s146 = sphi 0, %s145
    %s160 = sphi 0, %s146
    %s164 = sphi 0, %s164
    %s166 = sphi 0, %s164
    %s167 = sphi 0, %s166
    %s181 = sphi 0, %s167
    %s185 = sphi 0, %s185
    %s187 = sphi 0, %s185
    %s188 = sphi 0, %s187
    %s202 = sphi 0, %s188
    %s206 = sphi 0, %s206
    %s208 = sphi 0, %s206
    %s209 = sphi 0, %s208
    %s223 = sphi 0, %s209
    %s227 = sphi 0, %s227
    %s229 = sphi 0, %s227
    %s230 = sphi 0, %s229
    %s244 = sphi 0, %s230
    %s248 = sphi 0, %s248
    %s250 = sphi 0, %s248
    %s251 = sphi 0, %s250
    %s265 = sphi 0, %s251
    %s269 = sphi 0, %s269
    %s271 = sphi 0, %s269
    %s272 = sphi 0, %s271
    %s286 = sphi 0, %s272
    %s290 = sphi 0, %s290
    %s292 = sphi 0, %s290
    %s293 = sphi 0, %s292
    %s307 = sphi 0, %s293
    %s311 = sphi 0, %s311
    %s313 = sphi 0, %s311
    %s314 = sphi 0, %s313
    %s328 = sphi 0, %s314
    %s332 = sphi 0, %s332
    %s334 = sphi 0, %s332
    %s335 = sphi 0, %s334
    %s349 = sphi 0, %s335
    %s353 = sphi 0, %s353
    %s355 = sphi 0, %s353
    %s356 = sphi 0, %s355
    %s370 = sphi 0, %s356
    %s374 = sphi 0, %s374
    %s376 = sphi 0, %s374
    %s377 = sphi 0, %s376
    %s391 = sphi 0, %s377
    %s395 = sphi 0, %s395
    %s397 = sphi 0, %s395
    %s398 = sphi 0, %s397
    %s412 = sphi 0, %s398
    %s416 = sphi 0, %s416
    %s418 = sphi 0, %s416
    %s419 = sphi 0, %s418
    %s433 = sphi 0, %s419
    %s439 = sphi 0, %s441
    %s442 = sphi 0, %s439
    %s443 = sphi 0, %s442
    %s459 = sphi 0, %s443
  $region4: #{block_forward.1} parent=0 // loop_header_branch
    %28 = sbr.rel (%p26) target = $region8
  $region5: #{block_forward.1} parent=0 // loop_body
    %s30 = ssub.s32 %s25, 1
    %s31 = ssub.s32 %s25, 2
    %s32 = sadd.s32 %s25, 1
    %s33 = ssub.s32 %s25, %s32
    %p34 = scmp.eq.s32.totalorder %s33, 0
    %s36 = sadd.s32 %s35, 1
    %s37 = scalar_select %p34, %s35, %s36
    %p40 = pneg %p34
    %p41 = scmp.eq.s32.totalorder %s25, 1
    %p42 = por %p40, %p41
    %p43 = scmp.ne.s32.totalorder %s35, %s38
    %p44 = scmp.eq.s32.totalorder %s25, 0
    %p45 = por %p43, %p44
    %p46 = scmp.ne.s32.totalorder %s35, %s38
    %p47 = scmp.eq.s32.totalorder %s30, 1
    %p48 = por %p46, %p47
    %p49 = scmp.ne.s32.totalorder %s38, %s39
    %p50 = scmp.eq.s32.totalorder %s30, 0
    %p51 = por %p49, %p50
    %p52 = scmp.ne.s32.totalorder %s38, %s39
    %p53 = scmp.eq.s32.totalorder %s31, 1
    %p54 = por %p52, %p53
    %p56 = scmp.ne.s32.totalorder %s39, %s55
    %p57 = scmp.eq.s32.totalorder %s31, 0
    %p58 = por %p56, %p57
    %s60 = sadd.s32 %s59, 1
    %p63 = scmp.eq.s32.totalorder %s25, 1
    %p64 = scmp.ne.s32.totalorder %s59, %s61
    %p65 = scmp.eq.s32.totalorder %s25, 0
    %p66 = por %p64, %p65
    %p67 = scmp.ne.s32.totalorder %s59, %s61
    %p68 = scmp.eq.s32.totalorder %s30, 1
    %p69 = por %p67, %p68
    %p70 = scmp.ne.s32.totalorder %s61, %s62
    %p71 = scmp.eq.s32.totalorder %s30, 0
    %p72 = por %p70, %p71
    %p73 = scmp.ne.s32.totalorder %s61, %s62
    %p74 = scmp.eq.s32.totalorder %s31, 1
    %p75 = por %p73, %p74
    %p77 = scmp.ne.s32.totalorder %s62, %s76
    %p78 = scmp.eq.s32.totalorder %s31, 0
    %p79 = por %p77, %p78
    %s81 = sadd.s32 %s80, 1
    %p84 = scmp.eq.s32.totalorder %s25, 1
    %p85 = scmp.ne.s32.totalorder %s80, %s82
    %p86 = scmp.eq.s32.totalorder %s25, 0
    %p87 = por %p85, %p86
    %p88 = scmp.ne.s32.totalorder %s80, %s82
    %p89 = scmp.eq.s32.totalorder %s30, 1
    %p90 = por %p88, %p89
    %p91 = scmp.ne.s32.totalorder %s82, %s83
    %p92 = scmp.eq.s32.totalorder %s30, 0
    %p93 = por %p91, %p92
    %p94 = scmp.ne.s32.totalorder %s82, %s83
    %p95 = scmp.eq.s32.totalorder %s31, 1
    %p96 = por %p94, %p95
    %p98 = scmp.ne.s32.totalorder %s83, %s97
    %p99 = scmp.eq.s32.totalorder %s31, 0
    %p100 = por %p98, %p99
    %s102 = sadd.s32 %s101, 1
    %p105 = scmp.eq.s32.totalorder %s25, 1
    %p106 = scmp.ne.s32.totalorder %s101, %s103
    %p107 = scmp.eq.s32.totalorder %s25, 0
    %p108 = por %p106, %p107
    %p109 = scmp.ne.s32.totalorder %s101, %s103
    %p110 = scmp.eq.s32.totalorder %s30, 1
    %p111 = por %p109, %p110
    %p112 = scmp.ne.s32.totalorder %s103, %s104
    %p113 = scmp.eq.s32.totalorder %s30, 0
    %p114 = por %p112, %p113
    %p115 = scmp.ne.s32.totalorder %s103, %s104
    %p116 = scmp.eq.s32.totalorder %s31, 1
    %p117 = por %p115, %p116
    %p119 = scmp.ne.s32.totalorder %s104, %s118
    %p120 = scmp.eq.s32.totalorder %s31, 0
    %p121 = por %p119, %p120
    %s123 = sadd.s32 %s122, 1
    %p126 = scmp.eq.s32.totalorder %s25, 1
    %p127 = scmp.ne.s32.totalorder %s122, %s124
    %p128 = scmp.eq.s32.totalorder %s25, 0
    %p129 = por %p127, %p128
    %p130 = scmp.ne.s32.totalorder %s122, %s124
    %p131 = scmp.eq.s32.totalorder %s30, 1
    %p132 = por %p130, %p131
    %p133 = scmp.ne.s32.totalorder %s124, %s125
    %p134 = scmp.eq.s32.totalorder %s30, 0
    %p135 = por %p133, %p134
    %p136 = scmp.ne.s32.totalorder %s124, %s125
    %p137 = scmp.eq.s32.totalorder %s31, 1
    %p138 = por %p136, %p137
    %p140 = scmp.ne.s32.totalorder %s125, %s139
    %p141 = scmp.eq.s32.totalorder %s31, 0
    %p142 = por %p140, %p141
    %s144 = sadd.s32 %s143, 1
    %p147 = scmp.eq.s32.totalorder %s25, 1
    %p148 = scmp.ne.s32.totalorder %s143, %s145
    %p149 = scmp.eq.s32.totalorder %s25, 0
    %p150 = por %p148, %p149
    %p151 = scmp.ne.s32.totalorder %s143, %s145
    %p152 = scmp.eq.s32.totalorder %s30, 1
    %p153 = por %p151, %p152
    %p154 = scmp.ne.s32.totalorder %s145, %s146
    %p155 = scmp.eq.s32.totalorder %s30, 0
    %p156 = por %p154, %p155
    %p157 = scmp.ne.s32.totalorder %s145, %s146
    %p158 = scmp.eq.s32.totalorder %s31, 1
    %p159 = por %p157, %p158
    %p161 = scmp.ne.s32.totalorder %s146, %s160
    %p162 = scmp.eq.s32.totalorder %s31, 0
    %p163 = por %p161, %p162
    %s165 = sadd.s32 %s164, 1
    %p168 = scmp.eq.s32.totalorder %s25, 1
    %p169 = scmp.ne.s32.totalorder %s164, %s166
    %p170 = scmp.eq.s32.totalorder %s25, 0
    %p171 = por %p169, %p170
    %p172 = scmp.ne.s32.totalorder %s164, %s166
    %p173 = scmp.eq.s32.totalorder %s30, 1
    %p174 = por %p172, %p173
    %p175 = scmp.ne.s32.totalorder %s166, %s167
    %p176 = scmp.eq.s32.totalorder %s30, 0
    %p177 = por %p175, %p176
    %p178 = scmp.ne.s32.totalorder %s166, %s167
    %p179 = scmp.eq.s32.totalorder %s31, 1
    %p180 = por %p178, %p179
    %p182 = scmp.ne.s32.totalorder %s167, %s181
    %p183 = scmp.eq.s32.totalorder %s31, 0
    %p184 = por %p182, %p183
    %s186 = sadd.s32 %s185, 1
    %p189 = scmp.eq.s32.totalorder %s25, 1
    %p190 = scmp.ne.s32.totalorder %s185, %s187
    %p191 = scmp.eq.s32.totalorder %s25, 0
    %p192 = por %p190, %p191
    %p193 = scmp.ne.s32.totalorder %s185, %s187
    %p194 = scmp.eq.s32.totalorder %s30, 1
    %p195 = por %p193, %p194
    %p196 = scmp.ne.s32.totalorder %s187, %s188
    %p197 = scmp.eq.s32.totalorder %s30, 0
    %p198 = por %p196, %p197
    %p199 = scmp.ne.s32.totalorder %s187, %s188
    %p200 = scmp.eq.s32.totalorder %s31, 1
    %p201 = por %p199, %p200
    %p203 = scmp.ne.s32.totalorder %s188, %s202
    %p204 = scmp.eq.s32.totalorder %s31, 0
    %p205 = por %p203, %p204
    %s207 = sadd.s32 %s206, 1
    %p210 = scmp.eq.s32.totalorder %s25, 1
    %p211 = scmp.ne.s32.totalorder %s206, %s208
    %p212 = scmp.eq.s32.totalorder %s25, 0
    %p213 = por %p211, %p212
    %p214 = scmp.ne.s32.totalorder %s206, %s208
    %p215 = scmp.eq.s32.totalorder %s30, 1
    %p216 = por %p214, %p215
    %p217 = scmp.ne.s32.totalorder %s208, %s209
    %p218 = scmp.eq.s32.totalorder %s30, 0
    %p219 = por %p217, %p218
    %p220 = scmp.ne.s32.totalorder %s208, %s209
    %p221 = scmp.eq.s32.totalorder %s31, 1
    %p222 = por %p220, %p221
    %p224 = scmp.ne.s32.totalorder %s209, %s223
    %p225 = scmp.eq.s32.totalorder %s31, 0
    %p226 = por %p224, %p225
    %s228 = sadd.s32 %s227, 1
    %p231 = scmp.eq.s32.totalorder %s25, 1
    %p232 = scmp.ne.s32.totalorder %s227, %s229
    %p233 = scmp.eq.s32.totalorder %s25, 0
    %p234 = por %p232, %p233
    %p235 = scmp.ne.s32.totalorder %s227, %s229
    %p236 = scmp.eq.s32.totalorder %s30, 1
    %p237 = por %p235, %p236
    %p238 = scmp.ne.s32.totalorder %s229, %s230
    %p239 = scmp.eq.s32.totalorder %s30, 0
    %p240 = por %p238, %p239
    %p241 = scmp.ne.s32.totalorder %s229, %s230
    %p242 = scmp.eq.s32.totalorder %s31, 1
    %p243 = por %p241, %p242
    %p245 = scmp.ne.s32.totalorder %s230, %s244
    %p246 = scmp.eq.s32.totalorder %s31, 0
    %p247 = por %p245, %p246
    %s249 = sadd.s32 %s248, 1
    %p252 = scmp.eq.s32.totalorder %s25, 1
    %p253 = scmp.ne.s32.totalorder %s248, %s250
    %p254 = scmp.eq.s32.totalorder %s25, 0
    %p255 = por %p253, %p254
    %p256 = scmp.ne.s32.totalorder %s248, %s250
    %p257 = scmp.eq.s32.totalorder %s30, 1
    %p258 = por %p256, %p257
    %p259 = scmp.ne.s32.totalorder %s250, %s251
    %p260 = scmp.eq.s32.totalorder %s30, 0
    %p261 = por %p259, %p260
    %p262 = scmp.ne.s32.totalorder %s250, %s251
    %p263 = scmp.eq.s32.totalorder %s31, 1
    %p264 = por %p262, %p263
    %p266 = scmp.ne.s32.totalorder %s251, %s265
    %p267 = scmp.eq.s32.totalorder %s31, 0
    %p268 = por %p266, %p267
    %s270 = sadd.s32 %s269, 1
    %p273 = scmp.eq.s32.totalorder %s25, 1
    %p274 = scmp.ne.s32.totalorder %s269, %s271
    %p275 = scmp.eq.s32.totalorder %s25, 0
    %p276 = por %p274, %p275
    %p277 = scmp.ne.s32.totalorder %s269, %s271
    %p278 = scmp.eq.s32.totalorder %s30, 1
    %p279 = por %p277, %p278
    %p280 = scmp.ne.s32.totalorder %s271, %s272
    %p281 = scmp.eq.s32.totalorder %s30, 0
    %p282 = por %p280, %p281
    %p283 = scmp.ne.s32.totalorder %s271, %s272
    %p284 = scmp.eq.s32.totalorder %s31, 1
    %p285 = por %p283, %p284
    %p287 = scmp.ne.s32.totalorder %s272, %s286
    %p288 = scmp.eq.s32.totalorder %s31, 0
    %p289 = por %p287, %p288
    %s291 = sadd.s32 %s290, 1
    %p294 = scmp.eq.s32.totalorder %s25, 1
    %p295 = scmp.ne.s32.totalorder %s290, %s292
    %p296 = scmp.eq.s32.totalorder %s25, 0
    %p297 = por %p295, %p296
    %p298 = scmp.ne.s32.totalorder %s290, %s292
    %p299 = scmp.eq.s32.totalorder %s30, 1
    %p300 = por %p298, %p299
    %p301 = scmp.ne.s32.totalorder %s292, %s293
    %p302 = scmp.eq.s32.totalorder %s30, 0
    %p303 = por %p301, %p302
    %p304 = scmp.ne.s32.totalorder %s292, %s293
    %p305 = scmp.eq.s32.totalorder %s31, 1
    %p306 = por %p304, %p305
    %p308 = scmp.ne.s32.totalorder %s293, %s307
    %p309 = scmp.eq.s32.totalorder %s31, 0
    %p310 = por %p308, %p309
    %s312 = sadd.s32 %s311, 1
    %p315 = scmp.eq.s32.totalorder %s25, 1
    %p316 = scmp.ne.s32.totalorder %s311, %s313
    %p317 = scmp.eq.s32.totalorder %s25, 0
    %p318 = por %p316, %p317
    %p319 = scmp.ne.s32.totalorder %s311, %s313
    %p320 = scmp.eq.s32.totalorder %s30, 1
    %p321 = por %p319, %p320
    %p322 = scmp.ne.s32.totalorder %s313, %s314
    %p323 = scmp.eq.s32.totalorder %s30, 0
    %p324 = por %p322, %p323
    %p325 = scmp.ne.s32.totalorder %s313, %s314
    %p326 = scmp.eq.s32.totalorder %s31, 1
    %p327 = por %p325, %p326
    %p329 = scmp.ne.s32.totalorder %s314, %s328
    %p330 = scmp.eq.s32.totalorder %s31, 0
    %p331 = por %p329, %p330
    %s333 = sadd.s32 %s332, 1
    %p336 = scmp.eq.s32.totalorder %s25, 1
    %p337 = scmp.ne.s32.totalorder %s332, %s334
    %p338 = scmp.eq.s32.totalorder %s25, 0
    %p339 = por %p337, %p338
    %p340 = scmp.ne.s32.totalorder %s332, %s334
    %p341 = scmp.eq.s32.totalorder %s30, 1
    %p342 = por %p340, %p341
    %p343 = scmp.ne.s32.totalorder %s334, %s335
    %p344 = scmp.eq.s32.totalorder %s30, 0
    %p345 = por %p343, %p344
    %p346 = scmp.ne.s32.totalorder %s334, %s335
    %p347 = scmp.eq.s32.totalorder %s31, 1
    %p348 = por %p346, %p347
    %p350 = scmp.ne.s32.totalorder %s335, %s349
    %p351 = scmp.eq.s32.totalorder %s31, 0
    %p352 = por %p350, %p351
    %s354 = sadd.s32 %s353, 1
    %p357 = scmp.eq.s32.totalorder %s25, 1
    %p358 = scmp.ne.s32.totalorder %s353, %s355
    %p359 = scmp.eq.s32.totalorder %s25, 0
    %p360 = por %p358, %p359
    %p361 = scmp.ne.s32.totalorder %s353, %s355
    %p362 = scmp.eq.s32.totalorder %s30, 1
    %p363 = por %p361, %p362
    %p364 = scmp.ne.s32.totalorder %s355, %s356
    %p365 = scmp.eq.s32.totalorder %s30, 0
    %p366 = por %p364, %p365
    %p367 = scmp.ne.s32.totalorder %s355, %s356
    %p368 = scmp.eq.s32.totalorder %s31, 1
    %p369 = por %p367, %p368
    %p371 = scmp.ne.s32.totalorder %s356, %s370
    %p372 = scmp.eq.s32.totalorder %s31, 0
    %p373 = por %p371, %p372
    %s375 = sadd.s32 %s374, 1
    %p378 = scmp.eq.s32.totalorder %s25, 1
    %p379 = scmp.ne.s32.totalorder %s374, %s376
    %p380 = scmp.eq.s32.totalorder %s25, 0
    %p381 = por %p379, %p380
    %p382 = scmp.ne.s32.totalorder %s374, %s376
    %p383 = scmp.eq.s32.totalorder %s30, 1
    %p384 = por %p382, %p383
    %p385 = scmp.ne.s32.totalorder %s376, %s377
    %p386 = scmp.eq.s32.totalorder %s30, 0
    %p387 = por %p385, %p386
    %p388 = scmp.ne.s32.totalorder %s376, %s377
    %p389 = scmp.eq.s32.totalorder %s31, 1
    %p390 = por %p388, %p389
    %p392 = scmp.ne.s32.totalorder %s377, %s391
    %p393 = scmp.eq.s32.totalorder %s31, 0
    %p394 = por %p392, %p393
    %s396 = sadd.s32 %s395, 1
    %p399 = scmp.eq.s32.totalorder %s25, 1
    %p400 = scmp.ne.s32.totalorder %s395, %s397
    %p401 = scmp.eq.s32.totalorder %s25, 0
    %p402 = por %p400, %p401
    %p403 = scmp.ne.s32.totalorder %s395, %s397
    %p404 = scmp.eq.s32.totalorder %s30, 1
    %p405 = por %p403, %p404
    %p406 = scmp.ne.s32.totalorder %s397, %s398
    %p407 = scmp.eq.s32.totalorder %s30, 0
    %p408 = por %p406, %p407
    %p409 = scmp.ne.s32.totalorder %s397, %s398
    %p410 = scmp.eq.s32.totalorder %s31, 1
    %p411 = por %p409, %p410
    %p413 = scmp.ne.s32.totalorder %s398, %s412
    %p414 = scmp.eq.s32.totalorder %s31, 0
    %p415 = por %p413, %p414
    %s417 = sadd.s32 %s416, 1
    %p420 = scmp.eq.s32.totalorder %s25, 1
    %p421 = scmp.ne.s32.totalorder %s416, %s418
    %p422 = scmp.eq.s32.totalorder %s25, 0
    %p423 = por %p421, %p422
    %p424 = scmp.ne.s32.totalorder %s416, %s418
    %p425 = scmp.eq.s32.totalorder %s30, 1
    %p426 = por %p424, %p425
    %p427 = scmp.ne.s32.totalorder %s418, %s419
    %p428 = scmp.eq.s32.totalorder %s30, 0
    %p429 = por %p427, %p428
    %p430 = scmp.ne.s32.totalorder %s418, %s419
    %p431 = scmp.eq.s32.totalorder %s31, 1
    %p432 = por %p430, %p431
    %p434 = scmp.ne.s32.totalorder %s419, %s433
    %p435 = scmp.eq.s32.totalorder %s31, 0
    %p436 = por %p434, %p435
    %s437 = ssub.s32 %s25, %s32
    %p438 = scmp.eq.s32.totalorder %s437, 0
    %s440 = sadd.s32 %s439, 1
    %s441 = scalar_select %p438, %s439, %s440
    %p444 = pneg %p438
    %p445 = scmp.eq.s32.totalorder %s25, 1
    %p446 = por %p444, %p445
    %p447 = scmp.ne.s32.totalorder %s439, %s442
    %p448 = scmp.eq.s32.totalorder %s25, 0
    %p449 = por %p447, %p448
    %p450 = scmp.ne.s32.totalorder %s439, %s442
    %p451 = scmp.eq.s32.totalorder %s30, 1
    %p452 = por %p450, %p451
    %p453 = scmp.ne.s32.totalorder %s442, %s443
    %p454 = scmp.eq.s32.totalorder %s30, 0
    %p455 = por %p453, %p454
    %p456 = scmp.ne.s32.totalorder %s442, %s443
    %p457 = scmp.eq.s32.totalorder %s31, 1
    %p458 = por %p456, %p457
    %p460 = scmp.ne.s32.totalorder %s443, %s459
    %p461 = scmp.eq.s32.totalorder %s31, 0
    %p462 = por %p460, %p461
    %p463 = scmp.le.s32.totalorder 1, %s25
    %p464 = scmp.lt.s32.totalorder %s25, 3
    %p465 = pnand %p463, %p464
    %p466 = pneg %p465
    // Predicated region
    $region9: #{block_forward.1} parent=5 // pred_check
      _
    $region10: #{block_forward.1} parent=5 // pred_check_branch
      %468 = sbr.rel (%p465) target = $region12
    $region11: #{block_forward.1} parent=5 // pred_region
      %s469 = ssub.s32 %s25, 1
      // Predicated region
      $region13: #{block_forward.1} parent=11 // pred_check
        %p470 = pneg %p72
      $region14: #{block_forward.1} parent=11 // pred_check_branch
        %472 = sbr.rel (%p470) target = $region16
      $region15: #{block_forward.1} parent=11 // pred_region
        _
      $region16: #{block_forward.1} parent=11 // pred_fallthru
        _
      // Predicated region
      $region17: #{block_forward.1} parent=11 // pred_check
        %p473 = pneg %p93
      $region18: #{block_forward.1} parent=11 // pred_check_branch
        %475 = sbr.rel (%p473) target = $region20
      $region19: #{block_forward.1} parent=11 // pred_region
        _
      $region20: #{block_forward.1} parent=11 // pred_fallthru
        _
      // Predicated region
      $region21: #{block_forward.1} parent=11 // pred_check
        %p476 = pneg %p114
      $region22: #{block_forward.1} parent=11 // pred_check_branch
        %478 = sbr.rel (%p476) target = $region24
      $region23: #{block_forward.1} parent=11 // pred_region
        _
      $region24: #{block_forward.1} parent=11 // pred_fallthru
        _
      // Predicated region
      $region25: #{block_forward.1} parent=11 // pred_check
        %p479 = pneg %p135
      $region26: #{block_forward.1} parent=11 // pred_check_branch
        %481 = sbr.rel (%p479) target = $region28
      $region27: #{block_forward.1} parent=11 // pred_region
        _
      $region28: #{block_forward.1} parent=11 // pred_fallthru
        _
      // Predicated region
      $region29: #{block_forward.1} parent=11 // pred_check
        %p482 = pneg %p156
      $region30: #{block_forward.1} parent=11 // pred_check_branch
        %484 = sbr.rel (%p482) target = $region32
      $region31: #{block_forward.1} parent=11 // pred_region
        _
      $region32: #{block_forward.1} parent=11 // pred_fallthru
        _
      // Predicated region
      $region33: #{block_forward.1} parent=11 // pred_check
        %p485 = pneg %p177
      $region34: #{block_forward.1} parent=11 // pred_check_branch
        %487 = sbr.rel (%p485) target = $region36
      $region35: #{block_forward.1} parent=11 // pred_region
        _
      $region36: #{block_forward.1} parent=11 // pred_fallthru
        _
      // Predicated region
      $region37: #{block_forward.1} parent=11 // pred_check
        %p488 = pneg %p198
      $region38: #{block_forward.1} parent=11 // pred_check_branch
        %490 = sbr.rel (%p488) target = $region40
      $region39: #{block_forward.1} parent=11 // pred_region
        _
      $region40: #{block_forward.1} parent=11 // pred_fallthru
        _
      // Predicated region
      $region41: #{block_forward.1} parent=11 // pred_check
        %p491 = pneg %p219
      $region42: #{block_forward.1} parent=11 // pred_check_branch
        %493 = sbr.rel (%p491) target = $region44
      $region43: #{block_forward.1} parent=11 // pred_region
        _
      $region44: #{block_forward.1} parent=11 // pred_fallthru
        _
      // Predicated region
      $region45: #{block_forward.1} parent=11 // pred_check
        %p494 = pneg %p240
      $region46: #{block_forward.1} parent=11 // pred_check_branch
        %496 = sbr.rel (%p494) target = $region48
      $region47: #{block_forward.1} parent=11 // pred_region
        _
      $region48: #{block_forward.1} parent=11 // pred_fallthru
        _
      // Predicated region
      $region49: #{block_forward.1} parent=11 // pred_check
        %p497 = pneg %p261
      $region50: #{block_forward.1} parent=11 // pred_check_branch
        %499 = sbr.rel (%p497) target = $region52
      $region51: #{block_forward.1} parent=11 // pred_region
        _
      $region52: #{block_forward.1} parent=11 // pred_fallthru
        _
      // Predicated region
      $region53: #{block_forward.1} parent=11 // pred_check
        %p500 = pneg %p282
      $region54: #{block_forward.1} parent=11 // pred_check_branch
        %502 = sbr.rel (%p500) target = $region56
      $region55: #{block_forward.1} parent=11 // pred_region
        _
      $region56: #{block_forward.1} parent=11 // pred_fallthru
        _
      // Predicated region
      $region57: #{block_forward.1} parent=11 // pred_check
        %p503 = pneg %p303
      $region58: #{block_forward.1} parent=11 // pred_check_branch
        %505 = sbr.rel (%p503) target = $region60
      $region59: #{block_forward.1} parent=11 // pred_region
        _
      $region60: #{block_forward.1} parent=11 // pred_fallthru
        _
      // Predicated region
      $region61: #{block_forward.1} parent=11 // pred_check
        %p506 = pneg %p324
      $region62: #{block_forward.1} parent=11 // pred_check_branch
        %508 = sbr.rel (%p506) target = $region64
      $region63: #{block_forward.1} parent=11 // pred_region
        _
      $region64: #{block_forward.1} parent=11 // pred_fallthru
        _
      // Predicated region
      $region65: #{block_forward.1} parent=11 // pred_check
        %p509 = pneg %p345
      $region66: #{block_forward.1} parent=11 // pred_check_branch
        %511 = sbr.rel (%p509) target = $region68
      $region67: #{block_forward.1} parent=11 // pred_region
        _
      $region68: #{block_forward.1} parent=11 // pred_fallthru
        _
      // Predicated region
      $region69: #{block_forward.1} parent=11 // pred_check
        %p512 = pneg %p366
      $region70: #{block_forward.1} parent=11 // pred_check_branch
        %514 = sbr.rel (%p512) target = $region72
      $region71: #{block_forward.1} parent=11 // pred_region
        _
      $region72: #{block_forward.1} parent=11 // pred_fallthru
        _
      // Predicated region
      $region73: #{block_forward.1} parent=11 // pred_check
        %p515 = pneg %p387
      $region74: #{block_forward.1} parent=11 // pred_check_branch
        %517 = sbr.rel (%p515) target = $region76
      $region75: #{block_forward.1} parent=11 // pred_region
        _
      $region76: #{block_forward.1} parent=11 // pred_fallthru
        _
      // Predicated region
      $region77: #{block_forward.1} parent=11 // pred_check
        %p518 = pneg %p408
      $region78: #{block_forward.1} parent=11 // pred_check_branch
        %520 = sbr.rel (%p518) target = $region80
      $region79: #{block_forward.1} parent=11 // pred_region
        _
      $region80: #{block_forward.1} parent=11 // pred_fallthru
        _
      // Predicated region
      $region81: #{block_forward.1} parent=11 // pred_check
        %p521 = pneg %p429
      $region82: #{block_forward.1} parent=11 // pred_check_branch
        %523 = sbr.rel (%p521) target = $region84
      $region83: #{block_forward.1} parent=11 // pred_region
        _
      $region84: #{block_forward.1} parent=11 // pred_fallthru
        _
    $region12: #{block_forward.1} parent=5 // pred_fallthru
      _
    %p524 = scmp.lt.s32.totalorder %s25, 2
    // Predicated region
    $region85: #{block_forward.1} parent=5 // pred_check
      %p525 = pneg %p524
    $region86: #{block_forward.1} parent=5 // pred_check_branch
      %527 = sbr.rel (%p525) target = $region88
    $region87: #{block_forward.1} parent=5 // pred_region
      // Predicated region
      $region89: #{block_forward.1} parent=87 // pred_check
        %p528 = pneg %p45
      $region90: #{block_forward.1} parent=87 // pred_check_branch
        %530 = sbr.rel (%p528) target = $region92
      $region91: #{block_forward.1} parent=87 // pred_region
        %p531 = scmp.lt.s32.totalorder %s25, 1
        %s532 = scalar_select %p531, %s25, 1
        %s533 = smul.addr %s532, 8
        %s534 = scalar_lea.vmem %s0, %s533
      $region92: #{block_forward.1} parent=87 // pred_fallthru
        _
    $region88: #{block_forward.1} parent=5 // pred_fallthru
      _
    %p535 = scmp.le.s32.totalorder 1, %s25
    %p536 = scmp.lt.s32.totalorder %s25, 3
    %p537 = pnand %p535, %p536
    %p538 = pneg %p537
    // Predicated region
    $region93: #{block_forward.1} parent=5 // pred_check
      _
    $region94: #{block_forward.1} parent=5 // pred_check_branch
      %540 = sbr.rel (%p537) target = $region96
    $region95: #{block_forward.1} parent=5 // pred_region
      %s541 = ssub.s32 %s25, 1
      %p542 = scmp.lt.s32.totalorder %s30, 1
      %s543 = scalar_select %p542, %s30, 1
      %s544 = smul.addr %s543, 8
      %s545 = scalar_lea.vmem %s0, %s544
      %p546 = pneg %p51
      %p547 = pneg %p48
      %p548 = pneg %p72
      %p549 = pneg %p69
      %p550 = pneg %p93
      %p551 = pneg %p90
      %p552 = pneg %p114
      %p553 = pneg %p111
      %p554 = pneg %p135
      %p555 = pneg %p132
      %p556 = pneg %p156
      %p557 = pneg %p153
      %p558 = pneg %p177
      %p559 = pneg %p174
      %p560 = pneg %p198
      %p561 = pneg %p195
      %p562 = pneg %p219
      %p563 = pneg %p216
      %p564 = pneg %p240
      %p565 = pneg %p237
      %p566 = pneg %p261
      %p567 = pneg %p258
      %p568 = pneg %p282
      %p569 = pneg %p279
      %p570 = pneg %p303
      %p571 = pneg %p300
      %p572 = pneg %p324
      %p573 = pneg %p321
      %p574 = pneg %p345
      %p575 = pneg %p342
      %p576 = pneg %p366
      %p577 = pneg %p363
      %p578 = pneg %p387
      %p579 = pneg %p384
      %p580 = pneg %p408
      %p581 = pneg %p405
      %p582 = pneg %p429
      %p583 = pneg %p426
      %p584 = pneg %p455
      %p585 = pneg %p452
      %p586 = scmp.lt.s32.totalorder %s30, 1
      %s587 = scalar_select %p586, %s30, 1
      %s588 = smul.addr %s587, 8
      %s589 = scalar_lea.vmem %s19, %s588
      %p590 = scmp.lt.s32.totalorder %s30, 1
      %s591 = scalar_select %p590, %s30, 1
      %s592 = smul.addr %s591, 8
      %s593 = scalar_lea.vmem %s0, %s592
      %p594 = scmp.lt.s32.totalorder %s30, 1
      %s595 = scalar_select %p594, %s30, 1
      %s596 = smul.addr %s595, 8
      %s597 = scalar_lea.vmem %s19, %s596
      %v598 = vlaneseq
      %v599 = vshrl.u32 %v598, 7
      %vm600 = vcmp.lt.s32.totalorder %v599, 0
      %v601 = vsub.s32 0, %v599
      %v602 = vsel %vm600, %v601, %v599
      %v603 = vshrl.u32 %v602, 3
      %v604 = vand.u32 %v602, 7
      %v605 = vsub.s32 0, %v604
      %v606 = vsel %vm600, %v605, %v604
      %vm607 = vcmp.ne.s32.totalorder %v606, 0
      %vm608 = vcmp.lt.s32.totalorder %v606, 0
      %vm609 = vmand %vm608, %vm607
      %v610 = vadd.s32 %v606, 8
      %v611 = vsel %vm609, %v610, %v606
      %vm612 = vcmp.ne.s32.totalorder %v611, 0
      %vm613 = vcmp.ne.s32.totalorder %v611, 7
      %v614 = vld [vmem:[%s593] sm:$0xff]
      %v615 = vrot.slane %v614, 7
      %v616 = vsel %vm612, %v615, 0.0
      %v617 = vrot.slane %v614, 1
      %v618 = vsel %vm613, %v617, 0.0
      %v619 = vld [vmem:[%s1] sm:$0xff]
      %v620 = vld [vmem:[%s1 + $0x8] sm:$0xff]
      %v621 = vld [vmem:[%s1 + $0x10] sm:$0xff]
      %v622 = vld [vmem:[%s1 + $0x18] sm:$0xff]
      %v623 = vld [vmem:[%s1 + $0x20] sm:$0xff]
      %v624 = vld [vmem:[%s1 + $0x28] sm:$0xff]
      %v625 = vld [vmem:[%s1 + $0x30] sm:$0xff]
      %v626 = vld [vmem:[%s1 + $0x38] sm:$0xff]
      %v627 = vld [vmem:[%s1 + $0x40] sm:$0xff]
      %v628 = vld [vmem:[%s1 + $0x48] sm:$0xff]
      %v629 = vld [vmem:[%s1 + $0x50] sm:$0xff]
      %v630 = vld [vmem:[%s1 + $0x58] sm:$0xff]
      %v631 = vld [vmem:[%s1 + $0x60] sm:$0xff]
      %v632 = vld [vmem:[%s1 + $0x68] sm:$0xff]
      %v633 = vld [vmem:[%s1 + $0x70] sm:$0xff]
      %v634 = vld [vmem:[%s1 + $0x78] sm:$0xff]
      %s635 = scalar_lea.vmem %s1, 128
      %v636 = vld [vmem:[%s635] sm:$0xff]
      %v637 = vld [vmem:[%s635 + $0x8] sm:$0xff]
      %v638 = vld [vmem:[%s635 + $0x10] sm:$0xff]
      %v639 = vld [vmem:[%s635 + $0x18] sm:$0xff]
      %v640 = vld [vmem:[%s635 + $0x20] sm:$0xff]
      %v641 = vld [vmem:[%s635 + $0x28] sm:$0xff]
      %v642 = vld [vmem:[%s635 + $0x30] sm:$0xff]
      %v643 = vld [vmem:[%s635 + $0x38] sm:$0xff]
      %v644 = vld [vmem:[%s635 + $0x40] sm:$0xff]
      %v645 = vld [vmem:[%s635 + $0x48] sm:$0xff]
      %v646 = vld [vmem:[%s635 + $0x50] sm:$0xff]
      %v647 = vld [vmem:[%s635 + $0x58] sm:$0xff]
      %v648 = vld [vmem:[%s635 + $0x60] sm:$0xff]
      %v649 = vld [vmem:[%s635 + $0x68] sm:$0xff]
      %v650 = vld [vmem:[%s635 + $0x70] sm:$0xff]
      %v651 = vld [vmem:[%s635 + $0x78] sm:$0xff]
      %652 = vmatprep.subr.mxu0 0.0
      %653 = vmatpush1.msra.mxu0 %v636
      %654 = vmatprep.subr.mxu0 0.0
      %655 = vmatpush1.msra.mxu0 %v637
      %656 = vmatprep.subr.mxu0 0.0
      %657 = vmatpush1.msra.mxu0 %v638
      %658 = vmatprep.subr.mxu0 0.0
      %659 = vmatpush1.msra.mxu0 %v639
      %660 = vmatprep.subr.mxu0 0.0
      %661 = vmatpush1.msra.mxu0 %v640
      %662 = vmatprep.subr.mxu0 0.0
      %663 = vmatpush1.msra.mxu0 %v641
      %664 = vmatprep.subr.mxu0 0.0
      %665 = vmatpush1.msra.mxu0 %v642
      %666 = vmatprep.subr.mxu0 0.0
      %667 = vmatpush1.msra.mxu0 %v643
      %668 = vmatprep.subr.mxu0 0.0
      %669 = vmatpush1.msra.mxu0 %v644
      %670 = vmatprep.subr.mxu0 0.0
      %671 = vmatpush1.msra.mxu0 %v645
      %672 = vmatprep.subr.mxu0 0.0
      %673 = vmatpush1.msra.mxu0 %v646
      %674 = vmatprep.subr.mxu0 0.0
      %675 = vmatpush1.msra.mxu0 %v647
      %676 = vmatprep.subr.mxu0 0.0
      %677 = vmatpush1.msra.mxu0 %v648
      %678 = vmatprep.subr.mxu0 0.0
      %679 = vmatpush1.msra.mxu0 %v649
      %680 = vmatprep.subr.mxu0 0.0
      %681 = vmatpush1.msra.mxu0 %v650
      %682 = vmatprep.subr.mxu0 0.0
      %683 = vmatpush1.msra.mxu0 %v651
      %684 = vmatprep.subr.mxu0 0.0
      %685 = vmatpush1.msra.mxu0 0.0
      %686 = vmatprep.subr.mxu0 0.0
      %687 = vmatpush1.msra.mxu0 0.0
      %688 = vmatprep.subr.mxu0 0.0
      %689 = vmatpush1.msra.mxu0 0.0
      %690 = vmatprep.subr.mxu0 0.0
      %691 = vmatpush1.msra.mxu0 0.0
      %692 = vmatprep.subr.mxu0 0.0
      %693 = vmatpush1.msra.mxu0 0.0
      %694 = vmatprep.subr.mxu0 0.0
      %695 = vmatpush1.msra.mxu0 0.0
      %696 = vmatprep.subr.mxu0 0.0
      %697 = vmatpush1.msra.mxu0 0.0
      %698 = vmatprep.subr.mxu0 0.0
      %699 = vmatpush1.msra.mxu0 0.0
      %700 = vmatprep.subr.mxu0 0.0
      %701 = vmatpush1.msra.mxu0 0.0
      %702 = vmatprep.subr.mxu0 0.0
      %703 = vmatpush1.msra.mxu0 0.0
      %704 = vmatprep.subr.mxu0 0.0
      %705 = vmatpush1.msra.mxu0 0.0
      %706 = vmatprep.subr.mxu0 0.0
      %707 = vmatpush1.msra.mxu0 0.0
      %708 = vmatprep.subr.mxu0 0.0
      %709 = vmatpush1.msra.mxu0 0.0
      %710 = vmatprep.subr.mxu0 0.0
      %711 = vmatpush1.msra.mxu0 0.0
      %712 = vmatprep.subr.mxu0 0.0
      %713 = vmatpush1.msra.mxu0 0.0
      %714 = vmatprep.subr.mxu0 0.0
      %715 = vmatpush1.msra.mxu0 0.0
      %716 = vmatprep.mubr.f32.mxu0 0.0
      %717 = vmatmul.mubr.f32.gmra.mrb[0].mxu0 %v614
      %v718 = vpop.f32.mrb[0].mxu0
      %v719 = vadd.f32 0.0, %v718
      %v720 = vpop.f32.mrb[0].mxu0
      %721 = vdwg.mxu0
      %722 = vmatprep.subr.mxu0 0.0
      %723 = vmatpush1.msra.mxu0 %v619
      %724 = vmatprep.subr.mxu0 0.0
      %725 = vmatpush1.msra.mxu0 %v620
      %726 = vmatprep.subr.mxu0 0.0
      %727 = vmatpush1.msra.mxu0 %v621
      %728 = vmatprep.subr.mxu0 0.0
      %729 = vmatpush1.msra.mxu0 %v622
      %730 = vmatprep.subr.mxu0 0.0
      %731 = vmatpush1.msra.mxu0 %v623
      %732 = vmatprep.subr.mxu0 0.0
      %733 = vmatpush1.msra.mxu0 %v624
      %734 = vmatprep.subr.mxu0 0.0
      %735 = vmatpush1.msra.mxu0 %v625
      %736 = vmatprep.subr.mxu0 0.0
      %737 = vmatpush1.msra.mxu0 %v626
      %738 = vmatprep.subr.mxu0 0.0
      %739 = vmatpush1.msra.mxu0 %v627
      %740 = vmatprep.subr.mxu0 0.0
      %741 = vmatpush1.msra.mxu0 %v628
      %742 = vmatprep.subr.mxu0 0.0
      %743 = vmatpush1.msra.mxu0 %v629
      %744 = vmatprep.subr.mxu0 0.0
      %745 = vmatpush1.msra.mxu0 %v630
      %746 = vmatprep.subr.mxu0 0.0
      %747 = vmatpush1.msra.mxu0 %v631
      %748 = vmatprep.subr.mxu0 0.0
      %749 = vmatpush1.msra.mxu0 %v632
      %750 = vmatprep.subr.mxu0 0.0
      %751 = vmatpush1.msra.mxu0 %v633
      %752 = vmatprep.subr.mxu0 0.0
      %753 = vmatpush1.msra.mxu0 %v634
      %754 = vmatprep.subr.mxu0 0.0
      %755 = vmatpush1.msra.mxu0 0.0
      %756 = vmatprep.subr.mxu0 0.0
      %757 = vmatpush1.msra.mxu0 0.0
      %758 = vmatprep.subr.mxu0 0.0
      %759 = vmatpush1.msra.mxu0 0.0
      %760 = vmatprep.subr.mxu0 0.0
      %761 = vmatpush1.msra.mxu0 0.0
      %762 = vmatprep.subr.mxu0 0.0
      %763 = vmatpush1.msra.mxu0 0.0
      %764 = vmatprep.subr.mxu0 0.0
      %765 = vmatpush1.msra.mxu0 0.0
      %766 = vmatprep.subr.mxu0 0.0
      %767 = vmatpush1.msra.mxu0 0.0
      %768 = vmatprep.subr.mxu0 0.0
      %769 = vmatpush1.msra.mxu0 0.0
      %770 = vmatprep.subr.mxu0 0.0
      %771 = vmatpush1.msra.mxu0 0.0
      %772 = vmatprep.subr.mxu0 0.0
      %773 = vmatpush1.msra.mxu0 0.0
      %774 = vmatprep.subr.mxu0 0.0
      %775 = vmatpush1.msra.mxu0 0.0
      %776 = vmatprep.subr.mxu0 0.0
      %777 = vmatpush1.msra.mxu0 0.0
      %778 = vmatprep.subr.mxu0 0.0
      %779 = vmatpush1.msra.mxu0 0.0
      %780 = vmatprep.subr.mxu0 0.0
      %781 = vmatpush1.msra.mxu0 0.0
      %782 = vmatprep.subr.mxu0 0.0
      %783 = vmatpush1.msra.mxu0 0.0
      %784 = vmatprep.subr.mxu0 0.0
      %785 = vmatpush1.msra.mxu0 0.0
      %786 = vmatprep.mubr.f32.mxu0 0.0
      %787 = vmatmul.mubr.f32.gmra.mrb[0].mxu0 %v616
      %v788 = vpop.f32.mrb[0].mxu0
      %v789 = vadd.f32 %v719, %v788
      %v790 = vpop.f32.mrb[0].mxu0
      %791 = vdwg.mxu0
      %s792 = scalar_lea.vmem %s1, 256
      %v793 = vld [vmem:[%s792] sm:$0xff]
      %v794 = vld [vmem:[%s792 + $0x8] sm:$0xff]
      %v795 = vld [vmem:[%s792 + $0x10] sm:$0xff]
      %v796 = vld [vmem:[%s792 + $0x18] sm:$0xff]
      %v797 = vld [vmem:[%s792 + $0x20] sm:$0xff]
      %v798 = vld [vmem:[%s792 + $0x28] sm:$0xff]
      %v799 = vld [vmem:[%s792 + $0x30] sm:$0xff]
      %v800 = vld [vmem:[%s792 + $0x38] sm:$0xff]
      %v801 = vld [vmem:[%s792 + $0x40] sm:$0xff]
      %v802 = vld [vmem:[%s792 + $0x48] sm:$0xff]
      %v803 = vld [vmem:[%s792 + $0x50] sm:$0xff]
      %v804 = vld [vmem:[%s792 + $0x58] sm:$0xff]
      %v805 = vld [vmem:[%s792 + $0x60] sm:$0xff]
      %v806 = vld [vmem:[%s792 + $0x68] sm:$0xff]
      %v807 = vld [vmem:[%s792 + $0x70] sm:$0xff]
      %v808 = vld [vmem:[%s792 + $0x78] sm:$0xff]
      %809 = vmatprep.subr.mxu0 0.0
      %810 = vmatpush1.msra.mxu0 %v793
      %811 = vmatprep.subr.mxu0 0.0
      %812 = vmatpush1.msra.mxu0 %v794
      %813 = vmatprep.subr.mxu0 0.0
      %814 = vmatpush1.msra.mxu0 %v795
      %815 = vmatprep.subr.mxu0 0.0
      %816 = vmatpush1.msra.mxu0 %v796
      %817 = vmatprep.subr.mxu0 0.0
      %818 = vmatpush1.msra.mxu0 %v797
      %819 = vmatprep.subr.mxu0 0.0
      %820 = vmatpush1.msra.mxu0 %v798
      %821 = vmatprep.subr.mxu0 0.0
      %822 = vmatpush1.msra.mxu0 %v799
      %823 = vmatprep.subr.mxu0 0.0
      %824 = vmatpush1.msra.mxu0 %v800
      %825 = vmatprep.subr.mxu0 0.0
      %826 = vmatpush1.msra.mxu0 %v801
      %827 = vmatprep.subr.mxu0 0.0
      %828 = vmatpush1.msra.mxu0 %v802
      %829 = vmatprep.subr.mxu0 0.0
      %830 = vmatpush1.msra.mxu0 %v803
      %831 = vmatprep.subr.mxu0 0.0
      %832 = vmatpush1.msra.mxu0 %v804
      %833 = vmatprep.subr.mxu0 0.0
      %834 = vmatpush1.msra.mxu0 %v805
      %835 = vmatprep.subr.mxu0 0.0
      %836 = vmatpush1.msra.mxu0 %v806
      %837 = vmatprep.subr.mxu0 0.0
      %838 = vmatpush1.msra.mxu0 %v807
      %839 = vmatprep.subr.mxu0 0.0
      %840 = vmatpush1.msra.mxu0 %v808
      %841 = vmatprep.subr.mxu0 0.0
      %842 = vmatpush1.msra.mxu0 0.0
      %843 = vmatprep.subr.mxu0 0.0
      %844 = vmatpush1.msra.mxu0 0.0
      %845 = vmatprep.subr.mxu0 0.0
      %846 = vmatpush1.msra.mxu0 0.0
      %847 = vmatprep.subr.mxu0 0.0
      %848 = vmatpush1.msra.mxu0 0.0
      %849 = vmatprep.subr.mxu0 0.0
      %850 = vmatpush1.msra.mxu0 0.0
      %851 = vmatprep.subr.mxu0 0.0
      %852 = vmatpush1.msra.mxu0 0.0
      %853 = vmatprep.subr.mxu0 0.0
      %854 = vmatpush1.msra.mxu0 0.0
      %855 = vmatprep.subr.mxu0 0.0
      %856 = vmatpush1.msra.mxu0 0.0
      %857 = vmatprep.subr.mxu0 0.0
      %858 = vmatpush1.msra.mxu0 0.0
      %859 = vmatprep.subr.mxu0 0.0
      %860 = vmatpush1.msra.mxu0 0.0
      %861 = vmatprep.subr.mxu0 0.0
      %862 = vmatpush1.msra.mxu0 0.0
      %863 = vmatprep.subr.mxu0 0.0
      %864 = vmatpush1.msra.mxu0 0.0
      %865 = vmatprep.subr.mxu0 0.0
      %866 = vmatpush1.msra.mxu0 0.0
      %867 = vmatprep.subr.mxu0 0.0
      %868 = vmatpush1.msra.mxu0 0.0
      %869 = vmatprep.subr.mxu0 0.0
      %870 = vmatpush1.msra.mxu0 0.0
      %871 = vmatprep.subr.mxu0 0.0
      %872 = vmatpush1.msra.mxu0 0.0
      %873 = vmatprep.mubr.f32.mxu0 0.0
      %874 = vmatmul.mubr.f32.gmra.mrb[0].mxu0 %v618
      %v875 = vpop.f32.mrb[0].mxu0
      %v876 = vadd.f32 0.0, %v875
      %v877 = vpop.f32.mrb[0].mxu0
      %878 = vdwg.mxu0
      %v879 = vadd.f32 %v789, %v876
      %v880 = vld [vmem:[%s2] sm:$0x1]
      %v882 = vlaneseq
      %v883 = vshrl.u32 %v882, 7
      %v884 = vsub.s32 0, %v883
      %v885 = vrot.slane %v880, %v884
      %v887 = vadd.f32 %v879, %v885
      %v888 = vmax.f32 %v887, 0.0
      %v889 = vrot.slane %v888, 7
      %v890 = vsel %vm612, %v889, 0.0
      %v891 = vrot.slane %v888, 1
      %v892 = vsel %vm613, %v891, 0.0
      %v893 = vld [vmem:[%s3] sm:$0xff]
      %v894 = vld [vmem:[%s3 + $0x8] sm:$0xff]
      %v895 = vld [vmem:[%s3 + $0x10] sm:$0xff]
      %v896 = vld [vmem:[%s3 + $0x18] sm:$0xff]
      %v897 = vld [vmem:[%s3 + $0x20] sm:$0xff]
      %v898 = vld [vmem:[%s3 + $0x28] sm:$0xff]
      %v899 = vld [vmem:[%s3 + $0x30] sm:$0xff]
      %v900 = vld [vmem:[%s3 + $0x38] sm:$0xff]
      %v901 = vld [vmem:[%s3 + $0x40] sm:$0xff]
      %v902 = vld [vmem:[%s3 + $0x48] sm:$0xff]
      %v903 = vld [vmem:[%s3 + $0x50] sm:$0xff]
      %v904 = vld [vmem:[%s3 + $0x58] sm:$0xff]
      %v905 = vld [vmem:[%s3 + $0x60] sm:$0xff]
      %v906 = vld [vmem:[%s3 + $0x68] sm:$0xff]
      %v907 = vld [vmem:[%s3 + $0x70] sm:$0xff]
      %v908 = vld [vmem:[%s3 + $0x78] sm:$0xff]
      %s909 = scalar_lea.vmem %s3, 128
      %v910 = vld [vmem:[%s909] sm:$0xff]
      %v911 = vld [vmem:[%s909 + $0x8] sm:$0xff]
      %v912 = vld [vmem:[%s909 + $0x10] sm:$0xff]
      %v913 = vld [vmem:[%s909 + $0x18] sm:$0xff]
      %v914 = vld [vmem:[%s909 + $0x20] sm:$0xff]
      %v915 = vld [vmem:[%s909 + $0x28] sm:$0xff]
      %v916 = vld [vmem:[%s909 + $0x30] sm:$0xff]
      %v917 = vld [vmem:[%s909 + $0x38] sm:$0xff]
      %v918 = vld [vmem:[%s909 + $0x40] sm:$0xff]
      %v919 = vld [vmem:[%s909 + $0x48] sm:$0xff]
      %v920 = vld [vmem:[%s909 + $0x50] sm:$0xff]
      %v921 = vld [vmem:[%s909 + $0x58] sm:$0xff]
      %v922 = vld [vmem:[%s909 + $0x60] sm:$0xff]
      %v923 = vld [vmem:[%s909 + $0x68] sm:$0xff]
      %v924 = vld [vmem:[%s909 + $0x70] sm:$0xff]
      %v925 = vld [vmem:[%s909 + $0x78] sm:$0xff]
      %926 = vmatprep.subr.mxu0 0.0
      %927 = vmatpush1.msra.mxu0 %v910
      %928 = vmatprep.subr.mxu0 0.0
      %929 = vmatpush1.msra.mxu0 %v911
      %930 = vmatprep.subr.mxu0 0.0
      %931 = vmatpush1.msra.mxu0 %v912
      %932 = vmatprep.subr.mxu0 0.0
      %933 = vmatpush1.msra.mxu0 %v913
      %934 = vmatprep.subr.mxu0 0.0
      %935 = vmatpush1.msra.mxu0 %v914
      %936 = vmatprep.subr.mxu0 0.0
      %937 = vmatpush1.msra.mxu0 %v915
      %938 = vmatprep.subr.mxu0 0.0
      %939 = vmatpush1.msra.mxu0 %v916
      %940 = vmatprep.subr.mxu0 0.0
      %941 = vmatpush1.msra.mxu0 %v917
      %942 = vmatprep.subr.mxu0 0.0
      %943 = vmatpush1.msra.mxu0 %v918
      %944 = vmatprep.subr.mxu0 0.0
      %945 = vmatpush1.msra.mxu0 %v919
      %946 = vmatprep.subr.mxu0 0.0
      %947 = vmatpush1.msra.mxu0 %v920
      %948 = vmatprep.subr.mxu0 0.0
      %949 = vmatpush1.msra.mxu0 %v921
      %950 = vmatprep.subr.mxu0 0.0
      %951 = vmatpush1.msra.mxu0 %v922
      %952 = vmatprep.subr.mxu0 0.0
      %953 = vmatpush1.msra.mxu0 %v923
      %954 = vmatprep.subr.mxu0 0.0
      %955 = vmatpush1.msra.mxu0 %v924
      %956 = vmatprep.subr.mxu0 0.0
      %957 = vmatpush1.msra.mxu0 %v925
      %958 = vmatprep.subr.mxu0 0.0
      %959 = vmatpush1.msra.mxu0 0.0
      %960 = vmatprep.subr.mxu0 0.0
      %961 = vmatpush1.msra.mxu0 0.0
      %962 = vmatprep.subr.mxu0 0.0
      %963 = vmatpush1.msra.mxu0 0.0
      %964 = vmatprep.subr.mxu0 0.0
      %965 = vmatpush1.msra.mxu0 0.0
      %966 = vmatprep.subr.mxu0 0.0
      %967 = vmatpush1.msra.mxu0 0.0
      %968 = vmatprep.subr.mxu0 0.0
      %969 = vmatpush1.msra.mxu0 0.0
      %970 = vmatprep.subr.mxu0 0.0
      %971 = vmatpush1.msra.mxu0 0.0
      %972 = vmatprep.subr.mxu0 0.0
      %973 = vmatpush1.msra.mxu0 0.0
      %974 = vmatprep.subr.mxu0 0.0
      %975 = vmatpush1.msra.mxu0 0.0
      %976 = vmatprep.subr.mxu0 0.0
      %977 = vmatpush1.msra.mxu0 0.0
      %978 = vmatprep.subr.mxu0 0.0
      %979 = vmatpush1.msra.mxu0 0.0
      %980 = vmatprep.subr.mxu0 0.0
      %981 = vmatpush1.msra.mxu0 0.0
      %982 = vmatprep.subr.mxu0 0.0
      %983 = vmatpush1.msra.mxu0 0.0
      %984 = vmatprep.subr.mxu0 0.0
      %985 = vmatpush1.msra.mxu0 0.0
      %986 = vmatprep.subr.mxu0 0.0
      %987 = vmatpush1.msra.mxu0 0.0
      %988 = vmatprep.subr.mxu0 0.0
      %989 = vmatpush1.msra.mxu0 0.0
      %990 = vmatprep.mubr.f32.mxu0 0.0
      %991 = vmatmul.mubr.f32.gmra.mrb[0].mxu0 %v888
      %v992 = vpop.f32.mrb[0].mxu0
      %v993 = vadd.f32 0.0, %v992
      %v994 = vpop.f32.mrb[0].mxu0
      %995 = vdwg.mxu0
      %996 = vmatprep.subr.mxu0 0.0
      %997 = vmatpush1.msra.mxu0 %v893
      %998 = vmatprep.subr.mxu0 0.0
      %999 = vmatpush1.msra.mxu0 %v894
      %1000 = vmatprep.subr.mxu0 0.0
      %1001 = vmatpush1.msra.mxu0 %v895
      %1002 = vmatprep.subr.mxu0 0.0
      %1003 = vmatpush1.msra.mxu0 %v896
      %1004 = vmatprep.subr.mxu0 0.0
      %1005 = vmatpush1.msra.mxu0 %v897
      %1006 = vmatprep.subr.mxu0 0.0
      %1007 = vmatpush1.msra.mxu0 %v898
      %1008 = vmatprep.subr.mxu0 0.0
      %1009 = vmatpush1.msra.mxu0 %v899
      %1010 = vmatprep.subr.mxu0 0.0
      %1011 = vmatpush1.msra.mxu0 %v900
      %1012 = vmatprep.subr.mxu0 0.0
      %1013 = vmatpush1.msra.mxu0 %v901
      %1014 = vmatprep.subr.mxu0 0.0
      %1015 = vmatpush1.msra.mxu0 %v902
      %1016 = vmatprep.subr.mxu0 0.0
      %1017 = vmatpush1.msra.mxu0 %v903
      %1018 = vmatprep.subr.mxu0 0.0
      %1019 = vmatpush1.msra.mxu0 %v904
      %1020 = vmatprep.subr.mxu0 0.0
      %1021 = vmatpush1.msra.mxu0 %v905
      %1022 = vmatprep.subr.mxu0 0.0
      %1023 = vmatpush1.msra.mxu0 %v906
      %1024 = vmatprep.subr.mxu0 0.0
      %1025 = vmatpush1.msra.mxu0 %v907
      %1026 = vmatprep.subr.mxu0 0.0
      %1027 = vmatpush1.msra.mxu0 %v908
      %1028 = vmatprep.subr.mxu0 0.0
      %1029 = vmatpush1.msra.mxu0 0.0
      %1030 = vmatprep.subr.mxu0 0.0
      %1031 = vmatpush1.msra.mxu0 0.0
      %1032 = vmatprep.subr.mxu0 0.0
      %1033 = vmatpush1.msra.mxu0 0.0
      %1034 = vmatprep.subr.mxu0 0.0
      %1035 = vmatpush1.msra.mxu0 0.0
      %1036 = vmatprep.subr.mxu0 0.0
      %1037 = vmatpush1.msra.mxu0 0.0
      %1038 = vmatprep.subr.mxu0 0.0
      %1039 = vmatpush1.msra.mxu0 0.0
      %1040 = vmatprep.subr.mxu0 0.0
      %1041 = vmatpush1.msra.mxu0 0.0
      %1042 = vmatprep.subr.mxu0 0.0
      %1043 = vmatpush1.msra.mxu0 0.0
      %1044 = vmatprep.subr.mxu0 0.0
      %1045 = vmatpush1.msra.mxu0 0.0
      %1046 = vmatprep.subr.mxu0 0.0
      %1047 = vmatpush1.msra.mxu0 0.0
      %1048 = vmatprep.subr.mxu0 0.0
      %1049 = vmatpush1.msra.mxu0 0.0
      %1050 = vmatprep.subr.mxu0 0.0
      %1051 = vmatpush1.msra.mxu0 0.0
      %1052 = vmatprep.subr.mxu0 0.0
      %1053 = vmatpush1.msra.mxu0 0.0
      %1054 = vmatprep.subr.mxu0 0.0
      %1055 = vmatpush1.msra.mxu0 0.0
      %1056 = vmatprep.subr.mxu0 0.0
      %1057 = vmatpush1.msra.mxu0 0.0
      %1058 = vmatprep.subr.mxu0 0.0
      %1059 = vmatpush1.msra.mxu0 0.0
      %1060 = vmatprep.mubr.f32.mxu0 0.0
      %1061 = vmatmul.mubr.f32.gmra.mrb[0].mxu0 %v890
      %v1062 = vpop.f32.mrb[0].mxu0
      %v1063 = vadd.f32 %v993, %v1062
      %v1064 = vpop.f32.mrb[0].mxu0
      %1065 = vdwg.mxu0
      %s1066 = scalar_lea.vmem %s3, 256
      %v1067 = vld [vmem:[%s1066] sm:$0xff]
      %v1068 = vld [vmem:[%s1066 + $0x8] sm:$0xff]
      %v1069 = vld [vmem:[%s1066 + $0x10] sm:$0xff]
      %v1070 = vld [vmem:[%s1066 + $0x18] sm:$0xff]
      %v1071 = vld [vmem:[%s1066 + $0x20] sm:$0xff]
      %v1072 = vld [vmem:[%s1066 + $0x28] sm:$0xff]
      %v1073 = vld [vmem:[%s1066 + $0x30] sm:$0xff]
      %v1074 = vld [vmem:[%s1066 + $0x38] sm:$0xff]
      %v1075 = vld [vmem:[%s1066 + $0x40] sm:$0xff]
      %v1076 = vld [vmem:[%s1066 + $0x48] sm:$0xff]
      %v1077 = vld [vmem:[%s1066 + $0x50] sm:$0xff]
      %v1078 = vld [vmem:[%s1066 + $0x58] sm:$0xff]
      %v1079 = vld [vmem:[%s1066 + $0x60] sm:$0xff]
      %v1080 = vld [vmem:[%s1066 + $0x68] sm:$0xff]
      %v1081 = vld [vmem:[%s1066 + $0x70] sm:$0xff]
      %v1082 = vld [vmem:[%s1066 + $0x78] sm:$0xff]
      %1083 = vmatprep.subr.mxu0 0.0
      %1084 = vmatpush1.msra.mxu0 %v1067
      %1085 = vmatprep.subr.mxu0 0.0
      %1086 = vmatpush1.msra.mxu0 %v1068
      %1087 = vmatprep.subr.mxu0 0.0
      %1088 = vmatpush1.msra.mxu0 %v1069
      %1089 = vmatprep.subr.mxu0 0.0
      %1090 = vmatpush1.msra.mxu0 %v1070
      %1091 = vmatprep.subr.mxu0 0.0
      %1092 = vmatpush1.msra.mxu0 %v1071
      %1093 = vmatprep.subr.mxu0 0.0
      %1094 = vmatpush1.msra.mxu0 %v1072
      %1095 = vmatprep.subr.mxu0 0.0
      %1096 = vmatpush1.msra.mxu0 %v1073
      %1097 = vmatprep.subr.mxu0 0.0
      %1098 = vmatpush1.msra.mxu0 %v1074
      %1099 = vmatprep.subr.mxu0 0.0
      %1100 = vmatpush1.msra.mxu0 %v1075
      %1101 = vmatprep.subr.mxu0 0.0
      %1102 = vmatpush1.msra.mxu0 %v1076
      %1103 = vmatprep.subr.mxu0 0.0
      %1104 = vmatpush1.msra.mxu0 %v1077
      %1105 = vmatprep.subr.mxu0 0.0
      %1106 = vmatpush1.msra.mxu0 %v1078
      %1107 = vmatprep.subr.mxu0 0.0
      %1108 = vmatpush1.msra.mxu0 %v1079
      %1109 = vmatprep.subr.mxu0 0.0
      %1110 = vmatpush1.msra.mxu0 %v1080
      %1111 = vmatprep.subr.mxu0 0.0
      %1112 = vmatpush1.msra.mxu0 %v1081
      %1113 = vmatprep.subr.mxu0 0.0
      %1114 = vmatpush1.msra.mxu0 %v1082
      %1115 = vmatprep.subr.mxu0 0.0
      %1116 = vmatpush1.msra.mxu0 0.0
      %1117 = vmatprep.subr.mxu0 0.0
      %1118 = vmatpush1.msra.mxu0 0.0
      %1119 = vmatprep.subr.mxu0 0.0
      %1120 = vmatpush1.msra.mxu0 0.0
      %1121 = vmatprep.subr.mxu0 0.0
      %1122 = vmatpush1.msra.mxu0 0.0
      %1123 = vmatprep.subr.mxu0 0.0
      %1124 = vmatpush1.msra.mxu0 0.0
      %1125 = vmatprep.subr.mxu0 0.0
      %1126 = vmatpush1.msra.mxu0 0.0
      %1127 = vmatprep.subr.mxu0 0.0
      %1128 = vmatpush1.msra.mxu0 0.0
      %1129 = vmatprep.subr.mxu0 0.0
      %1130 = vmatpush1.msra.mxu0 0.0
      %1131 = vmatprep.subr.mxu0 0.0
      %1132 = vmatpush1.msra.mxu0 0.0
      %1133 = vmatprep.subr.mxu0 0.0
      %1134 = vmatpush1.msra.mxu0 0.0
      %1135 = vmatprep.subr.mxu0 0.0
      %1136 = vmatpush1.msra.mxu0 0.0
      %1137 = vmatprep.subr.mxu0 0.0
      %1138 = vmatpush1.msra.mxu0 0.0
      %1139 = vmatprep.subr.mxu0 0.0
      %1140 = vmatpush1.msra.mxu0 0.0
      %1141 = vmatprep.subr.mxu0 0.0
      %1142 = vmatpush1.msra.mxu0 0.0
      %1143 = vmatprep.subr.mxu0 0.0
      %1144 = vmatpush1.msra.mxu0 0.0
      %1145 = vmatprep.subr.mxu0 0.0
      %1146 = vmatpush1.msra.mxu0 0.0
      %1147 = vmatprep.mubr.f32.mxu0 0.0
      %1148 = vmatmul.mubr.f32.gmra.mrb[0].mxu0 %v892
      %v1149 = vpop.f32.mrb[0].mxu0
      %v1150 = vadd.f32 0.0, %v1149
      %v1151 = vpop.f32.mrb[0].mxu0
      %1152 = vdwg.mxu0
      %v1153 = vadd.f32 %v1063, %v1150
      %v1154 = vld [vmem:[%s4] sm:$0x1]
      %v1156 = vlaneseq
      %v1157 = vshrl.u32 %v1156, 7
      %v1158 = vsub.s32 0, %v1157
      %v1159 = vrot.slane %v1154, %v1158
      %v1161 = vadd.f32 %v1153, %v1159
      %v1162 = vadd.f32 %v1161, %v614
      %v1163 = vmax.f32 %v1162, 0.0
      %v1164 = vld [vmem:[%s13] sm:$0xff]
      %v1165 = vld [vmem:[%s13 + $0x8] sm:$0xff]
      %v1166 = vld [vmem:[%s13 + $0x10] sm:$0xff]
      %v1167 = vld [vmem:[%s13 + $0x18] sm:$0xff]
      %v1168 = vld [vmem:[%s13 + $0x20] sm:$0xff]
      %v1169 = vld [vmem:[%s13 + $0x28] sm:$0xff]
      %v1170 = vld [vmem:[%s13 + $0x30] sm:$0xff]
      %v1171 = vld [vmem:[%s13 + $0x38] sm:$0xff]
      %v1172 = vld [vmem:[%s13 + $0x40] sm:$0xff]
      %v1173 = vld [vmem:[%s13 + $0x48] sm:$0xff]
      %v1174 = vld [vmem:[%s13 + $0x50] sm:$0xff]
      %v1175 = vld [vmem:[%s13 + $0x58] sm:$0xff]
      %v1176 = vld [vmem:[%s13 + $0x60] sm:$0xff]
      %v1177 = vld [vmem:[%s13 + $0x68] sm:$0xff]
      %v1178 = vld [vmem:[%s13 + $0x70] sm:$0xff]
      %v1179 = vld [vmem:[%s13 + $0x78] sm:$0xff]
      %s1180 = scalar_lea.vmem %s13, 128
      %v1181 = vld [vmem:[%s1180] sm:$0xff]
      %v1182 = vld [vmem:[%s1180 + $0x8] sm:$0xff]
      %v1183 = vld [vmem:[%s1180 + $0x10] sm:$0xff]
      %v1184 = vld [vmem:[%s1180 + $0x18] sm:$0xff]
      %v1185 = vld [vmem:[%s1180 + $0x20] sm:$0xff]
      %v1186 = vld [vmem:[%s1180 + $0x28] sm:$0xff]
      %v1187 = vld [vmem:[%s1180 + $0x30] sm:$0xff]
      %v1188 = vld [vmem:[%s1180 + $0x38] sm:$0xff]
      %v1189 = vld [vmem:[%s1180 + $0x40] sm:$0xff]
      %v1190 = vld [vmem:[%s1180 + $0x48] sm:$0xff]
      %v1191 = vld [vmem:[%s1180 + $0x50] sm:$0xff]
      %v1192 = vld [vmem:[%s1180 + $0x58] sm:$0xff]
      %v1193 = vld [vmem:[%s1180 + $0x60] sm:$0xff]
      %v1194 = vld [vmem:[%s1180 + $0x68] sm:$0xff]
      %v1195 = vld [vmem:[%s1180 + $0x70] sm:$0xff]
      %v1196 = vld [vmem:[%s1180 + $0x78] sm:$0xff]
      %1197 = vmatprep.subr.mxu0 0.0
      %1198 = vmatpush1.msra.mxu0 %v1181
      %1199 = vmatprep.subr.mxu0 0.0
      %1200 = vmatpush1.msra.mxu0 %v1182
      %1201 = vmatprep.subr.mxu0 0.0
      %1202 = vmatpush1.msra.mxu0 %v1183
      %1203 = vmatprep.subr.mxu0 0.0
      %1204 = vmatpush1.msra.mxu0 %v1184
      %1205 = vmatprep.subr.mxu0 0.0
      %1206 = vmatpush1.msra.mxu0 %v1185
      %1207 = vmatprep.subr.mxu0 0.0
      %1208 = vmatpush1.msra.mxu0 %v1186
      %1209 = vmatprep.subr.mxu0 0.0
      %1210 = vmatpush1.msra.mxu0 %v1187
      %1211 = vmatprep.subr.mxu0 0.0
      %1212 = vmatpush1.msra.mxu0 %v1188
      %1213 = vmatprep.subr.mxu0 0.0
      %1214 = vmatpush1.msra.mxu0 %v1189
      %1215 = vmatprep.subr.mxu0 0.0
      %1216 = vmatpush1.msra.mxu0 %v1190
      %1217 = vmatprep.subr.mxu0 0.0
      %1218 = vmatpush1.msra.mxu0 %v1191
      %1219 = vmatprep.subr.mxu0 0.0
      %1220 = vmatpush1.msra.mxu0 %v1192
      %1221 = vmatprep.subr.mxu0 0.0
      %1222 = vmatpush1.msra.mxu0 %v1193
      %1223 = vmatprep.subr.mxu0 0.0
      %1224 = vmatpush1.msra.mxu0 %v1194
      %1225 = vmatprep.subr.mxu0 0.0
      %1226 = vmatpush1.msra.mxu0 %v1195
      %1227 = vmatprep.subr.mxu0 0.0
      %1228 = vmatpush1.msra.mxu0 %v1196
      %1229 = vmatprep.subr.mxu0 0.0
      %1230 = vmatpush1.msra.mxu0 0.0
      %1231 = vmatprep.subr.mxu0 0.0
      %1232 = vmatpush1.msra.mxu0 0.0
      %1233 = vmatprep.subr.mxu0 0.0
      %1234 = vmatpush1.msra.mxu0 0.0
      %1235 = vmatprep.subr.mxu0 0.0
      %1236 = vmatpush1.msra.mxu0 0.0
      %1237 = vmatprep.subr.mxu0 0.0
      %1238 = vmatpush1.msra.mxu0 0.0
      %1239 = vmatprep.subr.mxu0 0.0
      %1240 = vmatpush1.msra.mxu0 0.0
      %1241 = vmatprep.subr.mxu0 0.0
      %1242 = vmatpush1.msra.mxu0 0.0
      %1243 = vmatprep.subr.mxu0 0.0
      %1244 = vmatpush1.msra.mxu0 0.0
      %1245 = vmatprep.subr.mxu0 0.0
      %1246 = vmatpush1.msra.mxu0 0.0
      %1247 = vmatprep.subr.mxu0 0.0
      %1248 = vmatpush1.msra.mxu0 0.0
      %1249 = vmatprep.subr.mxu0 0.0
      %1250 = vmatpush1.msra.mxu0 0.0
      %1251 = vmatprep.subr.mxu0 0.0
      %1252 = vmatpush1.msra.mxu0 0.0
      %1253 = vmatprep.subr.mxu0 0.0
      %1254 = vmatpush1.msra.mxu0 0.0
      %1255 = vmatprep.subr.mxu0 0.0
      %1256 = vmatpush1.msra.mxu0 0.0
      %1257 = vmatprep.subr.mxu0 0.0
      %1258 = vmatpush1.msra.mxu0 0.0
      %1259 = vmatprep.subr.mxu0 0.0
      %1260 = vmatpush1.msra.mxu0 0.0
      %1261 = vmatprep.mubr.f32.mxu0 0.0
      %1262 = vmatmul.mubr.f32.gmra.mrb[0].mxu0 %v1163
      %v1263 = vpop.f32.mrb[0].mxu0
      %v1264 = vadd.f32 0.0, %v1263
      %v1265 = vpop.f32.mrb[0].mxu0
      %1266 = vdwg.mxu0
      %1267 = vmatprep.subr.mxu0 0.0
      %1268 = vmatpush1.msra.mxu0 %v1164
      %1269 = vmatprep.subr.mxu0 0.0
      %1270 = vmatpush1.msra.mxu0 %v1165
      %1271 = vmatprep.subr.mxu0 0.0
      %1272 = vmatpush1.msra.mxu0 %v1166
      %1273 = vmatprep.subr.mxu0 0.0
      %1274 = vmatpush1.msra.mxu0 %v1167
      %1275 = vmatprep.subr.mxu0 0.0
      %1276 = vmatpush1.msra.mxu0 %v1168
      %1277 = vmatprep.subr.mxu0 0.0
      %1278 = vmatpush1.msra.mxu0 %v1169
      %1279 = vmatprep.subr.mxu0 0.0
      %1280 = vmatpush1.msra.mxu0 %v1170
      %1281 = vmatprep.subr.mxu0 0.0
      %1282 = vmatpush1.msra.mxu0 %v1171
      %1283 = vmatprep.subr.mxu0 0.0
      %1284 = vmatpush1.msra.mxu0 %v1172
      %1285 = vmatprep.subr.mxu0 0.0
      %1286 = vmatpush1.msra.mxu0 %v1173
      %1287 = vmatprep.subr.mxu0 0.0
      %1288 = vmatpush1.msra.mxu0 %v1174
      %1289 = vmatprep.subr.mxu0 0.0
      %1290 = vmatpush1.msra.mxu0 %v1175
      %1291 = vmatprep.subr.mxu0 0.0
      %1292 = vmatpush1.msra.mxu0 %v1176
      %1293 = vmatprep.subr.mxu0 0.0
      %1294 = vmatpush1.msra.mxu0 %v1177
      %1295 = vmatprep.subr.mxu0 0.0
      %1296 = vmatpush1.msra.mxu0 %v1178
      %1297 = vmatprep.subr.mxu0 0.0
      %1298 = vmatpush1.msra.mxu0 %v1179
      %1299 = vmatprep.subr.mxu0 0.0
      %1300 = vmatpush1.msra.mxu0 0.0
      %1301 = vmatprep.subr.mxu0 0.0
      %1302 = vmatpush1.msra.mxu0 0.0
      %1303 = vmatprep.subr.mxu0 0.0
      %1304 = vmatpush1.msra.mxu0 0.0
      %1305 = vmatprep.subr.mxu0 0.0
      %1306 = vmatpush1.msra.mxu0 0.0
      %1307 = vmatprep.subr.mxu0 0.0
      %1308 = vmatpush1.msra.mxu0 0.0
      %1309 = vmatprep.subr.mxu0 0.0
      %1310 = vmatpush1.msra.mxu0 0.0
      %1311 = vmatprep.subr.mxu0 0.0
      %1312 = vmatpush1.msra.mxu0 0.0
      %1313 = vmatprep.subr.mxu0 0.0
      %1314 = vmatpush1.msra.mxu0 0.0
      %1315 = vmatprep.subr.mxu0 0.0
      %1316 = vmatpush1.msra.mxu0 0.0
      %1317 = vmatprep.subr.mxu0 0.0
      %1318 = vmatpush1.msra.mxu0 0.0
      %1319 = vmatprep.subr.mxu0 0.0
      %1320 = vmatpush1.msra.mxu0 0.0
      %1321 = vmatprep.subr.mxu0 0.0
      %1322 = vmatpush1.msra.mxu0 0.0
      %1323 = vmatprep.subr.mxu0 0.0
      %1324 = vmatpush1.msra.mxu0 0.0
      %1325 = vmatprep.subr.mxu0 0.0
      %1326 = vmatpush1.msra.mxu0 0.0
      %1327 = vmatprep.subr.mxu0 0.0
      %1328 = vmatpush1.msra.mxu0 0.0
      %1329 = vmatprep.subr.mxu0 0.0
      %1330 = vmatpush1.msra.mxu0 0.0
      %1331 = vmatprep.mubr.f32.mxu0 0.0
      %1332 = vmatmul.mubr.f32.gmra.mrb[0].mxu0 %v614
      %v1333 = vpop.f32.mrb[0].mxu0
      %v1334 = vadd.f32 %v1264, %v1333
      %v1335 = vpop.f32.mrb[0].mxu0
      %1336 = vdwg.mxu0
      %v1337 = vld [vmem:[%s14] sm:$0x1]
      %v1339 = vlaneseq
      %v1340 = vshrl.u32 %v1339, 7
      %v1341 = vsub.s32 0, %v1340
      %v1342 = vrot.slane %v1337, %v1341
      %v1344 = vadd.f32 %v1334, %v1342
      %v1345 = vrot.slane %v1344, 7
      %v1346 = vsel %vm612, %v1345, 0.0
      %v1347 = vrot.slane %v1344, 1
      %v1348 = vsel %vm613, %v1347, 0.0
      %v1349 = vld [vmem:[%s5] sm:$0xff]
      %v1350 = vld [vmem:[%s5 + $0x8] sm:$0xff]
      %v1351 = vld [vmem:[%s5 + $0x10] sm:$0xff]
      %v1352 = vld [vmem:[%s5 + $0x18] sm:$0xff]
      %v1353 = vld [vmem:[%s5 + $0x20] sm:$0xff]
      %v1354 = vld [vmem:[%s5 + $0x28] sm:$0xff]
      %v1355 = vld [vmem:[%s5 + $0x30] sm:$0xff]
      %v1356 = vld [vmem:[%s5 + $0x38] sm:$0xff]
      %v1357 = vld [vmem:[%s5 + $0x40] sm:$0xff]
      %v1358 = vld [vmem:[%s5 + $0x48] sm:$0xff]
      %v1359 = vld [vmem:[%s5 + $0x50] sm:$0xff]
      %v1360 = vld [vmem:[%s5 + $0x58] sm:$0xff]
      %v1361 = vld [vmem:[%s5 + $0x60] sm:$0xff]
      %v1362 = vld [vmem:[%s5 + $0x68] sm:$0xff]
      %v1363 = vld [vmem:[%s5 + $0x70] sm:$0xff]
      %v1364 = vld [vmem:[%s5 + $0x78] sm:$0xff]
      %s1365 = scalar_lea.vmem %s5, 128
      %v1366 = vld [vmem:[%s1365] sm:$0xff]
      %v1367 = vld [vmem:[%s1365 + $0x8] sm:$0xff]
      %v1368 = vld [vmem:[%s1365 + $0x10] sm:$0xff]
      %v1369 = vld [vmem:[%s1365 + $0x18] sm:$0xff]
      %v1370 = vld [vmem:[%s1365 + $0x20] sm:$0xff]
      %v1371 = vld [vmem:[%s1365 + $0x28] sm:$0xff]
      %v1372 = vld [vmem:[%s1365 + $0x30] sm:$0xff]
      %v1373 = vld [vmem:[%s1365 + $0x38] sm:$0xff]
      %v1374 = vld [vmem:[%s1365 + $0x40] sm:$0xff]
      %v1375 = vld [vmem:[%s1365 + $0x48] sm:$0xff]
      %v1376 = vld [vmem:[%s1365 + $0x50] sm:$0xff]
      %v1377 = vld [vmem:[%s1365 + $0x58] sm:$0xff]
      %v1378 = vld [vmem:[%s1365 + $0x60] sm:$0xff]
      %v1379 = vld [vmem:[%s1365 + $0x68] sm:$0xff]
      %v1380 = vld [vmem:[%s1365 + $0x70] sm:$0xff]
      %v1381 = vld [vmem:[%s1365 + $0x78] sm:$0xff]
      %1382 = vmatprep.subr.mxu0 0.0
      %1383 = vmatpush1.msra.mxu0 %v1366
      %1384 = vmatprep.subr.mxu0 0.0
      %1385 = vmatpush1.msra.mxu0 %v1367
      %1386 = vmatprep.subr.mxu0 0.0
      %1387 = vmatpush1.msra.mxu0 %v1368
      %1388 = vmatprep.subr.mxu0 0.0
      %1389 = vmatpush1.msra.mxu0 %v1369
      %1390 = vmatprep.subr.mxu0 0.0
      %1391 = vmatpush1.msra.mxu0 %v1370
      %1392 = vmatprep.subr.mxu0 0.0
      %1393 = vmatpush1.msra.mxu0 %v1371
      %1394 = vmatprep.subr.mxu0 0.0
      %1395 = vmatpush1.msra.mxu0 %v1372
      %1396 = vmatprep.subr.mxu0 0.0
      %1397 = vmatpush1.msra.mxu0 %v1373
      %1398 = vmatprep.subr.mxu0 0.0
      %1399 = vmatpush1.msra.mxu0 %v1374
      %1400 = vmatprep.subr.mxu0 0.0
      %1401 = vmatpush1.msra.mxu0 %v1375
      %1402 = vmatprep.subr.mxu0 0.0
      %1403 = vmatpush1.msra.mxu0 %v1376
      %1404 = vmatprep.subr.mxu0 0.0
      %1405 = vmatpush1.msra.mxu0 %v1377
      %1406 = vmatprep.subr.mxu0 0.0
      %1407 = vmatpush1.msra.mxu0 %v1378
      %1408 = vmatprep.subr.mxu0 0.0
      %1409 = vmatpush1.msra.mxu0 %v1379
      %1410 = vmatprep.subr.mxu0 0.0
      %1411 = vmatpush1.msra.mxu0 %v1380
      %1412 = vmatprep.subr.mxu0 0.0
      %1413 = vmatpush1.msra.mxu0 %v1381
      %1414 = vmatprep.subr.mxu0 0.0
      %1415 = vmatpush1.msra.mxu0 0.0
      %1416 = vmatprep.subr.mxu0 0.0
      %1417 = vmatpush1.msra.mxu0 0.0
      %1418 = vmatprep.subr.mxu0 0.0
      %1419 = vmatpush1.msra.mxu0 0.0
      %1420 = vmatprep.subr.mxu0 0.0
      %1421 = vmatpush1.msra.mxu0 0.0
      %1422 = vmatprep.subr.mxu0 0.0
      %1423 = vmatpush1.msra.mxu0 0.0
      %1424 = vmatprep.subr.mxu0 0.0
      %1425 = vmatpush1.msra.mxu0 0.0
      %1426 = vmatprep.subr.mxu0 0.0
      %1427 = vmatpush1.msra.mxu0 0.0
      %1428 = vmatprep.subr.mxu0 0.0
      %1429 = vmatpush1.msra.mxu0 0.0
      %1430 = vmatprep.subr.mxu0 0.0
      %1431 = vmatpush1.msra.mxu0 0.0
      %1432 = vmatprep.subr.mxu0 0.0
      %1433 = vmatpush1.msra.mxu0 0.0
      %1434 = vmatprep.subr.mxu0 0.0
      %1435 = vmatpush1.msra.mxu0 0.0
      %1436 = vmatprep.subr.mxu0 0.0
      %1437 = vmatpush1.msra.mxu0 0.0
      %1438 = vmatprep.subr.mxu0 0.0
      %1439 = vmatpush1.msra.mxu0 0.0
      %1440 = vmatprep.subr.mxu0 0.0
      %1441 = vmatpush1.msra.mxu0 0.0
      %1442 = vmatprep.subr.mxu0 0.0
      %1443 = vmatpush1.msra.mxu0 0.0
      %1444 = vmatprep.subr.mxu0 0.0
      %1445 = vmatpush1.msra.mxu0 0.0
      %1446 = vmatprep.mubr.f32.mxu0 0.0
      %1447 = vmatmul.mubr.f32.gmra.mrb[0].mxu0 %v1344
      %v1448 = vpop.f32.mrb[0].mxu0
      %v1449 = vadd.f32 0.0, %v1448
      %v1450 = vpop.f32.mrb[0].mxu0
      %1451 = vdwg.mxu0
      %1452 = vmatprep.subr.mxu0 0.0
      %1453 = vmatpush1.msra.mxu0 %v1349
      %1454 = vmatprep.subr.mxu0 0.0
      %1455 = vmatpush1.msra.mxu0 %v1350
      %1456 = vmatprep.subr.mxu0 0.0
      %1457 = vmatpush1.msra.mxu0 %v1351
      %1458 = vmatprep.subr.mxu0 0.0
      %1459 = vmatpush1.msra.mxu0 %v1352
      %1460 = vmatprep.subr.mxu0 0.0
      %1461 = vmatpush1.msra.mxu0 %v1353
      %1462 = vmatprep.subr.mxu0 0.0
      %1463 = vmatpush1.msra.mxu0 %v1354
      %1464 = vmatprep.subr.mxu0 0.0
      %1465 = vmatpush1.msra.mxu0 %v1355
      %1466 = vmatprep.subr.mxu0 0.0
      %1467 = vmatpush1.msra.mxu0 %v1356
      %1468 = vmatprep.subr.mxu0 0.0
      %1469 = vmatpush1.msra.mxu0 %v1357
      %1470 = vmatprep.subr.mxu0 0.0
      %1471 = vmatpush1.msra.mxu0 %v1358
      %1472 = vmatprep.subr.mxu0 0.0
      %1473 = vmatpush1.msra.mxu0 %v1359
      %1474 = vmatprep.subr.mxu0 0.0
      %1475 = vmatpush1.msra.mxu0 %v1360
      %1476 = vmatprep.subr.mxu0 0.0
      %1477 = vmatpush1.msra.mxu0 %v1361
      %1478 = vmatprep.subr.mxu0 0.0
      %1479 = vmatpush1.msra.mxu0 %v1362
      %1480 = vmatprep.subr.mxu0 0.0
      %1481 = vmatpush1.msra.mxu0 %v1363
      %1482 = vmatprep.subr.mxu0 0.0
      %1483 = vmatpush1.msra.mxu0 %v1364
      %1484 = vmatprep.subr.mxu0 0.0
      %1485 = vmatpush1.msra.mxu0 0.0
      %1486 = vmatprep.subr.mxu0 0.0
      %1487 = vmatpush1.msra.mxu0 0.0
      %1488 = vmatprep.subr.mxu0 0.0
      %1489 = vmatpush1.msra.mxu0 0.0
      %1490 = vmatprep.subr.mxu0 0.0
      %1491 = vmatpush1.msra.mxu0 0.0
      %1492 = vmatprep.subr.mxu0 0.0
      %1493 = vmatpush1.msra.mxu0 0.0
      %1494 = vmatprep.subr.mxu0 0.0
      %1495 = vmatpush1.msra.mxu0 0.0
      %1496 = vmatprep.subr.mxu0 0.0
      %1497 = vmatpush1.msra.mxu0 0.0
      %1498 = vmatprep.subr.mxu0 0.0
      %1499 = vmatpush1.msra.mxu0 0.0
      %1500 = vmatprep.subr.mxu0 0.0
      %1501 = vmatpush1.msra.mxu0 0.0
      %1502 = vmatprep.subr.mxu0 0.0
      %1503 = vmatpush1.msra.mxu0 0.0
      %1504 = vmatprep.subr.mxu0 0.0
      %1505 = vmatpush1.msra.mxu0 0.0
      %1506 = vmatprep.subr.mxu0 0.0
      %1507 = vmatpush1.msra.mxu0 0.0
      %1508 = vmatprep.subr.mxu0 0.0
      %1509 = vmatpush1.msra.mxu0 0.0
      %1510 = vmatprep.subr.mxu0 0.0
      %1511 = vmatpush1.msra.mxu0 0.0
      %1512 = vmatprep.subr.mxu0 0.0
      %1513 = vmatpush1.msra.mxu0 0.0
      %1514 = vmatprep.subr.mxu0 0.0
      %1515 = vmatpush1.msra.mxu0 0.0
      %1516 = vmatprep.mubr.f32.mxu0 0.0
      %1517 = vmatmul.mubr.f32.gmra.mrb[0].mxu0 %v1346
      %v1518 = vpop.f32.mrb[0].mxu0
      %v1519 = vadd.f32 %v1449, %v1518
      %v1520 = vpop.f32.mrb[0].mxu0
      %1521 = vdwg.mxu0
      %s1522 = scalar_lea.vmem %s5, 256
      %v1523 = vld [vmem:[%s1522] sm:$0xff]
      %v1524 = vld [vmem:[%s1522 + $0x8] sm:$0xff]
      %v1525 = vld [vmem:[%s1522 + $0x10] sm:$0xff]
      %v1526 = vld [vmem:[%s1522 + $0x18] sm:$0xff]
      %v1527 = vld [vmem:[%s1522 + $0x20] sm:$0xff]
      %v1528 = vld [vmem:[%s1522 + $0x28] sm:$0xff]
      %v1529 = vld [vmem:[%s1522 + $0x30] sm:$0xff]
      %v1530 = vld [vmem:[%s1522 + $0x38] sm:$0xff]
      %v1531 = vld [vmem:[%s1522 + $0x40] sm:$0xff]
      %v1532 = vld [vmem:[%s1522 + $0x48] sm:$0xff]
      %v1533 = vld [vmem:[%s1522 + $0x50] sm:$0xff]
      %v1534 = vld [vmem:[%s1522 + $0x58] sm:$0xff]
      %v1535 = vld [vmem:[%s1522 + $0x60] sm:$0xff]
      %v1536 = vld [vmem:[%s1522 + $0x68] sm:$0xff]
      %v1537 = vld [vmem:[%s1522 + $0x70] sm:$0xff]
      %v1538 = vld [vmem:[%s1522 + $0x78] sm:$0xff]
      %1539 = vmatprep.subr.mxu0 0.0
      %1540 = vmatpush1.msra.mxu0 %v1523
      %1541 = vmatprep.subr.mxu0 0.0
      %1542 = vmatpush1.msra.mxu0 %v1524
      %1543 = vmatprep.subr.mxu0 0.0
      %1544 = vmatpush1.msra.mxu0 %v1525
      %1545 = vmatprep.subr.mxu0 0.0
      %1546 = vmatpush1.msra.mxu0 %v1526
      %1547 = vmatprep.subr.mxu0 0.0
      %1548 = vmatpush1.msra.mxu0 %v1527
      %1549 = vmatprep.subr.mxu0 0.0
      %1550 = vmatpush1.msra.mxu0 %v1528
      %1551 = vmatprep.subr.mxu0 0.0
      %1552 = vmatpush1.msra.mxu0 %v1529
      %1553 = vmatprep.subr.mxu0 0.0
      %1554 = vmatpush1.msra.mxu0 %v1530
      %1555 = vmatprep.subr.mxu0 0.0
      %1556 = vmatpush1.msra.mxu0 %v1531
      %1557 = vmatprep.subr.mxu0 0.0
      %1558 = vmatpush1.msra.mxu0 %v1532
      %1559 = vmatprep.subr.mxu0 0.0
      %1560 = vmatpush1.msra.mxu0 %v1533
      %1561 = vmatprep.subr.mxu0 0.0
      %1562 = vmatpush1.msra.mxu0 %v1534
      %1563 = vmatprep.subr.mxu0 0.0
      %1564 = vmatpush1.msra.mxu0 %v1535
      %1565 = vmatprep.subr.mxu0 0.0
      %1566 = vmatpush1.msra.mxu0 %v1536
      %1567 = vmatprep.subr.mxu0 0.0
      %1568 = vmatpush1.msra.mxu0 %v1537
      %1569 = vmatprep.subr.mxu0 0.0
      %1570 = vmatpush1.msra.mxu0 %v1538
      %1571 = vmatprep.subr.mxu0 0.0
      %1572 = vmatpush1.msra.mxu0 0.0
      %1573 = vmatprep.subr.mxu0 0.0
      %1574 = vmatpush1.msra.mxu0 0.0
      %1575 = vmatprep.subr.mxu0 0.0
      %1576 = vmatpush1.msra.mxu0 0.0
      %1577 = vmatprep.subr.mxu0 0.0
      %1578 = vmatpush1.msra.mxu0 0.0
      %1579 = vmatprep.subr.mxu0 0.0
      %1580 = vmatpush1.msra.mxu0 0.0
      %1581 = vmatprep.subr.mxu0 0.0
      %1582 = vmatpush1.msra.mxu0 0.0
      %1583 = vmatprep.subr.mxu0 0.0
      %1584 = vmatpush1.msra.mxu0 0.0
      %1585 = vmatprep.subr.mxu0 0.0
      %1586 = vmatpush1.msra.mxu0 0.0
      %1587 = vmatprep.subr.mxu0 0.0
      %1588 = vmatpush1.msra.mxu0 0.0
      %1589 = vmatprep.subr.mxu0 0.0
      %1590 = vmatpush1.msra.mxu0 0.0
      %1591 = vmatprep.subr.mxu0 0.0
      %1592 = vmatpush1.msra.mxu0 0.0
      %1593 = vmatprep.subr.mxu0 0.0
      %1594 = vmatpush1.msra.mxu0 0.0
      %1595 = vmatprep.subr.mxu0 0.0
      %1596 = vmatpush1.msra.mxu0 0.0
      %1597 = vmatprep.subr.mxu0 0.0
      %1598 = vmatpush1.msra.mxu0 0.0
      %1599 = vmatprep.subr.mxu0 0.0
      %1600 = vmatpush1.msra.mxu0 0.0
      %1601 = vmatprep.subr.mxu0 0.0
      %1602 = vmatpush1.msra.mxu0 0.0
      %1603 = vmatprep.mubr.f32.mxu0 0.0
      %1604 = vmatmul.mubr.f32.gmra.mrb[0].mxu0 %v1348
      %v1605 = vpop.f32.mrb[0].mxu0
      %v1606 = vadd.f32 0.0, %v1605
      %v1607 = vpop.f32.mrb[0].mxu0
      %1608 = vdwg.mxu0
      %v1609 = vadd.f32 %v1519, %v1606
      %v1610 = vld [vmem:[%s6] sm:$0x1]
      %v1612 = vlaneseq
      %v1613 = vshrl.u32 %v1612, 7
      %v1614 = vsub.s32 0, %v1613
      %v1615 = vrot.slane %v1610, %v1614
      %v1617 = vadd.f32 %v1609, %v1615
      %v1618 = vmax.f32 %v1617, 0.0
      %v1619 = vrot.slane %v1618, 7
      %v1620 = vsel %vm612, %v1619, 0.0
      %v1621 = vrot.slane %v1618, 1
      %v1622 = vsel %vm613, %v1621, 0.0
      %v1623 = vld [vmem:[%s7] sm:$0xff]
      %v1624 = vld [vmem:[%s7 + $0x8] sm:$0xff]
      %v1625 = vld [vmem:[%s7 + $0x10] sm:$0xff]
      %v1626 = vld [vmem:[%s7 + $0x18] sm:$0xff]
      %v1627 = vld [vmem:[%s7 + $0x20] sm:$0xff]
      %v1628 = vld [vmem:[%s7 + $0x28] sm:$0xff]
      %v1629 = vld [vmem:[%s7 + $0x30] sm:$0xff]
      %v1630 = vld [vmem:[%s7 + $0x38] sm:$0xff]
      %v1631 = vld [vmem:[%s7 + $0x40] sm:$0xff]
      %v1632 = vld [vmem:[%s7 + $0x48] sm:$0xff]
      %v1633 = vld [vmem:[%s7 + $0x50] sm:$0xff]
      %v1634 = vld [vmem:[%s7 + $0x58] sm:$0xff]
      %v1635 = vld [vmem:[%s7 + $0x60] sm:$0xff]
      %v1636 = vld [vmem:[%s7 + $0x68] sm:$0xff]
      %v1637 = vld [vmem:[%s7 + $0x70] sm:$0xff]
      %v1638 = vld [vmem:[%s7 + $0x78] sm:$0xff]
      %s1639 = scalar_lea.vmem %s7, 128
      %v1640 = vld [vmem:[%s1639] sm:$0xff]
      %v1641 = vld [vmem:[%s1639 + $0x8] sm:$0xff]
      %v1642 = vld [vmem:[%s1639 + $0x10] sm:$0xff]
      %v1643 = vld [vmem:[%s1639 + $0x18] sm:$0xff]
      %v1644 = vld [vmem:[%s1639 + $0x20] sm:$0xff]
      %v1645 = vld [vmem:[%s1639 + $0x28] sm:$0xff]
      %v1646 = vld [vmem:[%s1639 + $0x30] sm:$0xff]
      %v1647 = vld [vmem:[%s1639 + $0x38] sm:$0xff]
      %v1648 = vld [vmem:[%s1639 + $0x40] sm:$0xff]
      %v1649 = vld [vmem:[%s1639 + $0x48] sm:$0xff]
      %v1650 = vld [vmem:[%s1639 + $0x50] sm:$0xff]
      %v1651 = vld [vmem:[%s1639 + $0x58] sm:$0xff]
      %v1652 = vld [vmem:[%s1639 + $0x60] sm:$0xff]
      %v1653 = vld [vmem:[%s1639 + $0x68] sm:$0xff]
      %v1654 = vld [vmem:[%s1639 + $0x70] sm:$0xff]
      %v1655 = vld [vmem:[%s1639 + $0x78] sm:$0xff]
      %1656 = vmatprep.subr.mxu0 0.0
      %1657 = vmatpush1.msra.mxu0 %v1640
      %1658 = vmatprep.subr.mxu0 0.0
      %1659 = vmatpush1.msra.mxu0 %v1641
      %1660 = vmatprep.subr.mxu0 0.0
      %1661 = vmatpush1.msra.mxu0 %v1642
      %1662 = vmatprep.subr.mxu0 0.0
      %1663 = vmatpush1.msra.mxu0 %v1643
      %1664 = vmatprep.subr.mxu0 0.0
      %1665 = vmatpush1.msra.mxu0 %v1644
      %1666 = vmatprep.subr.mxu0 0.0
      %1667 = vmatpush1.msra.mxu0 %v1645
      %1668 = vmatprep.subr.mxu0 0.0
      %1669 = vmatpush1.msra.mxu0 %v1646
      %1670 = vmatprep.subr.mxu0 0.0
      %1671 = vmatpush1.msra.mxu0 %v1647
      %1672 = vmatprep.subr.mxu0 0.0
      %1673 = vmatpush1.msra.mxu0 %v1648
      %1674 = vmatprep.subr.mxu0 0.0
      %1675 = vmatpush1.msra.mxu0 %v1649
      %1676 = vmatprep.subr.mxu0 0.0
      %1677 = vmatpush1.msra.mxu0 %v1650
      %1678 = vmatprep.subr.mxu0 0.0
      %1679 = vmatpush1.msra.mxu0 %v1651
      %1680 = vmatprep.subr.mxu0 0.0
      %1681 = vmatpush1.msra.mxu0 %v1652
      %1682 = vmatprep.subr.mxu0 0.0
      %1683 = vmatpush1.msra.mxu0 %v1653
      %1684 = vmatprep.subr.mxu0 0.0
      %1685 = vmatpush1.msra.mxu0 %v1654
      %1686 = vmatprep.subr.mxu0 0.0
      %1687 = vmatpush1.msra.mxu0 %v1655
      %1688 = vmatprep.subr.mxu0 0.0
      %1689 = vmatpush1.msra.mxu0 0.0
      %1690 = vmatprep.subr.mxu0 0.0
      %1691 = vmatpush1.msra.mxu0 0.0
      %1692 = vmatprep.subr.mxu0 0.0
      %1693 = vmatpush1.msra.mxu0 0.0
      %1694 = vmatprep.subr.mxu0 0.0
      %1695 = vmatpush1.msra.mxu0 0.0
      %1696 = vmatprep.subr.mxu0 0.0
      %1697 = vmatpush1.msra.mxu0 0.0
      %1698 = vmatprep.subr.mxu0 0.0
      %1699 = vmatpush1.msra.mxu0 0.0
      %1700 = vmatprep.subr.mxu0 0.0
      %1701 = vmatpush1.msra.mxu0 0.0
      %1702 = vmatprep.subr.mxu0 0.0
      %1703 = vmatpush1.msra.mxu0 0.0
      %1704 = vmatprep.subr.mxu0 0.0
      %1705 = vmatpush1.msra.mxu0 0.0
      %1706 = vmatprep.subr.mxu0 0.0
      %1707 = vmatpush1.msra.mxu0 0.0
      %1708 = vmatprep.subr.mxu0 0.0
      %1709 = vmatpush1.msra.mxu0 0.0
      %1710 = vmatprep.subr.mxu0 0.0
      %1711 = vmatpush1.msra.mxu0 0.0
      %1712 = vmatprep.subr.mxu0 0.0
      %1713 = vmatpush1.msra.mxu0 0.0
      %1714 = vmatprep.subr.mxu0 0.0
      %1715 = vmatpush1.msra.mxu0 0.0
      %1716 = vmatprep.subr.mxu0 0.0
      %1717 = vmatpush1.msra.mxu0 0.0
      %1718 = vmatprep.subr.mxu0 0.0
      %1719 = vmatpush1.msra.mxu0 0.0
      %1720 = vmatprep.mubr.f32.mxu0 0.0
      %1721 = vmatmul.mubr.f32.gmra.mrb[0].mxu0 %v1618
      %v1722 = vpop.f32.mrb[0].mxu0
      %v1723 = vadd.f32 0.0, %v1722
      %v1724 = vpop.f32.mrb[0].mxu0
      %1725 = vdwg.mxu0
      %1726 = vmatprep.subr.mxu0 0.0
      %1727 = vmatpush1.msra.mxu0 %v1623
      %1728 = vmatprep.subr.mxu0 0.0
      %1729 = vmatpush1.msra.mxu0 %v1624
      %1730 = vmatprep.subr.mxu0 0.0
      %1731 = vmatpush1.msra.mxu0 %v1625
      %1732 = vmatprep.subr.mxu0 0.0
      %1733 = vmatpush1.msra.mxu0 %v1626
      %1734 = vmatprep.subr.mxu0 0.0
      %1735 = vmatpush1.msra.mxu0 %v1627
      %1736 = vmatprep.subr.mxu0 0.0
      %1737 = vmatpush1.msra.mxu0 %v1628
      %1738 = vmatprep.subr.mxu0 0.0
      %1739 = vmatpush1.msra.mxu0 %v1629
      %1740 = vmatprep.subr.mxu0 0.0
      %1741 = vmatpush1.msra.mxu0 %v1630
      %1742 = vmatprep.subr.mxu0 0.0
      %1743 = vmatpush1.msra.mxu0 %v1631
      %1744 = vmatprep.subr.mxu0 0.0
      %1745 = vmatpush1.msra.mxu0 %v1632
      %1746 = vmatprep.subr.mxu0 0.0
      %1747 = vmatpush1.msra.mxu0 %v1633
      %1748 = vmatprep.subr.mxu0 0.0
      %1749 = vmatpush1.msra.mxu0 %v1634
      %1750 = vmatprep.subr.mxu0 0.0
      %1751 = vmatpush1.msra.mxu0 %v1635
      %1752 = vmatprep.subr.mxu0 0.0
      %1753 = vmatpush1.msra.mxu0 %v1636
      %1754 = vmatprep.subr.mxu0 0.0
      %1755 = vmatpush1.msra.mxu0 %v1637
      %1756 = vmatprep.subr.mxu0 0.0
      %1757 = vmatpush1.msra.mxu0 %v1638
      %1758 = vmatprep.subr.mxu0 0.0
      %1759 = vmatpush1.msra.mxu0 0.0
      %1760 = vmatprep.subr.mxu0 0.0
      %1761 = vmatpush1.msra.mxu0 0.0
      %1762 = vmatprep.subr.mxu0 0.0
      %1763 = vmatpush1.msra.mxu0 0.0
      %1764 = vmatprep.subr.mxu0 0.0
      %1765 = vmatpush1.msra.mxu0 0.0
      %1766 = vmatprep.subr.mxu0 0.0
      %1767 = vmatpush1.msra.mxu0 0.0
      %1768 = vmatprep.subr.mxu0 0.0
      %1769 = vmatpush1.msra.mxu0 0.0
      %1770 = vmatprep.subr.mxu0 0.0
      %1771 = vmatpush1.msra.mxu0 0.0
      %1772 = vmatprep.subr.mxu0 0.0
      %1773 = vmatpush1.msra.mxu0 0.0
      %1774 = vmatprep.subr.mxu0 0.0
      %1775 = vmatpush1.msra.mxu0 0.0
      %1776 = vmatprep.subr.mxu0 0.0
      %1777 = vmatpush1.msra.mxu0 0.0
      %1778 = vmatprep.subr.mxu0 0.0
      %1779 = vmatpush1.msra.mxu0 0.0
      %1780 = vmatprep.subr.mxu0 0.0
      %1781 = vmatpush1.msra.mxu0 0.0
      %1782 = vmatprep.subr.mxu0 0.0
      %1783 = vmatpush1.msra.mxu0 0.0
      %1784 = vmatprep.subr.mxu0 0.0
      %1785 = vmatpush1.msra.mxu0 0.0
      %1786 = vmatprep.subr.mxu0 0.0
      %1787 = vmatpush1.msra.mxu0 0.0
      %1788 = vmatprep.subr.mxu0 0.0
      %1789 = vmatpush1.msra.mxu0 0.0
      %1790 = vmatprep.mubr.f32.mxu0 0.0
      %1791 = vmatmul.mubr.f32.gmra.mrb[0].mxu0 %v1620
      %v1792 = vpop.f32.mrb[0].mxu0
      %v1793 = vadd.f32 %v1723, %v1792
      %v1794 = vpop.f32.mrb[0].mxu0
      %1795 = vdwg.mxu0
      %s1796 = scalar_lea.vmem %s7, 256
      %v1797 = vld [vmem:[%s1796] sm:$0xff]
      %v1798 = vld [vmem:[%s1796 + $0x8] sm:$0xff]
      %v1799 = vld [vmem:[%s1796 + $0x10] sm:$0xff]
      %v1800 = vld [vmem:[%s1796 + $0x18] sm:$0xff]
      %v1801 = vld [vmem:[%s1796 + $0x20] sm:$0xff]
      %v1802 = vld [vmem:[%s1796 + $0x28] sm:$0xff]
      %v1803 = vld [vmem:[%s1796 + $0x30] sm:$0xff]
      %v1804 = vld [vmem:[%s1796 + $0x38] sm:$0xff]
      %v1805 = vld [vmem:[%s1796 + $0x40] sm:$0xff]
      %v1806 = vld [vmem:[%s1796 + $0x48] sm:$0xff]
      %v1807 = vld [vmem:[%s1796 + $0x50] sm:$0xff]
      %v1808 = vld [vmem:[%s1796 + $0x58] sm:$0xff]
      %v1809 = vld [vmem:[%s1796 + $0x60] sm:$0xff]
      %v1810 = vld [vmem:[%s1796 + $0x68] sm:$0xff]
      %v1811 = vld [vmem:[%s1796 + $0x70] sm:$0xff]
      %v1812 = vld [vmem:[%s1796 + $0x78] sm:$0xff]
      %1813 = vmatprep.subr.mxu0 0.0
      %1814 = vmatpush1.msra.mxu0 %v1797
      %1815 = vmatprep.subr.mxu0 0.0
      %1816 = vmatpush1.msra.mxu0 %v1798
      %1817 = vmatprep.subr.mxu0 0.0
      %1818 = vmatpush1.msra.mxu0 %v1799
      %1819 = vmatprep.subr.mxu0 0.0
      %1820 = vmatpush1.msra.mxu0 %v1800
      %1821 = vmatprep.subr.mxu0 0.0
      %1822 = vmatpush1.msra.mxu0 %v1801
      %1823 = vmatprep.subr.mxu0 0.0
      %1824 = vmatpush1.msra.mxu0 %v1802
      %1825 = vmatprep.subr.mxu0 0.0
      %1826 = vmatpush1.msra.mxu0 %v1803
      %1827 = vmatprep.subr.mxu0 0.0
      %1828 = vmatpush1.msra.mxu0 %v1804
      %1829 = vmatprep.subr.mxu0 0.0
      %1830 = vmatpush1.msra.mxu0 %v1805
      %1831 = vmatprep.subr.mxu0 0.0
      %1832 = vmatpush1.msra.mxu0 %v1806
      %1833 = vmatprep.subr.mxu0 0.0
      %1834 = vmatpush1.msra.mxu0 %v1807
      %1835 = vmatprep.subr.mxu0 0.0
      %1836 = vmatpush1.msra.mxu0 %v1808
      %1837 = vmatprep.subr.mxu0 0.0
      %1838 = vmatpush1.msra.mxu0 %v1809
      %1839 = vmatprep.subr.mxu0 0.0
      %1840 = vmatpush1.msra.mxu0 %v1810
      %1841 = vmatprep.subr.mxu0 0.0
      %1842 = vmatpush1.msra.mxu0 %v1811
      %1843 = vmatprep.subr.mxu0 0.0
      %1844 = vmatpush1.msra.mxu0 %v1812
      %1845 = vmatprep.subr.mxu0 0.0
      %1846 = vmatpush1.msra.mxu0 0.0
      %1847 = vmatprep.subr.mxu0 0.0
      %1848 = vmatpush1.msra.mxu0 0.0
      %1849 = vmatprep.subr.mxu0 0.0
      %1850 = vmatpush1.msra.mxu0 0.0
      %1851 = vmatprep.subr.mxu0 0.0
      %1852 = vmatpush1.msra.mxu0 0.0
      %1853 = vmatprep.subr.mxu0 0.0
      %1854 = vmatpush1.msra.mxu0 0.0
      %1855 = vmatprep.subr.mxu0 0.0
      %1856 = vmatpush1.msra.mxu0 0.0
      %1857 = vmatprep.subr.mxu0 0.0
      %1858 = vmatpush1.msra.mxu0 0.0
      %1859 = vmatprep.subr.mxu0 0.0
      %1860 = vmatpush1.msra.mxu0 0.0
      %1861 = vmatprep.subr.mxu0 0.0
      %1862 = vmatpush1.msra.mxu0 0.0
      %1863 = vmatprep.subr.mxu0 0.0
      %1864 = vmatpush1.msra.mxu0 0.0
      %1865 = vmatprep.subr.mxu0 0.0
      %1866 = vmatpush1.msra.mxu0 0.0
      %1867 = vmatprep.subr.mxu0 0.0
      %1868 = vmatpush1.msra.mxu0 0.0
      %1869 = vmatprep.subr.mxu0 0.0
      %1870 = vmatpush1.msra.mxu0 0.0
      %1871 = vmatprep.subr.mxu0 0.0
      %1872 = vmatpush1.msra.mxu0 0.0
      %1873 = vmatprep.subr.mxu0 0.0
      %1874 = vmatpush1.msra.mxu0 0.0
      %1875 = vmatprep.subr.mxu0 0.0
      %1876 = vmatpush1.msra.mxu0 0.0
      %1877 = vmatprep.mubr.f32.mxu0 0.0
      %1878 = vmatmul.mubr.f32.gmra.mrb[0].mxu0 %v1622
      %v1879 = vpop.f32.mrb[0].mxu0
      %v1880 = vadd.f32 0.0, %v1879
      %v1881 = vpop.f32.mrb[0].mxu0
      %1882 = vdwg.mxu0
      %v1883 = vadd.f32 %v1793, %v1880
      %v1884 = vld [vmem:[%s8] sm:$0x1]
      %v1886 = vlaneseq
      %v1887 = vshrl.u32 %v1886, 7
      %v1888 = vsub.s32 0, %v1887
      %v1889 = vrot.slane %v1884, %v1888
      %v1891 = vadd.f32 %v1883, %v1889
      %v1892 = vadd.f32 %v1891, %v1344
      %v1893 = vmax.f32 %v1892, 0.0
      %v1894 = vld [vmem:[%s15] sm:$0xff]
      %v1895 = vld [vmem:[%s15 + $0x8] sm:$0xff]
      %v1896 = vld [vmem:[%s15 + $0x10] sm:$0xff]
      %v1897 = vld [vmem:[%s15 + $0x18] sm:$0xff]
      %v1898 = vld [vmem:[%s15 + $0x20] sm:$0xff]
      %v1899 = vld [vmem:[%s15 + $0x28] sm:$0xff]
      %v1900 = vld [vmem:[%s15 + $0x30] sm:$0xff]
      %v1901 = vld [vmem:[%s15 + $0x38] sm:$0xff]
      %v1902 = vld [vmem:[%s15 + $0x40] sm:$0xff]
      %v1903 = vld [vmem:[%s15 + $0x48] sm:$0xff]
      %v1904 = vld [vmem:[%s15 + $0x50] sm:$0xff]
      %v1905 = vld [vmem:[%s15 + $0x58] sm:$0xff]
      %v1906 = vld [vmem:[%s15 + $0x60] sm:$0xff]
      %v1907 = vld [vmem:[%s15 + $0x68] sm:$0xff]
      %v1908 = vld [vmem:[%s15 + $0x70] sm:$0xff]
      %v1909 = vld [vmem:[%s15 + $0x78] sm:$0xff]
      %s1910 = scalar_lea.vmem %s15, 128
      %v1911 = vld [vmem:[%s1910] sm:$0xff]
      %v1912 = vld [vmem:[%s1910 + $0x8] sm:$0xff]
      %v1913 = vld [vmem:[%s1910 + $0x10] sm:$0xff]
      %v1914 = vld [vmem:[%s1910 + $0x18] sm:$0xff]
      %v1915 = vld [vmem:[%s1910 + $0x20] sm:$0xff]
      %v1916 = vld [vmem:[%s1910 + $0x28] sm:$0xff]
      %v1917 = vld [vmem:[%s1910 + $0x30] sm:$0xff]
      %v1918 = vld [vmem:[%s1910 + $0x38] sm:$0xff]
      %v1919 = vld [vmem:[%s1910 + $0x40] sm:$0xff]
      %v1920 = vld [vmem:[%s1910 + $0x48] sm:$0xff]
      %v1921 = vld [vmem:[%s1910 + $0x50] sm:$0xff]
      %v1922 = vld [vmem:[%s1910 + $0x58] sm:$0xff]
      %v1923 = vld [vmem:[%s1910 + $0x60] sm:$0xff]
      %v1924 = vld [vmem:[%s1910 + $0x68] sm:$0xff]
      %v1925 = vld [vmem:[%s1910 + $0x70] sm:$0xff]
      %v1926 = vld [vmem:[%s1910 + $0x78] sm:$0xff]
      %1927 = vmatprep.subr.mxu0 0.0
      %1928 = vmatpush1.msra.mxu0 %v1911
      %1929 = vmatprep.subr.mxu0 0.0
      %1930 = vmatpush1.msra.mxu0 %v1912
      %1931 = vmatprep.subr.mxu0 0.0
      %1932 = vmatpush1.msra.mxu0 %v1913
      %1933 = vmatprep.subr.mxu0 0.0
      %1934 = vmatpush1.msra.mxu0 %v1914
      %1935 = vmatprep.subr.mxu0 0.0
      %1936 = vmatpush1.msra.mxu0 %v1915
      %1937 = vmatprep.subr.mxu0 0.0
      %1938 = vmatpush1.msra.mxu0 %v1916
      %1939 = vmatprep.subr.mxu0 0.0
      %1940 = vmatpush1.msra.mxu0 %v1917
      %1941 = vmatprep.subr.mxu0 0.0
      %1942 = vmatpush1.msra.mxu0 %v1918
      %1943 = vmatprep.subr.mxu0 0.0
      %1944 = vmatpush1.msra.mxu0 %v1919
      %1945 = vmatprep.subr.mxu0 0.0
      %1946 = vmatpush1.msra.mxu0 %v1920
      %1947 = vmatprep.subr.mxu0 0.0
      %1948 = vmatpush1.msra.mxu0 %v1921
      %1949 = vmatprep.subr.mxu0 0.0
      %1950 = vmatpush1.msra.mxu0 %v1922
      %1951 = vmatprep.subr.mxu0 0.0
      %1952 = vmatpush1.msra.mxu0 %v1923
      %1953 = vmatprep.subr.mxu0 0.0
      %1954 = vmatpush1.msra.mxu0 %v1924
      %1955 = vmatprep.subr.mxu0 0.0
      %1956 = vmatpush1.msra.mxu0 %v1925
      %1957 = vmatprep.subr.mxu0 0.0
      %1958 = vmatpush1.msra.mxu0 %v1926
      %1959 = vmatprep.subr.mxu0 0.0
      %1960 = vmatpush1.msra.mxu0 0.0
      %1961 = vmatprep.subr.mxu0 0.0
      %1962 = vmatpush1.msra.mxu0 0.0
      %1963 = vmatprep.subr.mxu0 0.0
      %1964 = vmatpush1.msra.mxu0 0.0
      %1965 = vmatprep.subr.mxu0 0.0
      %1966 = vmatpush1.msra.mxu0 0.0
      %1967 = vmatprep.subr.mxu0 0.0
      %1968 = vmatpush1.msra.mxu0 0.0
      %1969 = vmatprep.subr.mxu0 0.0
      %1970 = vmatpush1.msra.mxu0 0.0
      %1971 = vmatprep.subr.mxu0 0.0
      %1972 = vmatpush1.msra.mxu0 0.0
      %1973 = vmatprep.subr.mxu0 0.0
      %1974 = vmatpush1.msra.mxu0 0.0
      %1975 = vmatprep.subr.mxu0 0.0
      %1976 = vmatpush1.msra.mxu0 0.0
      %1977 = vmatprep.subr.mxu0 0.0
      %1978 = vmatpush1.msra.mxu0 0.0
      %1979 = vmatprep.subr.mxu0 0.0
      %1980 = vmatpush1.msra.mxu0 0.0
      %1981 = vmatprep.subr.mxu0 0.0
      %1982 = vmatpush1.msra.mxu0 0.0
      %1983 = vmatprep.subr.mxu0 0.0
      %1984 = vmatpush1.msra.mxu0 0.0
      %1985 = vmatprep.subr.mxu0 0.0
      %1986 = vmatpush1.msra.mxu0 0.0
      %1987 = vmatprep.subr.mxu0 0.0
      %1988 = vmatpush1.msra.mxu0 0.0
      %1989 = vmatprep.subr.mxu0 0.0
      %1990 = vmatpush1.msra.mxu0 0.0
      %1991 = vmatprep.mubr.f32.mxu0 0.0
      %1992 = vmatmul.mubr.f32.gmra.mrb[0].mxu0 %v1163
      %v1993 = vpop.f32.mrb[0].mxu0
      %v1994 = vadd.f32 0.0, %v1993
      %v1995 = vpop.f32.mrb[0].mxu0
      %1996 = vdwg.mxu0
      %1997 = vmatprep.subr.mxu0 0.0
      %1998 = vmatpush1.msra.mxu0 %v1894
      %1999 = vmatprep.subr.mxu0 0.0
      %2000 = vmatpush1.msra.mxu0 %v1895
      %2001 = vmatprep.subr.mxu0 0.0
      %2002 = vmatpush1.msra.mxu0 %v1896
      %2003 = vmatprep.subr.mxu0 0.0
      %2004 = vmatpush1.msra.mxu0 %v1897
      %2005 = vmatprep.subr.mxu0 0.0
      %2006 = vmatpush1.msra.mxu0 %v1898
      %2007 = vmatprep.subr.mxu0 0.0
      %2008 = vmatpush1.msra.mxu0 %v1899
      %2009 = vmatprep.subr.mxu0 0.0
      %2010 = vmatpush1.msra.mxu0 %v1900
      %2011 = vmatprep.subr.mxu0 0.0
      %2012 = vmatpush1.msra.mxu0 %v1901
      %2013 = vmatprep.subr.mxu0 0.0
      %2014 = vmatpush1.msra.mxu0 %v1902
      %2015 = vmatprep.subr.mxu0 0.0
      %2016 = vmatpush1.msra.mxu0 %v1903
      %2017 = vmatprep.subr.mxu0 0.0
      %2018 = vmatpush1.msra.mxu0 %v1904
      %2019 = vmatprep.subr.mxu0 0.0
      %2020 = vmatpush1.msra.mxu0 %v1905
      %2021 = vmatprep.subr.mxu0 0.0
      %2022 = vmatpush1.msra.mxu0 %v1906
      %2023 = vmatprep.subr.mxu0 0.0
      %2024 = vmatpush1.msra.mxu0 %v1907
      %2025 = vmatprep.subr.mxu0 0.0
      %2026 = vmatpush1.msra.mxu0 %v1908
      %2027 = vmatprep.subr.mxu0 0.0
      %2028 = vmatpush1.msra.mxu0 %v1909
      %2029 = vmatprep.subr.mxu0 0.0
      %2030 = vmatpush1.msra.mxu0 0.0
      %2031 = vmatprep.subr.mxu0 0.0
      %2032 = vmatpush1.msra.mxu0 0.0
      %2033 = vmatprep.subr.mxu0 0.0
      %2034 = vmatpush1.msra.mxu0 0.0
      %2035 = vmatprep.subr.mxu0 0.0
      %2036 = vmatpush1.msra.mxu0 0.0
      %2037 = vmatprep.subr.mxu0 0.0
      %2038 = vmatpush1.msra.mxu0 0.0
      %2039 = vmatprep.subr.mxu0 0.0
      %2040 = vmatpush1.msra.mxu0 0.0
      %2041 = vmatprep.subr.mxu0 0.0
      %2042 = vmatpush1.msra.mxu0 0.0
      %2043 = vmatprep.subr.mxu0 0.0
      %2044 = vmatpush1.msra.mxu0 0.0
      %2045 = vmatprep.subr.mxu0 0.0
      %2046 = vmatpush1.msra.mxu0 0.0
      %2047 = vmatprep.subr.mxu0 0.0
      %2048 = vmatpush1.msra.mxu0 0.0
      %2049 = vmatprep.subr.mxu0 0.0
      %2050 = vmatpush1.msra.mxu0 0.0
      %2051 = vmatprep.subr.mxu0 0.0
      %2052 = vmatpush1.msra.mxu0 0.0
      %2053 = vmatprep.subr.mxu0 0.0
      %2054 = vmatpush1.msra.mxu0 0.0
      %2055 = vmatprep.subr.mxu0 0.0
      %2056 = vmatpush1.msra.mxu0 0.0
      %2057 = vmatprep.subr.mxu0 0.0
      %2058 = vmatpush1.msra.mxu0 0.0
      %2059 = vmatprep.subr.mxu0 0.0
      %2060 = vmatpush1.msra.mxu0 0.0
      %2061 = vmatprep.mubr.f32.mxu0 0.0
      %2062 = vmatmul.mubr.f32.gmra.mrb[0].mxu0 %v614
      %v2063 = vpop.f32.mrb[0].mxu0
      %v2064 = vadd.f32 %v1994, %v2063
      %v2065 = vpop.f32.mrb[0].mxu0
      %2066 = vdwg.mxu0
      %s2067 = scalar_lea.vmem %s15, 256
      %v2068 = vld [vmem:[%s2067] sm:$0xff]
      %v2069 = vld [vmem:[%s2067 + $0x8] sm:$0xff]
      %v2070 = vld [vmem:[%s2067 + $0x10] sm:$0xff]
      %v2071 = vld [vmem:[%s2067 + $0x18] sm:$0xff]
      %v2072 = vld [vmem:[%s2067 + $0x20] sm:$0xff]
      %v2073 = vld [vmem:[%s2067 + $0x28] sm:$0xff]
      %v2074 = vld [vmem:[%s2067 + $0x30] sm:$0xff]
      %v2075 = vld [vmem:[%s2067 + $0x38] sm:$0xff]
      %v2076 = vld [vmem:[%s2067 + $0x40] sm:$0xff]
      %v2077 = vld [vmem:[%s2067 + $0x48] sm:$0xff]
      %v2078 = vld [vmem:[%s2067 + $0x50] sm:$0xff]
      %v2079 = vld [vmem:[%s2067 + $0x58] sm:$0xff]
      %v2080 = vld [vmem:[%s2067 + $0x60] sm:$0xff]
      %v2081 = vld [vmem:[%s2067 + $0x68] sm:$0xff]
      %v2082 = vld [vmem:[%s2067 + $0x70] sm:$0xff]
      %v2083 = vld [vmem:[%s2067 + $0x78] sm:$0xff]
      %2084 = vmatprep.subr.mxu0 0.0
      %2085 = vmatpush1.msra.mxu0 %v2068
      %2086 = vmatprep.subr.mxu0 0.0
      %2087 = vmatpush1.msra.mxu0 %v2069
      %2088 = vmatprep.subr.mxu0 0.0
      %2089 = vmatpush1.msra.mxu0 %v2070
      %2090 = vmatprep.subr.mxu0 0.0
      %2091 = vmatpush1.msra.mxu0 %v2071
      %2092 = vmatprep.subr.mxu0 0.0
      %2093 = vmatpush1.msra.mxu0 %v2072
      %2094 = vmatprep.subr.mxu0 0.0
      %2095 = vmatpush1.msra.mxu0 %v2073
      %2096 = vmatprep.subr.mxu0 0.0
      %2097 = vmatpush1.msra.mxu0 %v2074
      %2098 = vmatprep.subr.mxu0 0.0
      %2099 = vmatpush1.msra.mxu0 %v2075
      %2100 = vmatprep.subr.mxu0 0.0
      %2101 = vmatpush1.msra.mxu0 %v2076
      %2102 = vmatprep.subr.mxu0 0.0
      %2103 = vmatpush1.msra.mxu0 %v2077
      %2104 = vmatprep.subr.mxu0 0.0
      %2105 = vmatpush1.msra.mxu0 %v2078
      %2106 = vmatprep.subr.mxu0 0.0
      %2107 = vmatpush1.msra.mxu0 %v2079
      %2108 = vmatprep.subr.mxu0 0.0
      %2109 = vmatpush1.msra.mxu0 %v2080
      %2110 = vmatprep.subr.mxu0 0.0
      %2111 = vmatpush1.msra.mxu0 %v2081
      %2112 = vmatprep.subr.mxu0 0.0
      %2113 = vmatpush1.msra.mxu0 %v2082
      %2114 = vmatprep.subr.mxu0 0.0
      %2115 = vmatpush1.msra.mxu0 %v2083
      %2116 = vmatprep.subr.mxu0 0.0
      %2117 = vmatpush1.msra.mxu0 0.0
      %2118 = vmatprep.subr.mxu0 0.0
      %2119 = vmatpush1.msra.mxu0 0.0
      %2120 = vmatprep.subr.mxu0 0.0
      %2121 = vmatpush1.msra.mxu0 0.0
      %2122 = vmatprep.subr.mxu0 0.0
      %2123 = vmatpush1.msra.mxu0 0.0
      %2124 = vmatprep.subr.mxu0 0.0
      %2125 = vmatpush1.msra.mxu0 0.0
      %2126 = vmatprep.subr.mxu0 0.0
      %2127 = vmatpush1.msra.mxu0 0.0
      %2128 = vmatprep.subr.mxu0 0.0
      %2129 = vmatpush1.msra.mxu0 0.0
      %2130 = vmatprep.subr.mxu0 0.0
      %2131 = vmatpush1.msra.mxu0 0.0
      %2132 = vmatprep.subr.mxu0 0.0
      %2133 = vmatpush1.msra.mxu0 0.0
      %2134 = vmatprep.subr.mxu0 0.0
      %2135 = vmatpush1.msra.mxu0 0.0
      %2136 = vmatprep.subr.mxu0 0.0
      %2137 = vmatpush1.msra.mxu0 0.0
      %2138 = vmatprep.subr.mxu0 0.0
      %2139 = vmatpush1.msra.mxu0 0.0
      %2140 = vmatprep.subr.mxu0 0.0
      %2141 = vmatpush1.msra.mxu0 0.0
      %2142 = vmatprep.subr.mxu0 0.0
      %2143 = vmatpush1.msra.mxu0 0.0
      %2144 = vmatprep.subr.mxu0 0.0
      %2145 = vmatpush1.msra.mxu0 0.0
      %2146 = vmatprep.subr.mxu0 0.0
      %2147 = vmatpush1.msra.mxu0 0.0
      %2148 = vmatprep.mubr.f32.mxu0 0.0
      %2149 = vmatmul.mubr.f32.gmra.mrb[0].mxu0 %v1893
      %v2150 = vpop.f32.mrb[0].mxu0
      %v2151 = vadd.f32 0.0, %v2150
      %v2152 = vpop.f32.mrb[0].mxu0
      %2153 = vdwg.mxu0
      %v2154 = vadd.f32 %v2064, %v2151
      %v2155 = vld [vmem:[%s16] sm:$0x1]
      %v2157 = vlaneseq
      %v2158 = vshrl.u32 %v2157, 7
      %v2159 = vsub.s32 0, %v2158
      %v2160 = vrot.slane %v2155, %v2159
      %v2162 = vadd.f32 %v2154, %v2160
      %v2163 = vrot.slane %v2162, 7
      %v2164 = vsel %vm612, %v2163, 0.0
      %v2165 = vrot.slane %v2162, 1
      %v2166 = vsel %vm613, %v2165, 0.0
      %v2167 = vld [vmem:[%s9] sm:$0xff]
      %v2168 = vld [vmem:[%s9 + $0x8] sm:$0xff]
      %v2169 = vld [vmem:[%s9 + $0x10] sm:$0xff]
      %v2170 = vld [vmem:[%s9 + $0x18] sm:$0xff]
      %v2171 = vld [vmem:[%s9 + $0x20] sm:$0xff]
      %v2172 = vld [vmem:[%s9 + $0x28] sm:$0xff]
      %v2173 = vld [vmem:[%s9 + $0x30] sm:$0xff]
      %v2174 = vld [vmem:[%s9 + $0x38] sm:$0xff]
      %v2175 = vld [vmem:[%s9 + $0x40] sm:$0xff]
      %v2176 = vld [vmem:[%s9 + $0x48] sm:$0xff]
      %v2177 = vld [vmem:[%s9 + $0x50] sm:$0xff]
      %v2178 = vld [vmem:[%s9 + $0x58] sm:$0xff]
      %v2179 = vld [vmem:[%s9 + $0x60] sm:$0xff]
      %v2180 = vld [vmem:[%s9 + $0x68] sm:$0xff]
      %v2181 = vld [vmem:[%s9 + $0x70] sm:$0xff]
      %v2182 = vld [vmem:[%s9 + $0x78] sm:$0xff]
      %s2183 = scalar_lea.vmem %s9, 128
      %v2184 = vld [vmem:[%s2183] sm:$0xff]
      %v2185 = vld [vmem:[%s2183 + $0x8] sm:$0xff]
      %v2186 = vld [vmem:[%s2183 + $0x10] sm:$0xff]
      %v2187 = vld [vmem:[%s2183 + $0x18] sm:$0xff]
      %v2188 = vld [vmem:[%s2183 + $0x20] sm:$0xff]
      %v2189 = vld [vmem:[%s2183 + $0x28] sm:$0xff]
      %v2190 = vld [vmem:[%s2183 + $0x30] sm:$0xff]
      %v2191 = vld [vmem:[%s2183 + $0x38] sm:$0xff]
      %v2192 = vld [vmem:[%s2183 + $0x40] sm:$0xff]
      %v2193 = vld [vmem:[%s2183 + $0x48] sm:$0xff]
      %v2194 = vld [vmem:[%s2183 + $0x50] sm:$0xff]
      %v2195 = vld [vmem:[%s2183 + $0x58] sm:$0xff]
      %v2196 = vld [vmem:[%s2183 + $0x60] sm:$0xff]
      %v2197 = vld [vmem:[%s2183 + $0x68] sm:$0xff]
      %v2198 = vld [vmem:[%s2183 + $0x70] sm:$0xff]
      %v2199 = vld [vmem:[%s2183 + $0x78] sm:$0xff]
      %2200 = vmatprep.subr.mxu0 0.0
      %2201 = vmatpush1.msra.mxu0 %v2184
      %2202 = vmatprep.subr.mxu0 0.0
      %2203 = vmatpush1.msra.mxu0 %v2185
      %2204 = vmatprep.subr.mxu0 0.0
      %2205 = vmatpush1.msra.mxu0 %v2186
      %2206 = vmatprep.subr.mxu0 0.0
      %2207 = vmatpush1.msra.mxu0 %v2187
      %2208 = vmatprep.subr.mxu0 0.0
      %2209 = vmatpush1.msra.mxu0 %v2188
      %2210 = vmatprep.subr.mxu0 0.0
      %2211 = vmatpush1.msra.mxu0 %v2189
      %2212 = vmatprep.subr.mxu0 0.0
      %2213 = vmatpush1.msra.mxu0 %v2190
      %2214 = vmatprep.subr.mxu0 0.0
      %2215 = vmatpush1.msra.mxu0 %v2191
      %2216 = vmatprep.subr.mxu0 0.0
      %2217 = vmatpush1.msra.mxu0 %v2192
      %2218 = vmatprep.subr.mxu0 0.0
      %2219 = vmatpush1.msra.mxu0 %v2193
      %2220 = vmatprep.subr.mxu0 0.0
      %2221 = vmatpush1.msra.mxu0 %v2194
      %2222 = vmatprep.subr.mxu0 0.0
      %2223 = vmatpush1.msra.mxu0 %v2195
      %2224 = vmatprep.subr.mxu0 0.0
      %2225 = vmatpush1.msra.mxu0 %v2196
      %2226 = vmatprep.subr.mxu0 0.0
      %2227 = vmatpush1.msra.mxu0 %v2197
      %2228 = vmatprep.subr.mxu0 0.0
      %2229 = vmatpush1.msra.mxu0 %v2198
      %2230 = vmatprep.subr.mxu0 0.0
      %2231 = vmatpush1.msra.mxu0 %v2199
      %2232 = vmatprep.subr.mxu0 0.0
      %2233 = vmatpush1.msra.mxu0 0.0
      %2234 = vmatprep.subr.mxu0 0.0
      %2235 = vmatpush1.msra.mxu0 0.0
      %2236 = vmatprep.subr.mxu0 0.0
      %2237 = vmatpush1.msra.mxu0 0.0
      %2238 = vmatprep.subr.mxu0 0.0
      %2239 = vmatpush1.msra.mxu0 0.0
      %2240 = vmatprep.subr.mxu0 0.0
      %2241 = vmatpush1.msra.mxu0 0.0
      %2242 = vmatprep.subr.mxu0 0.0
      %2243 = vmatpush1.msra.mxu0 0.0
      %2244 = vmatprep.subr.mxu0 0.0
      %2245 = vmatpush1.msra.mxu0 0.0
      %2246 = vmatprep.subr.mxu0 0.0
      %2247 = vmatpush1.msra.mxu0 0.0
      %2248 = vmatprep.subr.mxu0 0.0
      %2249 = vmatpush1.msra.mxu0 0.0
      %2250 = vmatprep.subr.mxu0 0.0
      %2251 = vmatpush1.msra.mxu0 0.0
      %2252 = vmatprep.subr.mxu0 0.0
      %2253 = vmatpush1.msra.mxu0 0.0
      %2254 = vmatprep.subr.mxu0 0.0
      %2255 = vmatpush1.msra.mxu0 0.0
      %2256 = vmatprep.subr.mxu0 0.0
      %2257 = vmatpush1.msra.mxu0 0.0
      %2258 = vmatprep.subr.mxu0 0.0
      %2259 = vmatpush1.msra.mxu0 0.0
      %2260 = vmatprep.subr.mxu0 0.0
      %2261 = vmatpush1.msra.mxu0 0.0
      %2262 = vmatprep.subr.mxu0 0.0
      %2263 = vmatpush1.msra.mxu0 0.0
      %2264 = vmatprep.mubr.f32.mxu0 0.0
      %2265 = vmatmul.mubr.f32.gmra.mrb[0].mxu0 %v2162
      %v2266 = vpop.f32.mrb[0].mxu0
      %v2267 = vadd.f32 0.0, %v2266
      %v2268 = vpop.f32.mrb[0].mxu0
      %2269 = vdwg.mxu0
      %2270 = vmatprep.subr.mxu0 0.0
      %2271 = vmatpush1.msra.mxu0 %v2167
      %2272 = vmatprep.subr.mxu0 0.0
      %2273 = vmatpush1.msra.mxu0 %v2168
      %2274 = vmatprep.subr.mxu0 0.0
      %2275 = vmatpush1.msra.mxu0 %v2169
      %2276 = vmatprep.subr.mxu0 0.0
      %2277 = vmatpush1.msra.mxu0 %v2170
      %2278 = vmatprep.subr.mxu0 0.0
      %2279 = vmatpush1.msra.mxu0 %v2171
      %2280 = vmatprep.subr.mxu0 0.0
      %2281 = vmatpush1.msra.mxu0 %v2172
      %2282 = vmatprep.subr.mxu0 0.0
      %2283 = vmatpush1.msra.mxu0 %v2173
      %2284 = vmatprep.subr.mxu0 0.0
      %2285 = vmatpush1.msra.mxu0 %v2174
      %2286 = vmatprep.subr.mxu0 0.0
      %2287 = vmatpush1.msra.mxu0 %v2175
      %2288 = vmatprep.subr.mxu0 0.0
      %2289 = vmatpush1.msra.mxu0 %v2176
      %2290 = vmatprep.subr.mxu0 0.0
      %2291 = vmatpush1.msra.mxu0 %v2177
      %2292 = vmatprep.subr.mxu0 0.0
      %2293 = vmatpush1.msra.mxu0 %v2178
      %2294 = vmatprep.subr.mxu0 0.0
      %2295 = vmatpush1.msra.mxu0 %v2179
      %2296 = vmatprep.subr.mxu0 0.0
      %2297 = vmatpush1.msra.mxu0 %v2180
      %2298 = vmatprep.subr.mxu0 0.0
      %2299 = vmatpush1.msra.mxu0 %v2181
      %2300 = vmatprep.subr.mxu0 0.0
      %2301 = vmatpush1.msra.mxu0 %v2182
      %2302 = vmatprep.subr.mxu0 0.0
      %2303 = vmatpush1.msra.mxu0 0.0
      %2304 = vmatprep.subr.mxu0 0.0
      %2305 = vmatpush1.msra.mxu0 0.0
      %2306 = vmatprep.subr.mxu0 0.0
      %2307 = vmatpush1.msra.mxu0 0.0
      %2308 = vmatprep.subr.mxu0 0.0
      %2309 = vmatpush1.msra.mxu0 0.0
      %2310 = vmatprep.subr.mxu0 0.0
      %2311 = vmatpush1.msra.mxu0 0.0
      %2312 = vmatprep.subr.mxu0 0.0
      %2313 = vmatpush1.msra.mxu0 0.0
      %2314 = vmatprep.subr.mxu0 0.0
      %2315 = vmatpush1.msra.mxu0 0.0
      %2316 = vmatprep.subr.mxu0 0.0
      %2317 = vmatpush1.msra.mxu0 0.0
      %2318 = vmatprep.subr.mxu0 0.0
      %2319 = vmatpush1.msra.mxu0 0.0
      %2320 = vmatprep.subr.mxu0 0.0
      %2321 = vmatpush1.msra.mxu0 0.0
      %2322 = vmatprep.subr.mxu0 0.0
      %2323 = vmatpush1.msra.mxu0 0.0
      %2324 = vmatprep.subr.mxu0 0.0
      %2325 = vmatpush1.msra.mxu0 0.0
      %2326 = vmatprep.subr.mxu0 0.0
      %2327 = vmatpush1.msra.mxu0 0.0
      %2328 = vmatprep.subr.mxu0 0.0
      %2329 = vmatpush1.msra.mxu0 0.0
      %2330 = vmatprep.subr.mxu0 0.0
      %2331 = vmatpush1.msra.mxu0 0.0
      %2332 = vmatprep.subr.mxu0 0.0
      %2333 = vmatpush1.msra.mxu0 0.0
      %2334 = vmatprep.mubr.f32.mxu0 0.0
      %2335 = vmatmul.mubr.f32.gmra.mrb[0].mxu0 %v2164
      %v2336 = vpop.f32.mrb[0].mxu0
      %v2337 = vadd.f32 %v2267, %v2336
      %v2338 = vpop.f32.mrb[0].mxu0
      %2339 = vdwg.mxu0
      %s2340 = scalar_lea.vmem %s9, 256
      %v2341 = vld [vmem:[%s2340] sm:$0xff]
      %v2342 = vld [vmem:[%s2340 + $0x8] sm:$0xff]
      %v2343 = vld [vmem:[%s2340 + $0x10] sm:$0xff]
      %v2344 = vld [vmem:[%s2340 + $0x18] sm:$0xff]
      %v2345 = vld [vmem:[%s2340 + $0x20] sm:$0xff]
      %v2346 = vld [vmem:[%s2340 + $0x28] sm:$0xff]
      %v2347 = vld [vmem:[%s2340 + $0x30] sm:$0xff]
      %v2348 = vld [vmem:[%s2340 + $0x38] sm:$0xff]
      %v2349 = vld [vmem:[%s2340 + $0x40] sm:$0xff]
      %v2350 = vld [vmem:[%s2340 + $0x48] sm:$0xff]
      %v2351 = vld [vmem:[%s2340 + $0x50] sm:$0xff]
      %v2352 = vld [vmem:[%s2340 + $0x58] sm:$0xff]
      %v2353 = vld [vmem:[%s2340 + $0x60] sm:$0xff]
      %v2354 = vld [vmem:[%s2340 + $0x68] sm:$0xff]
      %v2355 = vld [vmem:[%s2340 + $0x70] sm:$0xff]
      %v2356 = vld [vmem:[%s2340 + $0x78] sm:$0xff]
      %2357 = vmatprep.subr.mxu0 0.0
      %2358 = vmatpush1.msra.mxu0 %v2341
      %2359 = vmatprep.subr.mxu0 0.0
      %2360 = vmatpush1.msra.mxu0 %v2342
      %2361 = vmatprep.subr.mxu0 0.0
      %2362 = vmatpush1.msra.mxu0 %v2343
      %2363 = vmatprep.subr.mxu0 0.0
      %2364 = vmatpush1.msra.mxu0 %v2344
      %2365 = vmatprep.subr.mxu0 0.0
      %2366 = vmatpush1.msra.mxu0 %v2345
      %2367 = vmatprep.subr.mxu0 0.0
      %2368 = vmatpush1.msra.mxu0 %v2346
      %2369 = vmatprep.subr.mxu0 0.0
      %2370 = vmatpush1.msra.mxu0 %v2347
      %2371 = vmatprep.subr.mxu0 0.0
      %2372 = vmatpush1.msra.mxu0 %v2348
      %2373 = vmatprep.subr.mxu0 0.0
      %2374 = vmatpush1.msra.mxu0 %v2349
      %2375 = vmatprep.subr.mxu0 0.0
      %2376 = vmatpush1.msra.mxu0 %v2350
      %2377 = vmatprep.subr.mxu0 0.0
      %2378 = vmatpush1.msra.mxu0 %v2351
      %2379 = vmatprep.subr.mxu0 0.0
      %2380 = vmatpush1.msra.mxu0 %v2352
      %2381 = vmatprep.subr.mxu0 0.0
      %2382 = vmatpush1.msra.mxu0 %v2353
      %2383 = vmatprep.subr.mxu0 0.0
      %2384 = vmatpush1.msra.mxu0 %v2354
      %2385 = vmatprep.subr.mxu0 0.0
      %2386 = vmatpush1.msra.mxu0 %v2355
      %2387 = vmatprep.subr.mxu0 0.0
      %2388 = vmatpush1.msra.mxu0 %v2356
      %2389 = vmatprep.subr.mxu0 0.0
      %2390 = vmatpush1.msra.mxu0 0.0
      %2391 = vmatprep.subr.mxu0 0.0
      %2392 = vmatpush1.msra.mxu0 0.0
      %2393 = vmatprep.subr.mxu0 0.0
      %2394 = vmatpush1.msra.mxu0 0.0
      %2395 = vmatprep.subr.mxu0 0.0
      %2396 = vmatpush1.msra.mxu0 0.0
      %2397 = vmatprep.subr.mxu0 0.0
      %2398 = vmatpush1.msra.mxu0 0.0
      %2399 = vmatprep.subr.mxu0 0.0
      %2400 = vmatpush1.msra.mxu0 0.0
      %2401 = vmatprep.subr.mxu0 0.0
      %2402 = vmatpush1.msra.mxu0 0.0
      %2403 = vmatprep.subr.mxu0 0.0
      %2404 = vmatpush1.msra.mxu0 0.0
      %2405 = vmatprep.subr.mxu0 0.0
      %2406 = vmatpush1.msra.mxu0 0.0
      %2407 = vmatprep.subr.mxu0 0.0
      %2408 = vmatpush1.msra.mxu0 0.0
      %2409 = vmatprep.subr.mxu0 0.0
      %2410 = vmatpush1.msra.mxu0 0.0
      %2411 = vmatprep.subr.mxu0 0.0
      %2412 = vmatpush1.msra.mxu0 0.0
      %2413 = vmatprep.subr.mxu0 0.0
      %2414 = vmatpush1.msra.mxu0 0.0
      %2415 = vmatprep.subr.mxu0 0.0
      %2416 = vmatpush1.msra.mxu0 0.0
      %2417 = vmatprep.subr.mxu0 0.0
      %2418 = vmatpush1.msra.mxu0 0.0
      %2419 = vmatprep.subr.mxu0 0.0
      %2420 = vmatpush1.msra.mxu0 0.0
      %2421 = vmatprep.mubr.f32.mxu0 0.0
      %2422 = vmatmul.mubr.f32.gmra.mrb[0].mxu0 %v2166
      %v2423 = vpop.f32.mrb[0].mxu0
      %v2424 = vadd.f32 0.0, %v2423
      %v2425 = vpop.f32.mrb[0].mxu0
      %2426 = vdwg.mxu0
      %v2427 = vadd.f32 %v2337, %v2424
      %v2428 = vld [vmem:[%s10] sm:$0x1]
      %v2430 = vlaneseq
      %v2431 = vshrl.u32 %v2430, 7
      %v2432 = vsub.s32 0, %v2431
      %v2433 = vrot.slane %v2428, %v2432
      %v2435 = vadd.f32 %v2427, %v2433
      %v2436 = vmax.f32 %v2435, 0.0
      %v2437 = vrot.slane %v2436, 7
      %v2438 = vsel %vm612, %v2437, 0.0
      %v2439 = vrot.slane %v2436, 1
      %v2440 = vsel %vm613, %v2439, 0.0
      %v2441 = vld [vmem:[%s11] sm:$0xff]
      %v2442 = vld [vmem:[%s11 + $0x8] sm:$0xff]
      %v2443 = vld [vmem:[%s11 + $0x10] sm:$0xff]
      %v2444 = vld [vmem:[%s11 + $0x18] sm:$0xff]
      %v2445 = vld [vmem:[%s11 + $0x20] sm:$0xff]
      %v2446 = vld [vmem:[%s11 + $0x28] sm:$0xff]
      %v2447 = vld [vmem:[%s11 + $0x30] sm:$0xff]
      %v2448 = vld [vmem:[%s11 + $0x38] sm:$0xff]
      %v2449 = vld [vmem:[%s11 + $0x40] sm:$0xff]
      %v2450 = vld [vmem:[%s11 + $0x48] sm:$0xff]
      %v2451 = vld [vmem:[%s11 + $0x50] sm:$0xff]
      %v2452 = vld [vmem:[%s11 + $0x58] sm:$0xff]
      %v2453 = vld [vmem:[%s11 + $0x60] sm:$0xff]
      %v2454 = vld [vmem:[%s11 + $0x68] sm:$0xff]
      %v2455 = vld [vmem:[%s11 + $0x70] sm:$0xff]
      %v2456 = vld [vmem:[%s11 + $0x78] sm:$0xff]
      %s2457 = scalar_lea.vmem %s11, 128
      %v2458 = vld [vmem:[%s2457] sm:$0xff]
      %v2459 = vld [vmem:[%s2457 + $0x8] sm:$0xff]
      %v2460 = vld [vmem:[%s2457 + $0x10] sm:$0xff]
      %v2461 = vld [vmem:[%s2457 + $0x18] sm:$0xff]
      %v2462 = vld [vmem:[%s2457 + $0x20] sm:$0xff]
      %v2463 = vld [vmem:[%s2457 + $0x28] sm:$0xff]
      %v2464 = vld [vmem:[%s2457 + $0x30] sm:$0xff]
      %v2465 = vld [vmem:[%s2457 + $0x38] sm:$0xff]
      %v2466 = vld [vmem:[%s2457 + $0x40] sm:$0xff]
      %v2467 = vld [vmem:[%s2457 + $0x48] sm:$0xff]
      %v2468 = vld [vmem:[%s2457 + $0x50] sm:$0xff]
      %v2469 = vld [vmem:[%s2457 + $0x58] sm:$0xff]
      %v2470 = vld [vmem:[%s2457 + $0x60] sm:$0xff]
      %v2471 = vld [vmem:[%s2457 + $0x68] sm:$0xff]
      %v2472 = vld [vmem:[%s2457 + $0x70] sm:$0xff]
      %v2473 = vld [vmem:[%s2457 + $0x78] sm:$0xff]
      %2474 = vmatprep.subr.mxu0 0.0
      %2475 = vmatpush1.msra.mxu0 %v2458
      %2476 = vmatprep.subr.mxu0 0.0
      %2477 = vmatpush1.msra.mxu0 %v2459
      %2478 = vmatprep.subr.mxu0 0.0
      %2479 = vmatpush1.msra.mxu0 %v2460
      %2480 = vmatprep.subr.mxu0 0.0
      %2481 = vmatpush1.msra.mxu0 %v2461
      %2482 = vmatprep.subr.mxu0 0.0
      %2483 = vmatpush1.msra.mxu0 %v2462
      %2484 = vmatprep.subr.mxu0 0.0
      %2485 = vmatpush1.msra.mxu0 %v2463
      %2486 = vmatprep.subr.mxu0 0.0
      %2487 = vmatpush1.msra.mxu0 %v2464
      %2488 = vmatprep.subr.mxu0 0.0
      %2489 = vmatpush1.msra.mxu0 %v2465
      %2490 = vmatprep.subr.mxu0 0.0
      %2491 = vmatpush1.msra.mxu0 %v2466
      %2492 = vmatprep.subr.mxu0 0.0
      %2493 = vmatpush1.msra.mxu0 %v2467
      %2494 = vmatprep.subr.mxu0 0.0
      %2495 = vmatpush1.msra.mxu0 %v2468
      %2496 = vmatprep.subr.mxu0 0.0
      %2497 = vmatpush1.msra.mxu0 %v2469
      %2498 = vmatprep.subr.mxu0 0.0
      %2499 = vmatpush1.msra.mxu0 %v2470
      %2500 = vmatprep.subr.mxu0 0.0
      %2501 = vmatpush1.msra.mxu0 %v2471
      %2502 = vmatprep.subr.mxu0 0.0
      %2503 = vmatpush1.msra.mxu0 %v2472
      %2504 = vmatprep.subr.mxu0 0.0
      %2505 = vmatpush1.msra.mxu0 %v2473
      %2506 = vmatprep.subr.mxu0 0.0
      %2507 = vmatpush1.msra.mxu0 0.0
      %2508 = vmatprep.subr.mxu0 0.0
      %2509 = vmatpush1.msra.mxu0 0.0
      %2510 = vmatprep.subr.mxu0 0.0
      %2511 = vmatpush1.msra.mxu0 0.0
      %2512 = vmatprep.subr.mxu0 0.0
      %2513 = vmatpush1.msra.mxu0 0.0
      %2514 = vmatprep.subr.mxu0 0.0
      %2515 = vmatpush1.msra.mxu0 0.0
      %2516 = vmatprep.subr.mxu0 0.0
      %2517 = vmatpush1.msra.mxu0 0.0
      %2518 = vmatprep.subr.mxu0 0.0
      %2519 = vmatpush1.msra.mxu0 0.0
      %2520 = vmatprep.subr.mxu0 0.0
      %2521 = vmatpush1.msra.mxu0 0.0
      %2522 = vmatprep.subr.mxu0 0.0
      %2523 = vmatpush1.msra.mxu0 0.0
      %2524 = vmatprep.subr.mxu0 0.0
      %2525 = vmatpush1.msra.mxu0 0.0
      %2526 = vmatprep.subr.mxu0 0.0
      %2527 = vmatpush1.msra.mxu0 0.0
      %2528 = vmatprep.subr.mxu0 0.0
      %2529 = vmatpush1.msra.mxu0 0.0
      %2530 = vmatprep.subr.mxu0 0.0
      %2531 = vmatpush1.msra.mxu0 0.0
      %2532 = vmatprep.subr.mxu0 0.0
      %2533 = vmatpush1.msra.mxu0 0.0
      %2534 = vmatprep.subr.mxu0 0.0
      %2535 = vmatpush1.msra.mxu0 0.0
      %2536 = vmatprep.subr.mxu0 0.0
      %2537 = vmatpush1.msra.mxu0 0.0
      %2538 = vmatprep.mubr.f32.mxu0 0.0
      %2539 = vmatmul.mubr.f32.gmra.mrb[0].mxu0 %v2436
      %v2540 = vpop.f32.mrb[0].mxu0
      %v2541 = vadd.f32 0.0, %v2540
      %v2542 = vpop.f32.mrb[0].mxu0
      %2543 = vdwg.mxu0
      %2544 = vmatprep.subr.mxu0 0.0
      %2545 = vmatpush1.msra.mxu0 %v2441
      %2546 = vmatprep.subr.mxu0 0.0
      %2547 = vmatpush1.msra.mxu0 %v2442
      %2548 = vmatprep.subr.mxu0 0.0
      %2549 = vmatpush1.msra.mxu0 %v2443
      %2550 = vmatprep.subr.mxu0 0.0
      %2551 = vmatpush1.msra.mxu0 %v2444
      %2552 = vmatprep.subr.mxu0 0.0
      %2553 = vmatpush1.msra.mxu0 %v2445
      %2554 = vmatprep.subr.mxu0 0.0
      %2555 = vmatpush1.msra.mxu0 %v2446
      %2556 = vmatprep.subr.mxu0 0.0
      %2557 = vmatpush1.msra.mxu0 %v2447
      %2558 = vmatprep.subr.mxu0 0.0
      %2559 = vmatpush1.msra.mxu0 %v2448
      %2560 = vmatprep.subr.mxu0 0.0
      %2561 = vmatpush1.msra.mxu0 %v2449
      %2562 = vmatprep.subr.mxu0 0.0
      %2563 = vmatpush1.msra.mxu0 %v2450
      %2564 = vmatprep.subr.mxu0 0.0
      %2565 = vmatpush1.msra.mxu0 %v2451
      %2566 = vmatprep.subr.mxu0 0.0
      %2567 = vmatpush1.msra.mxu0 %v2452
      %2568 = vmatprep.subr.mxu0 0.0
      %2569 = vmatpush1.msra.mxu0 %v2453
      %2570 = vmatprep.subr.mxu0 0.0
      %2571 = vmatpush1.msra.mxu0 %v2454
      %2572 = vmatprep.subr.mxu0 0.0
      %2573 = vmatpush1.msra.mxu0 %v2455
      %2574 = vmatprep.subr.mxu0 0.0
      %2575 = vmatpush1.msra.mxu0 %v2456
      %2576 = vmatprep.subr.mxu0 0.0
      %2577 = vmatpush1.msra.mxu0 0.0
      %2578 = vmatprep.subr.mxu0 0.0
      %2579 = vmatpush1.msra.mxu0 0.0
      %2580 = vmatprep.subr.mxu0 0.0
      %2581 = vmatpush1.msra.mxu0 0.0
      %2582 = vmatprep.subr.mxu0 0.0
      %2583 = vmatpush1.msra.mxu0 0.0
      %2584 = vmatprep.subr.mxu0 0.0
      %2585 = vmatpush1.msra.mxu0 0.0
      %2586 = vmatprep.subr.mxu0 0.0
      %2587 = vmatpush1.msra.mxu0 0.0
      %2588 = vmatprep.subr.mxu0 0.0
      %2589 = vmatpush1.msra.mxu0 0.0
      %2590 = vmatprep.subr.mxu0 0.0
      %2591 = vmatpush1.msra.mxu0 0.0
      %2592 = vmatprep.subr.mxu0 0.0
      %2593 = vmatpush1.msra.mxu0 0.0
      %2594 = vmatprep.subr.mxu0 0.0
      %2595 = vmatpush1.msra.mxu0 0.0
      %2596 = vmatprep.subr.mxu0 0.0
      %2597 = vmatpush1.msra.mxu0 0.0
      %2598 = vmatprep.subr.mxu0 0.0
      %2599 = vmatpush1.msra.mxu0 0.0
      %2600 = vmatprep.subr.mxu0 0.0
      %2601 = vmatpush1.msra.mxu0 0.0
      %2602 = vmatprep.subr.mxu0 0.0
      %2603 = vmatpush1.msra.mxu0 0.0
      %2604 = vmatprep.subr.mxu0 0.0
      %2605 = vmatpush1.msra.mxu0 0.0
      %2606 = vmatprep.subr.mxu0 0.0
      %2607 = vmatpush1.msra.mxu0 0.0
      %2608 = vmatprep.mubr.f32.mxu0 0.0
      %2609 = vmatmul.mubr.f32.gmra.mrb[0].mxu0 %v2438
      %v2610 = vpop.f32.mrb[0].mxu0
      %v2611 = vadd.f32 %v2541, %v2610
      %v2612 = vpop.f32.mrb[0].mxu0
      %2613 = vdwg.mxu0
      %s2614 = scalar_lea.vmem %s11, 256
      %v2615 = vld [vmem:[%s2614] sm:$0xff]
      %v2616 = vld [vmem:[%s2614 + $0x8] sm:$0xff]
      %v2617 = vld [vmem:[%s2614 + $0x10] sm:$0xff]
      %v2618 = vld [vmem:[%s2614 + $0x18] sm:$0xff]
      %v2619 = vld [vmem:[%s2614 + $0x20] sm:$0xff]
      %v2620 = vld [vmem:[%s2614 + $0x28] sm:$0xff]
      %v2621 = vld [vmem:[%s2614 + $0x30] sm:$0xff]
      %v2622 = vld [vmem:[%s2614 + $0x38] sm:$0xff]
      %v2623 = vld [vmem:[%s2614 + $0x40] sm:$0xff]
      %v2624 = vld [vmem:[%s2614 + $0x48] sm:$0xff]
      %v2625 = vld [vmem:[%s2614 + $0x50] sm:$0xff]
      %v2626 = vld [vmem:[%s2614 + $0x58] sm:$0xff]
      %v2627 = vld [vmem:[%s2614 + $0x60] sm:$0xff]
      %v2628 = vld [vmem:[%s2614 + $0x68] sm:$0xff]
      %v2629 = vld [vmem:[%s2614 + $0x70] sm:$0xff]
      %v2630 = vld [vmem:[%s2614 + $0x78] sm:$0xff]
      %2631 = vmatprep.subr.mxu0 0.0
      %2632 = vmatpush1.msra.mxu0 %v2615
      %2633 = vmatprep.subr.mxu0 0.0
      %2634 = vmatpush1.msra.mxu0 %v2616
      %2635 = vmatprep.subr.mxu0 0.0
      %2636 = vmatpush1.msra.mxu0 %v2617
      %2637 = vmatprep.subr.mxu0 0.0
      %2638 = vmatpush1.msra.mxu0 %v2618
      %2639 = vmatprep.subr.mxu0 0.0
      %2640 = vmatpush1.msra.mxu0 %v2619
      %2641 = vmatprep.subr.mxu0 0.0
      %2642 = vmatpush1.msra.mxu0 %v2620
      %2643 = vmatprep.subr.mxu0 0.0
      %2644 = vmatpush1.msra.mxu0 %v2621
      %2645 = vmatprep.subr.mxu0 0.0
      %2646 = vmatpush1.msra.mxu0 %v2622
      %2647 = vmatprep.subr.mxu0 0.0
      %2648 = vmatpush1.msra.mxu0 %v2623
      %2649 = vmatprep.subr.mxu0 0.0
      %2650 = vmatpush1.msra.mxu0 %v2624
      %2651 = vmatprep.subr.mxu0 0.0
      %2652 = vmatpush1.msra.mxu0 %v2625
      %2653 = vmatprep.subr.mxu0 0.0
      %2654 = vmatpush1.msra.mxu0 %v2626
      %2655 = vmatprep.subr.mxu0 0.0
      %2656 = vmatpush1.msra.mxu0 %v2627
      %2657 = vmatprep.subr.mxu0 0.0
      %2658 = vmatpush1.msra.mxu0 %v2628
      %2659 = vmatprep.subr.mxu0 0.0
      %2660 = vmatpush1.msra.mxu0 %v2629
      %2661 = vmatprep.subr.mxu0 0.0
      %2662 = vmatpush1.msra.mxu0 %v2630
      %2663 = vmatprep.subr.mxu0 0.0
      %2664 = vmatpush1.msra.mxu0 0.0
      %2665 = vmatprep.subr.mxu0 0.0
      %2666 = vmatpush1.msra.mxu0 0.0
      %2667 = vmatprep.subr.mxu0 0.0
      %2668 = vmatpush1.msra.mxu0 0.0
      %2669 = vmatprep.subr.mxu0 0.0
      %2670 = vmatpush1.msra.mxu0 0.0
      %2671 = vmatprep.subr.mxu0 0.0
      %2672 = vmatpush1.msra.mxu0 0.0
      %2673 = vmatprep.subr.mxu0 0.0
      %2674 = vmatpush1.msra.mxu0 0.0
      %2675 = vmatprep.subr.mxu0 0.0
      %2676 = vmatpush1.msra.mxu0 0.0
      %2677 = vmatprep.subr.mxu0 0.0
      %2678 = vmatpush1.msra.mxu0 0.0
      %2679 = vmatprep.subr.mxu0 0.0
      %2680 = vmatpush1.msra.mxu0 0.0
      %2681 = vmatprep.subr.mxu0 0.0
      %2682 = vmatpush1.msra.mxu0 0.0
      %2683 = vmatprep.subr.mxu0 0.0
      %2684 = vmatpush1.msra.mxu0 0.0
      %2685 = vmatprep.subr.mxu0 0.0
      %2686 = vmatpush1.msra.mxu0 0.0
      %2687 = vmatprep.subr.mxu0 0.0
      %2688 = vmatpush1.msra.mxu0 0.0
      %2689 = vmatprep.subr.mxu0 0.0
      %2690 = vmatpush1.msra.mxu0 0.0
      %2691 = vmatprep.subr.mxu0 0.0
      %2692 = vmatpush1.msra.mxu0 0.0
      %2693 = vmatprep.subr.mxu0 0.0
      %2694 = vmatpush1.msra.mxu0 0.0
      %2695 = vmatprep.mubr.f32.mxu0 0.0
      %2696 = vmatmul.mubr.f32.gmra.mrb[0].mxu0 %v2440
      %v2697 = vpop.f32.mrb[0].mxu0
      %v2698 = vadd.f32 0.0, %v2697
      %v2699 = vpop.f32.mrb[0].mxu0
      %2700 = vdwg.mxu0
      %v2701 = vadd.f32 %v2611, %v2698
      %v2702 = vld [vmem:[%s12] sm:$0x1]
      %v2704 = vlaneseq
      %v2705 = vshrl.u32 %v2704, 7
      %v2706 = vsub.s32 0, %v2705
      %v2707 = vrot.slane %v2702, %v2706
      %v2709 = vadd.f32 %v2701, %v2707
      %v2710 = vadd.f32 %v2709, %v2162
      %v2711 = vmax.f32 %v2710, 0.0
      %v2712 = vld [vmem:[%s17] sm:$0xff]
      %v2713 = vld [vmem:[%s17 + $0x8] sm:$0xff]
      %v2714 = vld [vmem:[%s17 + $0x10] sm:$0xff]
      %v2715 = vld [vmem:[%s17 + $0x18] sm:$0xff]
      %v2716 = vld [vmem:[%s17 + $0x20] sm:$0xff]
      %v2717 = vld [vmem:[%s17 + $0x28] sm:$0xff]
      %v2718 = vld [vmem:[%s17 + $0x30] sm:$0xff]
      %v2719 = vld [vmem:[%s17 + $0x38] sm:$0xff]
      %v2720 = vld [vmem:[%s17 + $0x40] sm:$0xff]
      %v2721 = vld [vmem:[%s17 + $0x48] sm:$0xff]
      %v2722 = vld [vmem:[%s17 + $0x50] sm:$0xff]
      %v2723 = vld [vmem:[%s17 + $0x58] sm:$0xff]
      %v2724 = vld [vmem:[%s17 + $0x60] sm:$0xff]
      %v2725 = vld [vmem:[%s17 + $0x68] sm:$0xff]
      %v2726 = vld [vmem:[%s17 + $0x70] sm:$0xff]
      %v2727 = vld [vmem:[%s17 + $0x78] sm:$0xff]
      %s2728 = scalar_lea.vmem %s17, 128
      %v2729 = vld [vmem:[%s2728] sm:$0xff]
      %v2730 = vld [vmem:[%s2728 + $0x8] sm:$0xff]
      %v2731 = vld [vmem:[%s2728 + $0x10] sm:$0xff]
      %v2732 = vld [vmem:[%s2728 + $0x18] sm:$0xff]
      %v2733 = vld [vmem:[%s2728 + $0x20] sm:$0xff]
      %v2734 = vld [vmem:[%s2728 + $0x28] sm:$0xff]
      %v2735 = vld [vmem:[%s2728 + $0x30] sm:$0xff]
      %v2736 = vld [vmem:[%s2728 + $0x38] sm:$0xff]
      %v2737 = vld [vmem:[%s2728 + $0x40] sm:$0xff]
      %v2738 = vld [vmem:[%s2728 + $0x48] sm:$0xff]
      %v2739 = vld [vmem:[%s2728 + $0x50] sm:$0xff]
      %v2740 = vld [vmem:[%s2728 + $0x58] sm:$0xff]
      %v2741 = vld [vmem:[%s2728 + $0x60] sm:$0xff]
      %v2742 = vld [vmem:[%s2728 + $0x68] sm:$0xff]
      %v2743 = vld [vmem:[%s2728 + $0x70] sm:$0xff]
      %v2744 = vld [vmem:[%s2728 + $0x78] sm:$0xff]
      %2745 = vmatprep.subr.mxu0 0.0
      %2746 = vmatpush1.msra.mxu0 %v2729
      %2747 = vmatprep.subr.mxu0 0.0
      %2748 = vmatpush1.msra.mxu0 %v2730
      %2749 = vmatprep.subr.mxu0 0.0
      %2750 = vmatpush1.msra.mxu0 %v2731
      %2751 = vmatprep.subr.mxu0 0.0
      %2752 = vmatpush1.msra.mxu0 %v2732
      %2753 = vmatprep.subr.mxu0 0.0
      %2754 = vmatpush1.msra.mxu0 %v2733
      %2755 = vmatprep.subr.mxu0 0.0
      %2756 = vmatpush1.msra.mxu0 %v2734
      %2757 = vmatprep.subr.mxu0 0.0
      %2758 = vmatpush1.msra.mxu0 %v2735
      %2759 = vmatprep.subr.mxu0 0.0
      %2760 = vmatpush1.msra.mxu0 %v2736
      %2761 = vmatprep.subr.mxu0 0.0
      %2762 = vmatpush1.msra.mxu0 %v2737
      %2763 = vmatprep.subr.mxu0 0.0
      %2764 = vmatpush1.msra.mxu0 %v2738
      %2765 = vmatprep.subr.mxu0 0.0
      %2766 = vmatpush1.msra.mxu0 %v2739
      %2767 = vmatprep.subr.mxu0 0.0
      %2768 = vmatpush1.msra.mxu0 %v2740
      %2769 = vmatprep.subr.mxu0 0.0
      %2770 = vmatpush1.msra.mxu0 %v2741
      %2771 = vmatprep.subr.mxu0 0.0
      %2772 = vmatpush1.msra.mxu0 %v2742
      %2773 = vmatprep.subr.mxu0 0.0
      %2774 = vmatpush1.msra.mxu0 %v2743
      %2775 = vmatprep.subr.mxu0 0.0
      %2776 = vmatpush1.msra.mxu0 %v2744
      %2777 = vmatprep.subr.mxu0 0.0
      %2778 = vmatpush1.msra.mxu0 0.0
      %2779 = vmatprep.subr.mxu0 0.0
      %2780 = vmatpush1.msra.mxu0 0.0
      %2781 = vmatprep.subr.mxu0 0.0
      %2782 = vmatpush1.msra.mxu0 0.0
      %2783 = vmatprep.subr.mxu0 0.0
      %2784 = vmatpush1.msra.mxu0 0.0
      %2785 = vmatprep.subr.mxu0 0.0
      %2786 = vmatpush1.msra.mxu0 0.0
      %2787 = vmatprep.subr.mxu0 0.0
      %2788 = vmatpush1.msra.mxu0 0.0
      %2789 = vmatprep.subr.mxu0 0.0
      %2790 = vmatpush1.msra.mxu0 0.0
      %2791 = vmatprep.subr.mxu0 0.0
      %2792 = vmatpush1.msra.mxu0 0.0
      %2793 = vmatprep.subr.mxu0 0.0
      %2794 = vmatpush1.msra.mxu0 0.0
      %2795 = vmatprep.subr.mxu0 0.0
      %2796 = vmatpush1.msra.mxu0 0.0
      %2797 = vmatprep.subr.mxu0 0.0
      %2798 = vmatpush1.msra.mxu0 0.0
      %2799 = vmatprep.subr.mxu0 0.0
      %2800 = vmatpush1.msra.mxu0 0.0
      %2801 = vmatprep.subr.mxu0 0.0
      %2802 = vmatpush1.msra.mxu0 0.0
      %2803 = vmatprep.subr.mxu0 0.0
      %2804 = vmatpush1.msra.mxu0 0.0
      %2805 = vmatprep.subr.mxu0 0.0
      %2806 = vmatpush1.msra.mxu0 0.0
      %2807 = vmatprep.subr.mxu0 0.0
      %2808 = vmatpush1.msra.mxu0 0.0
      %2809 = vmatprep.mubr.f32.mxu0 0.0
      %2810 = vmatmul.mubr.f32.gmra.mrb[0].mxu0 %v1163
      %v2811 = vpop.f32.mrb[0].mxu0
      %v2812 = vadd.f32 0.0, %v2811
      %v2813 = vpop.f32.mrb[0].mxu0
      %2814 = vdwg.mxu0
      %2815 = vmatprep.subr.mxu0 0.0
      %2816 = vmatpush1.msra.mxu0 %v2712
      %2817 = vmatprep.subr.mxu0 0.0
      %2818 = vmatpush1.msra.mxu0 %v2713
      %2819 = vmatprep.subr.mxu0 0.0
      %2820 = vmatpush1.msra.mxu0 %v2714
      %2821 = vmatprep.subr.mxu0 0.0
      %2822 = vmatpush1.msra.mxu0 %v2715
      %2823 = vmatprep.subr.mxu0 0.0
      %2824 = vmatpush1.msra.mxu0 %v2716
      %2825 = vmatprep.subr.mxu0 0.0
      %2826 = vmatpush1.msra.mxu0 %v2717
      %2827 = vmatprep.subr.mxu0 0.0
      %2828 = vmatpush1.msra.mxu0 %v2718
      %2829 = vmatprep.subr.mxu0 0.0
      %2830 = vmatpush1.msra.mxu0 %v2719
      %2831 = vmatprep.subr.mxu0 0.0
      %2832 = vmatpush1.msra.mxu0 %v2720
      %2833 = vmatprep.subr.mxu0 0.0
      %2834 = vmatpush1.msra.mxu0 %v2721
      %2835 = vmatprep.subr.mxu0 0.0
      %2836 = vmatpush1.msra.mxu0 %v2722
      %2837 = vmatprep.subr.mxu0 0.0
      %2838 = vmatpush1.msra.mxu0 %v2723
      %2839 = vmatprep.subr.mxu0 0.0
      %2840 = vmatpush1.msra.mxu0 %v2724
      %2841 = vmatprep.subr.mxu0 0.0
      %2842 = vmatpush1.msra.mxu0 %v2725
      %2843 = vmatprep.subr.mxu0 0.0
      %2844 = vmatpush1.msra.mxu0 %v2726
      %2845 = vmatprep.subr.mxu0 0.0
      %2846 = vmatpush1.msra.mxu0 %v2727
      %2847 = vmatprep.subr.mxu0 0.0
      %2848 = vmatpush1.msra.mxu0 0.0
      %2849 = vmatprep.subr.mxu0 0.0
      %2850 = vmatpush1.msra.mxu0 0.0
      %2851 = vmatprep.subr.mxu0 0.0
      %2852 = vmatpush1.msra.mxu0 0.0
      %2853 = vmatprep.subr.mxu0 0.0
      %2854 = vmatpush1.msra.mxu0 0.0
      %2855 = vmatprep.subr.mxu0 0.0
      %2856 = vmatpush1.msra.mxu0 0.0
      %2857 = vmatprep.subr.mxu0 0.0
      %2858 = vmatpush1.msra.mxu0 0.0
      %2859 = vmatprep.subr.mxu0 0.0
      %2860 = vmatpush1.msra.mxu0 0.0
      %2861 = vmatprep.subr.mxu0 0.0
      %2862 = vmatpush1.msra.mxu0 0.0
      %2863 = vmatprep.subr.mxu0 0.0
      %2864 = vmatpush1.msra.mxu0 0.0
      %2865 = vmatprep.subr.mxu0 0.0
      %2866 = vmatpush1.msra.mxu0 0.0
      %2867 = vmatprep.subr.mxu0 0.0
      %2868 = vmatpush1.msra.mxu0 0.0
      %2869 = vmatprep.subr.mxu0 0.0
      %2870 = vmatpush1.msra.mxu0 0.0
      %2871 = vmatprep.subr.mxu0 0.0
      %2872 = vmatpush1.msra.mxu0 0.0
      %2873 = vmatprep.subr.mxu0 0.0
      %2874 = vmatpush1.msra.mxu0 0.0
      %2875 = vmatprep.subr.mxu0 0.0
      %2876 = vmatpush1.msra.mxu0 0.0
      %2877 = vmatprep.subr.mxu0 0.0
      %2878 = vmatpush1.msra.mxu0 0.0
      %2879 = vmatprep.mubr.f32.mxu0 0.0
      %2880 = vmatmul.mubr.f32.gmra.mrb[0].mxu0 %v614
      %v2881 = vpop.f32.mrb[0].mxu0
      %v2882 = vadd.f32 %v2812, %v2881
      %v2883 = vpop.f32.mrb[0].mxu0
      %2884 = vdwg.mxu0
      %s2885 = scalar_lea.vmem %s17, 256
      %v2886 = vld [vmem:[%s2885] sm:$0xff]
      %v2887 = vld [vmem:[%s2885 + $0x8] sm:$0xff]
      %v2888 = vld [vmem:[%s2885 + $0x10] sm:$0xff]
      %v2889 = vld [vmem:[%s2885 + $0x18] sm:$0xff]
      %v2890 = vld [vmem:[%s2885 + $0x20] sm:$0xff]
      %v2891 = vld [vmem:[%s2885 + $0x28] sm:$0xff]
      %v2892 = vld [vmem:[%s2885 + $0x30] sm:$0xff]
      %v2893 = vld [vmem:[%s2885 + $0x38] sm:$0xff]
      %v2894 = vld [vmem:[%s2885 + $0x40] sm:$0xff]
      %v2895 = vld [vmem:[%s2885 + $0x48] sm:$0xff]
      %v2896 = vld [vmem:[%s2885 + $0x50] sm:$0xff]
      %v2897 = vld [vmem:[%s2885 + $0x58] sm:$0xff]
      %v2898 = vld [vmem:[%s2885 + $0x60] sm:$0xff]
      %v2899 = vld [vmem:[%s2885 + $0x68] sm:$0xff]
      %v2900 = vld [vmem:[%s2885 + $0x70] sm:$0xff]
      %v2901 = vld [vmem:[%s2885 + $0x78] sm:$0xff]
      %2902 = vmatprep.subr.mxu0 0.0
      %2903 = vmatpush1.msra.mxu0 %v2886
      %2904 = vmatprep.subr.mxu0 0.0
      %2905 = vmatpush1.msra.mxu0 %v2887
      %2906 = vmatprep.subr.mxu0 0.0
      %2907 = vmatpush1.msra.mxu0 %v2888
      %2908 = vmatprep.subr.mxu0 0.0
      %2909 = vmatpush1.msra.mxu0 %v2889
      %2910 = vmatprep.subr.mxu0 0.0
      %2911 = vmatpush1.msra.mxu0 %v2890
      %2912 = vmatprep.subr.mxu0 0.0
      %2913 = vmatpush1.msra.mxu0 %v2891
      %2914 = vmatprep.subr.mxu0 0.0
      %2915 = vmatpush1.msra.mxu0 %v2892
      %2916 = vmatprep.subr.mxu0 0.0
      %2917 = vmatpush1.msra.mxu0 %v2893
      %2918 = vmatprep.subr.mxu0 0.0
      %2919 = vmatpush1.msra.mxu0 %v2894
      %2920 = vmatprep.subr.mxu0 0.0
      %2921 = vmatpush1.msra.mxu0 %v2895
      %2922 = vmatprep.subr.mxu0 0.0
      %2923 = vmatpush1.msra.mxu0 %v2896
      %2924 = vmatprep.subr.mxu0 0.0
      %2925 = vmatpush1.msra.mxu0 %v2897
      %2926 = vmatprep.subr.mxu0 0.0
      %2927 = vmatpush1.msra.mxu0 %v2898
      %2928 = vmatprep.subr.mxu0 0.0
      %2929 = vmatpush1.msra.mxu0 %v2899
      %2930 = vmatprep.subr.mxu0 0.0
      %2931 = vmatpush1.msra.mxu0 %v2900
      %2932 = vmatprep.subr.mxu0 0.0
      %2933 = vmatpush1.msra.mxu0 %v2901
      %2934 = vmatprep.subr.mxu0 0.0
      %2935 = vmatpush1.msra.mxu0 0.0
      %2936 = vmatprep.subr.mxu0 0.0
      %2937 = vmatpush1.msra.mxu0 0.0
      %2938 = vmatprep.subr.mxu0 0.0
      %2939 = vmatpush1.msra.mxu0 0.0
      %2940 = vmatprep.subr.mxu0 0.0
      %2941 = vmatpush1.msra.mxu0 0.0
      %2942 = vmatprep.subr.mxu0 0.0
      %2943 = vmatpush1.msra.mxu0 0.0
      %2944 = vmatprep.subr.mxu0 0.0
      %2945 = vmatpush1.msra.mxu0 0.0
      %2946 = vmatprep.subr.mxu0 0.0
      %2947 = vmatpush1.msra.mxu0 0.0
      %2948 = vmatprep.subr.mxu0 0.0
      %2949 = vmatpush1.msra.mxu0 0.0
      %2950 = vmatprep.subr.mxu0 0.0
      %2951 = vmatpush1.msra.mxu0 0.0
      %2952 = vmatprep.subr.mxu0 0.0
      %2953 = vmatpush1.msra.mxu0 0.0
      %2954 = vmatprep.subr.mxu0 0.0
      %2955 = vmatpush1.msra.mxu0 0.0
      %2956 = vmatprep.subr.mxu0 0.0
      %2957 = vmatpush1.msra.mxu0 0.0
      %2958 = vmatprep.subr.mxu0 0.0
      %2959 = vmatpush1.msra.mxu0 0.0
      %2960 = vmatprep.subr.mxu0 0.0
      %2961 = vmatpush1.msra.mxu0 0.0
      %2962 = vmatprep.subr.mxu0 0.0
      %2963 = vmatpush1.msra.mxu0 0.0
      %2964 = vmatprep.subr.mxu0 0.0
      %2965 = vmatpush1.msra.mxu0 0.0
      %2966 = vmatprep.mubr.f32.mxu0 0.0
      %2967 = vmatmul.mubr.f32.gmra.mrb[0].mxu0 %v1893
      %v2968 = vpop.f32.mrb[0].mxu0
      %v2969 = vadd.f32 0.0, %v2968
      %v2970 = vpop.f32.mrb[0].mxu0
      %2971 = vdwg.mxu0
      %v2972 = vadd.f32 %v2882, %v2969
      %s2973 = scalar_lea.vmem %s17, 384
      %v2974 = vld [vmem:[%s2973] sm:$0xff]
      %v2975 = vld [vmem:[%s2973 + $0x8] sm:$0xff]
      %v2976 = vld [vmem:[%s2973 + $0x10] sm:$0xff]
      %v2977 = vld [vmem:[%s2973 + $0x18] sm:$0xff]
      %v2978 = vld [vmem:[%s2973 + $0x20] sm:$0xff]
      %v2979 = vld [vmem:[%s2973 + $0x28] sm:$0xff]
      %v2980 = vld [vmem:[%s2973 + $0x30] sm:$0xff]
      %v2981 = vld [vmem:[%s2973 + $0x38] sm:$0xff]
      %v2982 = vld [vmem:[%s2973 + $0x40] sm:$0xff]
      %v2983 = vld [vmem:[%s2973 + $0x48] sm:$0xff]
      %v2984 = vld [vmem:[%s2973 + $0x50] sm:$0xff]
      %v2985 = vld [vmem:[%s2973 + $0x58] sm:$0xff]
      %v2986 = vld [vmem:[%s2973 + $0x60] sm:$0xff]
      %v2987 = vld [vmem:[%s2973 + $0x68] sm:$0xff]
      %v2988 = vld [vmem:[%s2973 + $0x70] sm:$0xff]
      %v2989 = vld [vmem:[%s2973 + $0x78] sm:$0xff]
      %2990 = vmatprep.subr.mxu0 0.0
      %2991 = vmatpush1.msra.mxu0 %v2974
      %2992 = vmatprep.subr.mxu0 0.0
      %2993 = vmatpush1.msra.mxu0 %v2975
      %2994 = vmatprep.subr.mxu0 0.0
      %2995 = vmatpush1.msra.mxu0 %v2976
      %2996 = vmatprep.subr.mxu0 0.0
      %2997 = vmatpush1.msra.mxu0 %v2977
      %2998 = vmatprep.subr.mxu0 0.0
      %2999 = vmatpush1.msra.mxu0 %v2978
      %3000 = vmatprep.subr.mxu0 0.0
      %3001 = vmatpush1.msra.mxu0 %v2979
      %3002 = vmatprep.subr.mxu0 0.0
      %3003 = vmatpush1.msra.mxu0 %v2980
      %3004 = vmatprep.subr.mxu0 0.0
      %3005 = vmatpush1.msra.mxu0 %v2981
      %3006 = vmatprep.subr.mxu0 0.0
      %3007 = vmatpush1.msra.mxu0 %v2982
      %3008 = vmatprep.subr.mxu0 0.0
      %3009 = vmatpush1.msra.mxu0 %v2983
      %3010 = vmatprep.subr.mxu0 0.0
      %3011 = vmatpush1.msra.mxu0 %v2984
      %3012 = vmatprep.subr.mxu0 0.0
      %3013 = vmatpush1.msra.mxu0 %v2985
      %3014 = vmatprep.subr.mxu0 0.0
      %3015 = vmatpush1.msra.mxu0 %v2986
      %3016 = vmatprep.subr.mxu0 0.0
      %3017 = vmatpush1.msra.mxu0 %v2987
      %3018 = vmatprep.subr.mxu0 0.0
      %3019 = vmatpush1.msra.mxu0 %v2988
      %3020 = vmatprep.subr.mxu0 0.0
      %3021 = vmatpush1.msra.mxu0 %v2989
      %3022 = vmatprep.subr.mxu0 0.0
      %3023 = vmatpush1.msra.mxu0 0.0
      %3024 = vmatprep.subr.mxu0 0.0
      %3025 = vmatpush1.msra.mxu0 0.0
      %3026 = vmatprep.subr.mxu0 0.0
      %3027 = vmatpush1.msra.mxu0 0.0
      %3028 = vmatprep.subr.mxu0 0.0
      %3029 = vmatpush1.msra.mxu0 0.0
      %3030 = vmatprep.subr.mxu0 0.0
      %3031 = vmatpush1.msra.mxu0 0.0
      %3032 = vmatprep.subr.mxu0 0.0
      %3033 = vmatpush1.msra.mxu0 0.0
      %3034 = vmatprep.subr.mxu0 0.0
      %3035 = vmatpush1.msra.mxu0 0.0
      %3036 = vmatprep.subr.mxu0 0.0
      %3037 = vmatpush1.msra.mxu0 0.0
      %3038 = vmatprep.subr.mxu0 0.0
      %3039 = vmatpush1.msra.mxu0 0.0
      %3040 = vmatprep.subr.mxu0 0.0
      %3041 = vmatpush1.msra.mxu0 0.0
      %3042 = vmatprep.subr.mxu0 0.0
      %3043 = vmatpush1.msra.mxu0 0.0
      %3044 = vmatprep.subr.mxu0 0.0
      %3045 = vmatpush1.msra.mxu0 0.0
      %3046 = vmatprep.subr.mxu0 0.0
      %3047 = vmatpush1.msra.mxu0 0.0
      %3048 = vmatprep.subr.mxu0 0.0
      %3049 = vmatpush1.msra.mxu0 0.0
      %3050 = vmatprep.subr.mxu0 0.0
      %3051 = vmatpush1.msra.mxu0 0.0
      %3052 = vmatprep.subr.mxu0 0.0
      %3053 = vmatpush1.msra.mxu0 0.0
      %3054 = vmatprep.mubr.f32.mxu0 0.0
      %3055 = vmatmul.mubr.f32.gmra.mrb[0].mxu0 %v2711
      %v3056 = vpop.f32.mrb[0].mxu0
      %v3057 = vadd.f32 0.0, %v3056
      %v3058 = vpop.f32.mrb[0].mxu0
      %3059 = vdwg.mxu0
      %v3060 = vadd.f32 %v2972, %v3057
      %v3061 = vld [vmem:[%s18] sm:$0x1]
      %v3063 = vlaneseq
      %v3064 = vshrl.u32 %v3063, 7
      %v3065 = vsub.s32 0, %v3064
      %v3066 = vrot.slane %v3061, %v3065
      %v3068 = vadd.f32 %v3060, %v3066
      %3069 = vst [vmem:[%s597] sm:$0xff] %v3068
      %p3070 = scmp.lt.s32.totalorder %s30, 1
      %s3071 = scalar_select %p3070, %s30, 1
      %s3072 = smul.addr %s3071, 8
      %s3073 = scalar_lea.vmem %s19, %s3072
      // Predicated region
      $region97: #{block_forward.1} parent=95 // pred_check
        %p3074 = pneg %p452
      $region98: #{block_forward.1} parent=95 // pred_check_branch
        %3076 = sbr.rel (%p3074) target = $region100
      $region99: #{block_forward.1} parent=95 // pred_region
        _
      $region100: #{block_forward.1} parent=95 // pred_fallthru
        _
    $region96: #{block_forward.1} parent=5 // pred_fallthru
      _
    %p3077 = scmp.le.s32.totalorder 2, %s25
    // Predicated region
    $region101: #{block_forward.1} parent=5 // pred_check
      %p3078 = pneg %p3077
    $region102: #{block_forward.1} parent=5 // pred_check_branch
      %3080 = sbr.rel (%p3078) target = $region104
    $region103: #{block_forward.1} parent=5 // pred_region
      %s3081 = ssub.s32 %s25, 2
      // Predicated region
      $region105: #{block_forward.1} parent=103 // pred_check
        %p3082 = pneg %p458
      $region106: #{block_forward.1} parent=103 // pred_check_branch
        %3084 = sbr.rel (%p3082) target = $region108
      $region107: #{block_forward.1} parent=103 // pred_region
        %p3085 = scmp.lt.s32.totalorder %s31, 1
        %s3086 = scalar_select %p3085, %s31, 1
        %s3087 = smul.addr %s3086, 8
        %s3088 = scalar_lea.vmem %s19, %s3087
      $region108: #{block_forward.1} parent=103 // pred_fallthru
        _
    $region104: #{block_forward.1} parent=5 // pred_fallthru
      _
  $region6: #{block_forward.1} parent=0 // loop_footer
    %s29 = sadd.s32 1, %s25
  $region7: #{block_forward.1} parent=0 // loop_footer_branch
    %24 = sbr.rel target = $region3
  $region8: #{block_forward.1} parent=0 // loop_exit
    _

</llo_original>
